<compile_context>
chip_gen: v7x
topology: tpu7x:2x2x1
jax: 0.10.0
libtpu: 0.0.40
codegen_flags: <defaults>
</compile_context>

<pallas_src>
import functools

import jax
import jax.numpy as jnp
from jax.experimental import pallas as pl
from jax.experimental.pallas import tpu as pltpu


def _round_up(x, m):
    return (x + m - 1) // m * m


def _vmem_capacity_bytes():
    try:
        info = pltpu.get_tpu_info()
        cap = getattr(info, "vmem_capacity_bytes", None)
        if cap:
            return int(cap)
    except Exception:
        pass
    return 64 * 1024 * 1024            # conservative default (v7x per-TC VMEM)


def _make_kernel(*, N, W, TI, TJ, num_chunks, alpha, cache_d2, batch_inner):
    """Builds the per-grid-point kernel.  Everything captured here is a Python
    scalar, so the kernel closure carries no array constants."""
    BIG = 1e30                         # "no opposite-class pixel seen yet" sentinel
    alpha = float(alpha)
    w_f = float(W)
    inv_w = 1.0 / w_f
    unroll = min(num_chunks, 4)
    needs_tail_mask = (num_chunks * TJ) != N

    if alpha == 2.0:
        pow_a = lambda v: v * v
    elif alpha == 1.0:
        pow_a = lambda v: v
    else:
        # x**alpha for x >= 0 (0**alpha := 0, alpha > 0); avoids jnp.power so no
        # 0-d array constant is captured by the kernel closure.
        pow_a = lambda v: jnp.where(
            v > 0.0, jnp.exp(alpha * jnp.log(jnp.maximum(v, 1e-30))), 0.0)

    def floor_div_mod(ids_f):
        # Exact floor(ids/W) and ids%W for non-negative integer-valued f32 ids.
        q = jnp.floor(ids_f * inv_w)
        q = jnp.where(q * w_f > ids_f, q - 1.0, q)
        q = jnp.where((q + 1.0) * w_f <= ids_f, q + 1.0, q)
        return q, ids_f - q * w_f

    def kernel(flags_ref, pred_row_ref, targ_row_ref, pred_col_ref,
               targ_col_ref, out_ref, *d2_cache):
        if batch_inner:
            it, b = pl.program_id(0), pl.program_id(1)
        else:
            b, it = pl.program_id(0), pl.program_id(1)
        inner = pl.program_id(1)       # output accumulates across the inner axis

        # ---- i-tile (sublane axis) quantities; coords generated in-kernel ----
        i_ids = (jax.lax.broadcasted_iota(jnp.int32, (TI, 1), 0)
                 + it * TI).astype(jnp.float32)                      # (TI, 1)
        y_i, x_i = floor_div_mod(i_ids)
        valid_i = i_ids < float(N)

        p_i = pred_col_ref[...]                                      # (TI, 1)
        t_i = targ_col_ref[...]
        fg_p_i = p_i > 0.5
        fg_t_i = t_i > 0.5

        # Per-image any-foreground flags, precomputed in plain JAX, read from SMEM.
        has_fg_p = jnp.where(flags_ref[b, 0] > 0, 1.0, 0.0)
        has_fg_t = jnp.where(flags_ref[b, 1] > 0, 1.0, 0.0)

        def d2_chunk(jc):
            j_iota = jax.lax.broadcasted_iota(jnp.int32, (1, TJ), 1)
            j_ids_i = j_iota + jc * TJ                               # (1, TJ) int32
            y_j, x_j = floor_div_mod(j_ids_i.astype(jnp.float32))
            dy = y_i - y_j                                           # (TI, TJ)
            dx = x_i - x_j
            d2 = dy * dy + dx * dx
            if needs_tail_mask:
                # Bake lane validity into d2 once; padding lanes never win a min.
                d2 = jnp.where(j_ids_i < N, d2, BIG)
            return d2

        def body(jc, carry):
            min_p, min_t = carry
            if cache_d2:
                # d2 is batch-invariant: compute/store at b == 0, reuse for b > 0.
                cache = d2_cache[0]

                @pl.when(b == 0)
                def _():
                    cache[jc] = d2_chunk(jc)

                d2 = cache[jc]
            else:
                d2 = d2_chunk(jc)

            p_j = pred_row_ref[jc]                                   # (1, TJ)
            t_j = targ_row_ref[jc]

            # edt(fg)+edt(bg) == distance to nearest opposite-class pixel, so a
            # single mask+min per field suffices.  Per-chunk cross-lane min (XLU)
            # folds into a small (TI,1) carry (no (TI,TJ) VMEM accumulator RMW).
            opp_p = jnp.logical_xor(fg_p_i, p_j > 0.5)
            opp_t = jnp.logical_xor(fg_t_i, t_j > 0.5)
            cmin_p = jnp.min(jnp.where(opp_p, d2, BIG), axis=1, keepdims=True)
            cmin_t = jnp.min(jnp.where(opp_t, d2, BIG), axis=1, keepdims=True)
            return jnp.minimum(min_p, cmin_p), jnp.minimum(min_t, cmin_t)

        init = (jnp.full((TI, 1), BIG, jnp.float32),
                jnp.full((TI, 1), BIG, jnp.float32))
        d2_p, d2_t = jax.lax.fori_loop(0, num_chunks, body, init, unroll=unroll)

        # TODO(synk): an all-foreground mask (no background pixel at all) yields
        # sqrt(1e30) here; scipy's edt for that degenerate input differs.
        pred_dt = jnp.sqrt(d2_p) * has_fg_p
        targ_dt = jnp.sqrt(d2_t) * has_fg_t

        err = (p_i - t_i) * (p_i - t_i)                              # (TI, 1)
        dt_field = jnp.sqrt(err * (pow_a(pred_dt) + pow_a(targ_dt)))
        dt_field = jnp.where(valid_i, dt_field, 0.0)
        partial = jnp.sum(dt_field, keepdims=True)                   # (1, 1)

        # Accumulate across the inner grid axis: HBM writeback once per outer step.
        @pl.when(inner == 0)
        def _():
            out_ref[...] = jnp.zeros_like(out_ref)

        out_ref[...] += partial

    return kernel


@functools.partial(jax.jit, static_argnames=("alpha",))
def hausdorff_dt_loss(pred, target, alpha=2.0):
    """loss = mean( sqrt( (pred-target)^2 * (pred_dt^alpha + target_dt^alpha) ) )."""
    B, C, H, W = pred.shape
    assert C == 1, "binary single-channel input expected"
    N = H * W
    assert N < (1 << 24), "float32 pixel-id coordinate math is exact only below 2^24"
    N_pad = _round_up(N, 128)

    TI = 256 if N_pad % 256 == 0 else 128    # i-tile height (sublanes)
    num_i_tiles = N_pad // TI
    TJ = 512                                 # j lane-chunk width (multiple of 128)
    while N_pad % TJ:
        TJ //= 2
    num_chunks = N_pad // TJ

    # Generation-aware VMEM budgeting (v7x: 64 MiB per TC; v5e/v6e: 128 MiB).
    vmem_cap = _vmem_capacity_bytes()
    cache_bytes = TI * N_pad * 4
    row_db_bytes = 2 * 2 * N_pad * 4         # both inputs, double-buffered full rows
    base_bytes = row_db_bytes + (4 << 20)    # rows + misc/internal headroom
    cache_cap = min(vmem_cap // 4, 40 << 20)
    cache_d2 = (B > 1) and (cache_bytes <= cache_cap) and (
        base_bytes + cache_bytes <= vmem_cap - (16 << 20))
    vmem_limit = int(min(vmem_cap * 3 // 4,
                         max(32 << 20,
                             base_bytes + (cache_bytes if cache_d2 else 0)
                             + (8 << 20))))
    # TODO(synk): for images where the double-buffered full rows alone blow the VMEM
    # budget (~>1800^2 on v7x), add a pl.ANY + make_async_copy chunk pipeline for the
    # row inputs instead of pulling whole rows into VMEM.

    x = pred.astype(jnp.float32).reshape(B, N)
    y = target.astype(jnp.float32).reshape(B, N)

    # Per-image any-foreground flags -> SMEM via scalar prefetch (hoisted out of kernel).
    flags = jnp.stack([jnp.max(x, axis=1) > 0.5,
                       jnp.max(y, axis=1) > 0.5], axis=1).astype(jnp.int32)  # (B, 2)

    if N_pad != N:
        x = jnp.pad(x, ((0, 0), (0, N_pad - N)))
        y = jnp.pad(y, ((0, 0), (0, N_pad - N)))

    # Lane-dense chunked row layout for the j role; thin per-tile column layout
    # for the (small) i role.  Coordinates are generated inside the kernel.
    x_row = x.reshape(B, num_chunks, 1, TJ)
    y_row = y.reshape(B, num_chunks, 1, TJ)
    x_col = x.reshape(B, N_pad, 1)
    y_col = y.reshape(B, N_pad, 1)

    kernel = _make_kernel(N=N, W=W, TI=TI, TJ=TJ, num_chunks=num_chunks,
                          alpha=float(alpha), cache_d2=cache_d2,
                          batch_inner=cache_d2)

    if cache_d2:
        # (i-tile, batch) grid: batch innermost so the batch-invariant d2 tile in
        # VMEM is reused across batches; i-tiles are megacore-parallel.
        grid = (num_i_tiles, B)
        row_spec = pl.BlockSpec((None, num_chunks, 1, TJ),
                                lambda it, b, fl: (b, 0, 0, 0))
        col_spec = pl.BlockSpec((None, TI, 1), lambda it, b, fl: (b, it, 0))
        out_spec = pl.BlockSpec((None, 1, 1), lambda it, b, fl: (it, 0, 0))
        out_shape = jax.ShapeDtypeStruct((num_i_tiles, 1, 1), jnp.float32)
        scratch = [pltpu.VMEM((num_chunks, TI, TJ), jnp.float32)]
    else:
        # (batch, i-tile) grid: row blocks depend only on the outer batch axis, so
        # they stay VMEM-resident across the whole inner i-tile sweep (no re-DMA).
        grid = (B, num_i_tiles)
        row_spec = pl.BlockSpec((None, num_chunks, 1, TJ),
                                lambda b, it, fl: (b, 0, 0, 0))
        col_spec = pl.BlockSpec((None, TI, 1), lambda b, it, fl: (b, it, 0))
        out_spec = pl.BlockSpec((None, 1, 1), lambda b, it, fl: (b, 0, 0))
        out_shape = jax.ShapeDtypeStruct((B, 1, 1), jnp.float32)
        scratch = []

    partials = pl.pallas_call(
        kernel,
        out_shape=out_shape,
        grid_spec=pltpu.PrefetchScalarGridSpec(
            num_scalar_prefetch=1,
            grid=grid,
            in_specs=[row_spec, row_spec, col_spec, col_spec],
            out_specs=out_spec,
            scratch_shapes=scratch),
        compiler_params=pltpu.CompilerParams(
            dimension_semantics=("parallel", "arbitrary"),
            vmem_limit_bytes=vmem_limit),
    )(flags, x_row, y_row, x_col, y_col)

    # Tree-sum of the per-outer-step partials in plain JAX, then the mean.
    return jnp.sum(partials) / (B * C * H * W)


def reference_loss(pred, target, alpha=2.0):
    """Pure-JAX reference (brute-force EDT, same semantics) for checking."""
    B, C, H, W = pred.shape
    N = H * W
    idx = jnp.arange(N)
    ys = (idx // W).astype(jnp.float32)
    xs = (idx % W).astype(jnp.float32)
    d2 = (ys[:, None] - ys[None, :]) ** 2 + (xs[:, None] - xs[None, :]) ** 2
    big = 1e30

    def field(img_flat):
        fg = img_flat > 0.5
        d2_to_bg = jnp.min(jnp.where(fg[None, :], big, d2), axis=1)
        d2_to_fg = jnp.min(jnp.where(fg[None, :], d2, big), axis=1)
        f = jnp.where(fg, jnp.sqrt(d2_to_bg), jnp.sqrt(d2_to_fg))
        return jnp.where(jnp.any(fg), f, 0.0)

    pred_f = pred.reshape(B, N).astype(jnp.float32)
    targ_f = target.reshape(B, N).astype(jnp.float32)
    pred_dt = jax.vmap(field)(pred_f)
    targ_dt = jax.vmap(field)(targ_f)
    pred_err = (pred_f - targ_f) ** 2
    distance = pred_dt ** alpha + targ_dt ** alpha
    return jnp.mean(jnp.sqrt(pred_err * distance))


if __name__ == "__main__":
    key = jax.random.PRNGKey(0)

    def make_inputs(key, B, H, W):
        k1, k2 = jax.random.split(key)
        pred = jax.random.uniform(k1, (B, 1, H, W), jnp.float32)
        target = (jax.random.uniform(k2, (B, 1, H, W), jnp.float32) > 0.5
                  ).astype(jnp.float32)
        return pred, target

    # Case 1: B=2, 16x16  -> exercises the d2-cache path (batch-innermost grid).
    k1, k2, k3 = jax.random.split(key, 3)
    pred, target = make_inputs(k1, 2, 16, 16)
    loss = jax.block_until_ready(hausdorff_dt_loss(pred, target))
    ref = reference_loss(pred, target)
    assert jnp.allclose(loss, ref, rtol=1e-4, atol=1e-5), (loss, ref)

    # Case 2: B=1, 16x16  -> exercises the no-cache path (row-resident grid order).
    pred, target = make_inputs(k2, 1, 16, 16)
    loss = jax.block_until_ready(hausdorff_dt_loss(pred, target))
    ref = reference_loss(pred, target)
    assert jnp.allclose(loss, ref, rtol=1e-4, atol=1e-5), (loss, ref)

    # Case 3: B=2, 10x10  -> exercises padded lanes (N_pad != N) and TI=128 path.
    pred, target = make_inputs(k3, 2, 10, 10)
    loss = jax.block_until_ready(hausdorff_dt_loss(pred, target))
    ref = reference_loss(pred, target)
    assert jnp.allclose(loss, ref, rtol=1e-4, atol=1e-5), (loss, ref)

    print("KERNEL_OK")
</pallas_src>

<mosaic_0001>
module attributes {stable_mosaic.version = 11 : i64} {
  func.func @kernel(%arg0: i32, %arg1: i32, %arg2: memref<2x2xi32, #tpu.memory_space<smem>>, %arg3: memref<1x1x1x256xf32, #tpu.memory_space<vmem>>, %arg4: memref<1x1x1x256xf32, #tpu.memory_space<vmem>>, %arg5: memref<1x256x1xf32, #tpu.memory_space<vmem>>, %arg6: memref<1x256x1xf32, #tpu.memory_space<vmem>>, %arg7: memref<1x1x1xf32, #tpu.memory_space<vmem>>, %arg8: memref<1x256x256xf32, #tpu.memory_space<vmem>>) attributes {dimension_semantics = [#tpu.dimension_semantics<parallel>, #tpu.dimension_semantics<arbitrary>], iteration_bounds = array<i64: 1, 2>, scalar_prefetch = 1 : i64, scratch_operands = 1 : i64, tpu.core_type = #tpu.core_type<tc>, window_params = [{transform_indices = @transform_0, window_bounds = array<i64: 1, 1, 1, 256>}, {transform_indices = @transform_1, window_bounds = array<i64: 1, 1, 1, 256>}, {transform_indices = @transform_2, window_bounds = array<i64: 1, 256, 1>}, {transform_indices = @transform_3, window_bounds = array<i64: 1, 256, 1>}, {transform_indices = @transform_4, window_bounds = array<i64: 1, 1, 1>}]} {
    %0 = tpu.iota {dimensions = array<i32: 0>} : vector<256x1xi32>
    %c256_i32 = arith.constant 256 : i32
    %1 = arith.muli %arg0, %c256_i32 : i32
    %2 = vector.broadcast %1 : i32 to vector<256x1xi32>
    %3 = arith.addi %0, %2 : vector<256x1xi32>
    %4 = arith.sitofp %3 : vector<256x1xi32> to vector<256x1xf32>
    %cst = arith.constant 6.250000e-02 : f32
    %5 = vector.broadcast %cst : f32 to vector<256x1xf32>
    %6 = arith.mulf %4, %5 : vector<256x1xf32>
    %7 = math.floor %6 : vector<256x1xf32>
    %cst_0 = arith.constant 1.600000e+01 : f32
    %8 = vector.broadcast %cst_0 : f32 to vector<256x1xf32>
    %9 = arith.mulf %7, %8 : vector<256x1xf32>
    %10 = arith.cmpf ogt, %9, %4 : vector<256x1xf32>
    %cst_1 = arith.constant 1.000000e+00 : f32
    %11 = vector.broadcast %cst_1 : f32 to vector<256x1xf32>
    %12 = arith.subf %7, %11 : vector<256x1xf32>
    %13 = arith.select %10, %12, %7 : vector<256x1xi1>, vector<256x1xf32>
    %cst_2 = arith.constant 1.000000e+00 : f32
    %14 = vector.broadcast %cst_2 : f32 to vector<256x1xf32>
    %15 = arith.addf %13, %14 : vector<256x1xf32>
    %cst_3 = arith.constant 1.600000e+01 : f32
    %16 = vector.broadcast %cst_3 : f32 to vector<256x1xf32>
    %17 = arith.mulf %15, %16 : vector<256x1xf32>
    %18 = arith.cmpf ole, %17, %4 : vector<256x1xf32>
    %cst_4 = arith.constant 1.000000e+00 : f32
    %19 = vector.broadcast %cst_4 : f32 to vector<256x1xf32>
    %20 = arith.addf %13, %19 : vector<256x1xf32>
    %21 = arith.select %18, %20, %13 : vector<256x1xi1>, vector<256x1xf32>
    %cst_5 = arith.constant 1.600000e+01 : f32
    %22 = vector.broadcast %cst_5 : f32 to vector<256x1xf32>
    %23 = arith.mulf %21, %22 : vector<256x1xf32>
    %24 = arith.subf %4, %23 : vector<256x1xf32>
    %cst_6 = arith.constant 2.560000e+02 : f32
    %25 = vector.broadcast %cst_6 : f32 to vector<256x1xf32>
    %26 = arith.cmpf olt, %4, %25 : vector<256x1xf32>
    %c0 = arith.constant 0 : index
    %c0_7 = arith.constant 0 : index
    %c0_8 = arith.constant 0 : index
    %27 = vector.load %arg5[%c0, %c0_7, %c0_8] : memref<1x256x1xf32, #tpu.memory_space<vmem>>, vector<1x256x1xf32>
    %28 = vector.shape_cast %27 : vector<1x256x1xf32> to vector<256x1xf32>
    %c0_9 = arith.constant 0 : index
    %c0_10 = arith.constant 0 : index
    %c0_11 = arith.constant 0 : index
    %29 = vector.load %arg6[%c0_9, %c0_10, %c0_11] : memref<1x256x1xf32, #tpu.memory_space<vmem>>, vector<1x256x1xf32>
    %30 = vector.shape_cast %29 : vector<1x256x1xf32> to vector<256x1xf32>
    %cst_12 = arith.constant 5.000000e-01 : f32
    %31 = vector.broadcast %cst_12 : f32 to vector<256x1xf32>
    %32 = arith.cmpf ogt, %28, %31 : vector<256x1xf32>
    %cst_13 = arith.constant 5.000000e-01 : f32
    %33 = vector.broadcast %cst_13 : f32 to vector<256x1xf32>
    %34 = arith.cmpf ogt, %30, %33 : vector<256x1xf32>
    %35 = arith.index_cast %arg1 : i32 to index
    %c0_14 = arith.constant 0 : index
    %36 = memref.load %arg2[%35, %c0_14] : memref<2x2xi32, #tpu.memory_space<smem>>
    %c0_i32 = arith.constant 0 : i32
    %37 = arith.cmpi sgt, %36, %c0_i32 : i32
    %cst_15 = arith.constant 1.000000e+00 : f32
    %cst_16 = arith.constant 0.000000e+00 : f32
    %38 = arith.select %37, %cst_15, %cst_16 : f32
    %39 = arith.index_cast %arg1 : i32 to index
    %c1 = arith.constant 1 : index
    %40 = memref.load %arg2[%39, %c1] : memref<2x2xi32, #tpu.memory_space<smem>>
    %c0_i32_17 = arith.constant 0 : i32
    %41 = arith.cmpi sgt, %40, %c0_i32_17 : i32
    %cst_18 = arith.constant 1.000000e+00 : f32
    %cst_19 = arith.constant 0.000000e+00 : f32
    %42 = arith.select %41, %cst_18, %cst_19 : f32
    %cst_20 = arith.constant 1.000000e+30 : f32
    %43 = vector.broadcast %cst_20 : f32 to vector<256x1xf32>
    %cst_21 = arith.constant 1.000000e+30 : f32
    %44 = vector.broadcast %cst_21 : f32 to vector<256x1xf32>
    %c0_i32_22 = arith.constant 0 : i32
    %c0_i32_23 = arith.constant 0 : i32
    %45 = arith.cmpi eq, %arg1, %c0_i32_23 : i32
    %46 = arith.extui %45 : i1 to i32
    %c0_i32_24 = arith.constant 0 : i32
    %47 = arith.cmpi ne, %46, %c0_i32_24 : i32
    scf.if %47 {
      %107 = tpu.iota {dimensions = array<i32: 1>} : vector<1x256xi32>
      %c256_i32_49 = arith.constant 256 : i32
      %108 = arith.muli %c0_i32_22, %c256_i32_49 : i32
      %109 = vector.broadcast %108 : i32 to vector<1x256xi32>
      %110 = arith.addi %107, %109 : vector<1x256xi32>
      %111 = arith.sitofp %110 : vector<1x256xi32> to vector<1x256xf32>
      %cst_50 = arith.constant 6.250000e-02 : f32
      %112 = vector.broadcast %cst_50 : f32 to vector<1x256xf32>
      %113 = arith.mulf %111, %112 : vector<1x256xf32>
      %114 = math.floor %113 : vector<1x256xf32>
      %cst_51 = arith.constant 1.600000e+01 : f32
      %115 = vector.broadcast %cst_51 : f32 to vector<1x256xf32>
      %116 = arith.mulf %114, %115 : vector<1x256xf32>
      %117 = arith.cmpf ogt, %116, %111 : vector<1x256xf32>
      %cst_52 = arith.constant 1.000000e+00 : f32
      %118 = vector.broadcast %cst_52 : f32 to vector<1x256xf32>
      %119 = arith.subf %114, %118 : vector<1x256xf32>
      %120 = arith.select %117, %119, %114 : vector<1x256xi1>, vector<1x256xf32>
      %cst_53 = arith.constant 1.000000e+00 : f32
      %121 = vector.broadcast %cst_53 : f32 to vector<1x256xf32>
      %122 = arith.addf %120, %121 : vector<1x256xf32>
      %cst_54 = arith.constant 1.600000e+01 : f32
      %123 = vector.broadcast %cst_54 : f32 to vector<1x256xf32>
      %124 = arith.mulf %122, %123 : vector<1x256xf32>
      %125 = arith.cmpf ole, %124, %111 : vector<1x256xf32>
      %cst_55 = arith.constant 1.000000e+00 : f32
      %126 = vector.broadcast %cst_55 : f32 to vector<1x256xf32>
      %127 = arith.addf %120, %126 : vector<1x256xf32>
      %128 = arith.select %125, %127, %120 : vector<1x256xi1>, vector<1x256xf32>
      %cst_56 = arith.constant 1.600000e+01 : f32
      %129 = vector.broadcast %cst_56 : f32 to vector<1x256xf32>
      %130 = arith.mulf %128, %129 : vector<1x256xf32>
      %131 = arith.subf %111, %130 : vector<1x256xf32>
      %132 = vector.broadcast %21 : vector<256x1xf32> to vector<256x256xf32>
      %133 = vector.broadcast %128 : vector<1x256xf32> to vector<256x256xf32>
      %134 = arith.subf %132, %133 : vector<256x256xf32>
      %135 = vector.broadcast %24 : vector<256x1xf32> to vector<256x256xf32>
      %136 = vector.broadcast %131 : vector<1x256xf32> to vector<256x256xf32>
      %137 = arith.subf %135, %136 : vector<256x256xf32>
      %138 = arith.mulf %134, %134 : vector<256x256xf32>
      %139 = arith.mulf %137, %137 : vector<256x256xf32>
      %140 = arith.addf %138, %139 : vector<256x256xf32>
      %141 = arith.index_cast %c0_i32_22 : i32 to index
      %c0_57 = arith.constant 0 : index
      %c0_58 = arith.constant 0 : index
      %142 = vector.load %arg8[%141, %c0_57, %c0_58] : memref<1x256x256xf32, #tpu.memory_space<vmem>>, vector<1x256x256xf32>
      %143 = vector.shape_cast %142 : vector<1x256x256xf32> to vector<256x256xf32>
      %144 = vector.shape_cast %140 : vector<256x256xf32> to vector<1x256x256xf32>
      tpu.vector_store %arg8[%141, %c0_57, %c0_58], %144 {strides = array<i32>} : memref<1x256x256xf32, #tpu.memory_space<vmem>>, vector<1x256x256xf32>,
    } else {
    }
    %48 = arith.index_cast %c0_i32_22 : i32 to index
    %c0_25 = arith.constant 0 : index
    %c0_26 = arith.constant 0 : index
    %49 = vector.load %arg8[%48, %c0_25, %c0_26] : memref<1x256x256xf32, #tpu.memory_space<vmem>>, vector<1x256x256xf32>
    %50 = vector.shape_cast %49 : vector<1x256x256xf32> to vector<256x256xf32>
    %c0_27 = arith.constant 0 : index
    %51 = arith.index_cast %c0_i32_22 : i32 to index
    %c0_28 = arith.constant 0 : index
    %c0_29 = arith.constant 0 : index
    %52 = vector.load %arg3[%c0_27, %51, %c0_28, %c0_29] : memref<1x1x1x256xf32, #tpu.memory_space<vmem>>, vector<1x1x1x256xf32>
    %53 = vector.shape_cast %52 : vector<1x1x1x256xf32> to vector<1x256xf32>
    %c0_30 = arith.constant 0 : index
    %54 = arith.index_cast %c0_i32_22 : i32 to index
    %c0_31 = arith.constant 0 : index
    %c0_32 = arith.constant 0 : index
    %55 = vector.load %arg4[%c0_30, %54, %c0_31, %c0_32] : memref<1x1x1x256xf32, #tpu.memory_space<vmem>>, vector<1x1x1x256xf32>
    %56 = vector.shape_cast %55 : vector<1x1x1x256xf32> to vector<1x256xf32>
    %cst_33 = arith.constant 5.000000e-01 : f32
    %57 = vector.broadcast %cst_33 : f32 to vector<1x256xf32>
    %58 = arith.cmpf ogt, %53, %57 : vector<1x256xf32>
    %59 = vector.broadcast %32 : vector<256x1xi1> to vector<256x256xi1>
    %60 = vector.broadcast %58 : vector<1x256xi1> to vector<256x256xi1>
    %61 = arith.xori %59, %60 : vector<256x256xi1>
    %cst_34 = arith.constant 5.000000e-01 : f32
    %62 = vector.broadcast %cst_34 : f32 to vector<1x256xf32>
    %63 = arith.cmpf ogt, %56, %62 : vector<1x256xf32>
    %64 = vector.broadcast %34 : vector<256x1xi1> to vector<256x256xi1>
    %65 = vector.broadcast %63 : vector<1x256xi1> to vector<256x256xi1>
    %66 = arith.xori %64, %65 : vector<256x256xi1>
    %cst_35 = arith.constant 1.000000e+30 : f32
    %67 = vector.broadcast %cst_35 : f32 to vector<256x256xf32>
    %68 = arith.select %61, %50, %67 : vector<256x256xi1>, vector<256x256xf32>
    %cst_36 = arith.constant dense<0x7F800000> : vector<256xf32>
    %69 = vector.multi_reduction <minimumf>, %68, %cst_36 [1] : vector<256x256xf32> to vector<256xf32>
    %70 = vector.shape_cast %69 : vector<256xf32> to vector<256x1xf32>
    %cst_37 = arith.constant 1.000000e+30 : f32
    %71 = vector.broadcast %cst_37 : f32 to vector<256x256xf32>
    %72 = arith.select %66, %50, %71 : vector<256x256xi1>, vector<256x256xf32>
    %cst_38 = arith.constant dense<0x7F800000> : vector<256xf32>
    %73 = vector.multi_reduction <minimumf>, %72, %cst_38 [1] : vector<256x256xf32> to vector<256xf32>
    %74 = vector.shape_cast %73 : vector<256xf32> to vector<256x1xf32>
    %75 = arith.minimumf %43, %70 : vector<256x1xf32>
    %76 = arith.minimumf %44, %74 : vector<256x1xf32>
    %c1_i32 = arith.constant 1 : i32
    %77 = math.sqrt %75 : vector<256x1xf32>
    %78 = vector.broadcast %38 : f32 to vector<256x1xf32>
    %79 = arith.mulf %77, %78 : vector<256x1xf32>
    %80 = math.sqrt %76 : vector<256x1xf32>
    %81 = vector.broadcast %42 : f32 to vector<256x1xf32>
    %82 = arith.mulf %80, %81 : vector<256x1xf32>
    %83 = arith.subf %28, %30 : vector<256x1xf32>
    %84 = arith.subf %28, %30 : vector<256x1xf32>
    %85 = arith.mulf %83, %84 : vector<256x1xf32>
    %86 = arith.mulf %79, %79 : vector<256x1xf32>
    %87 = arith.mulf %82, %82 : vector<256x1xf32>
    %88 = arith.addf %86, %87 : vector<256x1xf32>
    %89 = arith.mulf %85, %88 : vector<256x1xf32>
    %90 = math.sqrt %89 : vector<256x1xf32>
    %cst_39 = arith.constant 0.000000e+00 : f32
    %91 = vector.broadcast %cst_39 : f32 to vector<256x1xf32>
    %92 = arith.select %26, %90, %91 : vector<256x1xi1>, vector<256x1xf32>
    %93 = vector.shape_cast %92 : vector<256x1xf32> to vector<1x256x1xf32>
    %cst_40 = arith.constant dense<0.000000e+00> : vector<1xf32>
    %94 = vector.multi_reduction <add>, %93, %cst_40 [1, 2] : vector<1x256x1xf32> to vector<1xf32>
    %95 = vector.shape_cast %94 : vector<1xf32> to vector<1x1x1xf32>
    %96 = vector.extract %95[0, 0, 0] : f32 from vector<1x1x1xf32>
    %97 = vector.broadcast %96 : f32 to vector<1x1xf32>
    %c0_i32_41 = arith.constant 0 : i32
    %98 = arith.cmpi eq, %arg1, %c0_i32_41 : i32
    %99 = arith.extui %98 : i1 to i32
    %c0_i32_42 = arith.constant 0 : i32
    %100 = arith.cmpi ne, %99, %c0_i32_42 : i32
    scf.if %100 {
      %cst_49 = arith.constant 0.000000e+00 : f32
      %107 = vector.broadcast %cst_49 : f32 to vector<1x1xf32>
      %c0_50 = arith.constant 0 : index
      %c0_51 = arith.constant 0 : index
      %c0_52 = arith.constant 0 : index
      %108 = vector.load %arg7[%c0_50, %c0_51, %c0_52] : memref<1x1x1xf32, #tpu.memory_space<vmem>>, vector<1x1x1xf32>
      %109 = vector.shape_cast %108 : vector<1x1x1xf32> to vector<1x1xf32>
      %110 = vector.shape_cast %107 : vector<1x1xf32> to vector<1x1x1xf32>
      tpu.vector_store %arg7[%c0_50, %c0_51, %c0_52], %110 {strides = array<i32>} : memref<1x1x1xf32, #tpu.memory_space<vmem>>, vector<1x1x1xf32>,
    } else {
    }
    %c0_43 = arith.constant 0 : index
    %c0_44 = arith.constant 0 : index
    %c0_45 = arith.constant 0 : index
    %101 = vector.load %arg7[%c0_43, %c0_44, %c0_45] : memref<1x1x1xf32, #tpu.memory_space<vmem>>, vector<1x1x1xf32>
    %102 = vector.shape_cast %101 : vector<1x1x1xf32> to vector<1x1xf32>
    %103 = arith.addf %102, %97 : vector<1x1xf32>
    %c0_46 = arith.constant 0 : index
    %c0_47 = arith.constant 0 : index
    %c0_48 = arith.constant 0 : index
    %104 = vector.load %arg7[%c0_46, %c0_47, %c0_48] : memref<1x1x1xf32, #tpu.memory_space<vmem>>, vector<1x1x1xf32>
    %105 = vector.shape_cast %104 : vector<1x1x1xf32> to vector<1x1xf32>
    %106 = vector.shape_cast %103 : vector<1x1xf32> to vector<1x1x1xf32>
    tpu.vector_store %arg7[%c0_46, %c0_47, %c0_48], %106 {strides = array<i32>} : memref<1x1x1xf32, #tpu.memory_space<vmem>>, vector<1x1x1xf32>,
    return
  }
  func.func @transform_0(%arg0: i32, %arg1: i32, %arg2: memref<2x2xi32, #tpu.memory_space<smem>>) -> (i32, i32, i32, i32) {
    %c0_i32 = arith.constant 0 : i32
    %c0_i32_0 = arith.constant 0 : i32
    %c0_i32_1 = arith.constant 0 : i32
    %c0_i32_2 = arith.constant 0 : i32
    return %arg1, %c0_i32, %c0_i32_0, %c0_i32_1 : i32, i32, i32, i32
  }
  func.func @transform_1(%arg0: i32, %arg1: i32, %arg2: memref<2x2xi32, #tpu.memory_space<smem>>) -> (i32, i32, i32, i32) {
    %c0_i32 = arith.constant 0 : i32
    %c0_i32_0 = arith.constant 0 : i32
    %c0_i32_1 = arith.constant 0 : i32
    %c0_i32_2 = arith.constant 0 : i32
    return %arg1, %c0_i32, %c0_i32_0, %c0_i32_1 : i32, i32, i32, i32
  }
  func.func @transform_2(%arg0: i32, %arg1: i32, %arg2: memref<2x2xi32, #tpu.memory_space<smem>>) -> (i32, i32, i32) {
    %c0_i32 = arith.constant 0 : i32
    %c0_i32_0 = arith.constant 0 : i32
    return %arg1, %arg0, %c0_i32 : i32, i32, i32
  }
  func.func @transform_3(%arg0: i32, %arg1: i32, %arg2: memref<2x2xi32, #tpu.memory_space<smem>>) -> (i32, i32, i32) {
    %c0_i32 = arith.constant 0 : i32
    %c0_i32_0 = arith.constant 0 : i32
    return %arg1, %arg0, %c0_i32 : i32, i32, i32
  }
  func.func @transform_4(%arg0: i32, %arg1: i32, %arg2: memref<2x2xi32, #tpu.memory_space<smem>>) -> (i32, i32, i32) {
    %c0_i32 = arith.constant 0 : i32
    %c0_i32_0 = arith.constant 0 : i32
    %c0_i32_1 = arith.constant 0 : i32
    return %arg0, %c0_i32, %c0_i32_0 : i32, i32, i32
  }
}

</mosaic_0001>

<llo_original>
// kernel: hausdorff_dt_loss.1
$region0: #{hausdorff_dt_loss.1}
  #allocation0 [shape = 'u32[]', space=smem, size = 0x4, offset = 0x4, fixed_abs, tag = 'smem constant byte address 0x4 - core index']
  #allocation1 [shape = 'u32[144,128]{1,0:T(1,128)}', space=vmem, size = 0x12000, scoped, tag = 'internal scratch']
  #allocation2 [shape = 'f32[1,256,256]{2,1,0:T(8,128)}', space=vmem, size = 0x40000, scoped, tag = 'scratch operand']
  #allocation3 [shape = 's32[1]{0}', space=sflag, size = 0x4, scoped, tag = 'scoped memory for hausdorff_dt_loss.1']
  #allocation4 [shape = 'u8[1024]{0}', space=smem, size = 0x400, scoped, tag = 'prefetched SMEM operand 0']
  %s0 = inlined_call_operand.vmem [shape: s32[2,2], index: 0, kind: input, shape index: {}]
  %s1 = inlined_call_operand.vmem [shape: f32[2,1,1,256], index: 1, kind: input, shape index: {}]
  %s2 = inlined_call_operand.vmem [shape: f32[2,1,1,256], index: 2, kind: input, shape index: {}]
  %s3 = inlined_call_operand.vmem [shape: f32[2,256,1], index: 3, kind: input, shape index: {}]
  %s4 = inlined_call_operand.vmem [shape: f32[2,256,1], index: 4, kind: input, shape index: {}]
  %s5 = inlined_call_operand.hbm [shape: f32[1,1,1], index: 5, kind: output, shape index: {}]
  %s6 = sld [smem:[#allocation0]]
  $region57: #{hausdorff_dt_loss.1} parent=0
    _
  %s8 = ssub.s32 1, %s6
  %s9 = scalar_select 0, %s8, %s6
  %s10 = sshll.u32 %s0, 4
  %s11 = int_to_ptr.vmem [resolvable:$true] %s10
  %13 = dma.vmem_to_smem %s11, 32, [#allocation4], [#allocation3]
  %14 = dma.done [#allocation3], 32
  %15 = sfence
  $region1: #{hausdorff_dt_loss.1} parent=0
    #allocation5 [shape = 'u8[512]{0}', space=vmem, size = 0x400, scoped, tag = 'output window, operand 0, single buffered']
    #allocation6 [shape = 's32[2]{0}', space=sflag, size = 0x8, scoped, tag = 'scoped memory for hausdorff_dt_loss.1']
    %16 = vsyncpa [#allocation6], 0
    loop: start=0, step=1, limit=4
    $region2: #{hausdorff_dt_loss.1} parent=1 // loop_pre_header
      _
    $region3: #{hausdorff_dt_loss.1} parent=1 // loop_header
      %s18 = sphi 0, %s22
      %p19 = scmp.ge.s32.totalorder %s18, 4
      %s25 = sphi 0, %s37
      %s26 = sphi 0, %s33
      %s27 = sphi 0, %s25
      %s28 = sphi 0, %s26
      %s29 = sphi 0, %s27
      %s30 = sphi 0, %s28
      %s40 = sphi 0, %s42
      %s43 = sphi 0, %s40
      %s44 = sphi 0, %s43
      %s60 = sphi 0, %s44
      %s66 = sphi 0, %s68
      %s69 = sphi 0, %s66
      %s70 = sphi 0, %s69
      %s86 = sphi 0, %s70
      %s94 = sphi 0, %s96
      %s97 = sphi 0, %s94
      %s98 = sphi 0, %s97
      %s114 = sphi 0, %s98
      %s122 = sphi 0, %s124
      %s125 = sphi 0, %s122
      %s126 = sphi 0, %s125
      %s142 = sphi 0, %s126
      %s148 = sphi 0, %s150
      %s151 = sphi 0, %s148
      %s152 = sphi 0, %s151
      %s168 = sphi 0, %s152
    $region4: #{hausdorff_dt_loss.1} parent=1 // loop_header_branch
      %21 = sbr.rel (%p19) target = $region8
    $region5: #{hausdorff_dt_loss.1} parent=1 // loop_body
      %s23 = ssub.s32 %s18, 1
      %s24 = ssub.s32 %s18, 2
      %s31 = sadd.s32 1, %s26
      %p32 = scmp.ge.s32.totalorder %s31, 2
      %s33 = scalar_select %p32, 0, %s31
      %s34 = sadd.s32 1, %s25
      %s35 = scalar_select %p32, %s34, %s25
      %p36 = scmp.ge.s32.totalorder %s35, 1
      %s37 = scalar_select %p36, 0, %s35
      %s38 = ssub.s32 %s26, %s33
      %p39 = scmp.eq.s32.totalorder %s38, 0
      %s41 = sadd.s32 %s40, 1
      %s42 = scalar_select %p39, %s40, %s41
      %p45 = pneg %p39
      %p46 = scmp.eq.s32.totalorder %s18, 1
      %p47 = por %p45, %p46
      %p48 = scmp.ne.s32.totalorder %s40, %s43
      %p49 = scmp.eq.s32.totalorder %s18, 0
      %p50 = por %p48, %p49
      %p51 = scmp.ne.s32.totalorder %s40, %s43
      %p52 = scmp.eq.s32.totalorder %s23, 1
      %p53 = por %p51, %p52
      %p54 = scmp.ne.s32.totalorder %s43, %s44
      %p55 = scmp.eq.s32.totalorder %s23, 0
      %p56 = por %p54, %p55
      %p57 = scmp.ne.s32.totalorder %s43, %s44
      %p58 = scmp.eq.s32.totalorder %s24, 1
      %p59 = por %p57, %p58
      %p61 = scmp.ne.s32.totalorder %s44, %s60
      %p62 = scmp.eq.s32.totalorder %s24, 0
      %p63 = por %p61, %p62
      %s64 = ssub.s32 %s26, %s33
      %p65 = scmp.eq.s32.totalorder %s64, 0
      %s67 = sadd.s32 %s66, 1
      %s68 = scalar_select %p65, %s66, %s67
      %p71 = pneg %p65
      %p72 = scmp.eq.s32.totalorder %s18, 1
      %p73 = por %p71, %p72
      %p74 = scmp.ne.s32.totalorder %s66, %s69
      %p75 = scmp.eq.s32.totalorder %s18, 0
      %p76 = por %p74, %p75
      %p77 = scmp.ne.s32.totalorder %s66, %s69
      %p78 = scmp.eq.s32.totalorder %s23, 1
      %p79 = por %p77, %p78
      %p80 = scmp.ne.s32.totalorder %s69, %s70
      %p81 = scmp.eq.s32.totalorder %s23, 0
      %p82 = por %p80, %p81
      %p83 = scmp.ne.s32.totalorder %s69, %s70
      %p84 = scmp.eq.s32.totalorder %s24, 1
      %p85 = por %p83, %p84
      %p87 = scmp.ne.s32.totalorder %s70, %s86
      %p88 = scmp.eq.s32.totalorder %s24, 0
      %p89 = por %p87, %p88
      %s90 = ssub.s32 %s26, %s33
      %s91 = ssub.s32 %s25, %s37
      %s92 = sor.u32 %s90, %s91
      %p93 = scmp.eq.s32.totalorder %s92, 0
      %s95 = sadd.s32 %s94, 1
      %s96 = scalar_select %p93, %s94, %s95
      %p99 = pneg %p93
      %p100 = scmp.eq.s32.totalorder %s18, 1
      %p101 = por %p99, %p100
      %p102 = scmp.ne.s32.totalorder %s94, %s97
      %p103 = scmp.eq.s32.totalorder %s18, 0
      %p104 = por %p102, %p103
      %p105 = scmp.ne.s32.totalorder %s94, %s97
      %p106 = scmp.eq.s32.totalorder %s23, 1
      %p107 = por %p105, %p106
      %p108 = scmp.ne.s32.totalorder %s97, %s98
      %p109 = scmp.eq.s32.totalorder %s23, 0
      %p110 = por %p108, %p109
      %p111 = scmp.ne.s32.totalorder %s97, %s98
      %p112 = scmp.eq.s32.totalorder %s24, 1
      %p113 = por %p111, %p112
      %p115 = scmp.ne.s32.totalorder %s98, %s114
      %p116 = scmp.eq.s32.totalorder %s24, 0
      %p117 = por %p115, %p116
      %s118 = ssub.s32 %s26, %s33
      %s119 = ssub.s32 %s25, %s37
      %s120 = sor.u32 %s118, %s119
      %p121 = scmp.eq.s32.totalorder %s120, 0
      %s123 = sadd.s32 %s122, 1
      %s124 = scalar_select %p121, %s122, %s123
      %p127 = pneg %p121
      %p128 = scmp.eq.s32.totalorder %s18, 1
      %p129 = por %p127, %p128
      %p130 = scmp.ne.s32.totalorder %s122, %s125
      %p131 = scmp.eq.s32.totalorder %s18, 0
      %p132 = por %p130, %p131
      %p133 = scmp.ne.s32.totalorder %s122, %s125
      %p134 = scmp.eq.s32.totalorder %s23, 1
      %p135 = por %p133, %p134
      %p136 = scmp.ne.s32.totalorder %s125, %s126
      %p137 = scmp.eq.s32.totalorder %s23, 0
      %p138 = por %p136, %p137
      %p139 = scmp.ne.s32.totalorder %s125, %s126
      %p140 = scmp.eq.s32.totalorder %s24, 1
      %p141 = por %p139, %p140
      %p143 = scmp.ne.s32.totalorder %s126, %s142
      %p144 = scmp.eq.s32.totalorder %s24, 0
      %p145 = por %p143, %p144
      %s146 = ssub.s32 %s25, %s37
      %p147 = scmp.eq.s32.totalorder %s146, 0
      %s149 = sadd.s32 %s148, 1
      %s150 = scalar_select %p147, %s148, %s149
      %p153 = pneg %p147
      %p154 = scmp.eq.s32.totalorder %s18, 1
      %p155 = por %p153, %p154
      %p156 = scmp.ne.s32.totalorder %s148, %s151
      %p157 = scmp.eq.s32.totalorder %s18, 0
      %p158 = por %p156, %p157
      %p159 = scmp.ne.s32.totalorder %s148, %s151
      %p160 = scmp.eq.s32.totalorder %s23, 1
      %p161 = por %p159, %p160
      %p162 = scmp.ne.s32.totalorder %s151, %s152
      %p163 = scmp.eq.s32.totalorder %s23, 0
      %p164 = por %p162, %p163
      %p165 = scmp.ne.s32.totalorder %s151, %s152
      %p166 = scmp.eq.s32.totalorder %s24, 1
      %p167 = por %p165, %p166
      %p169 = scmp.ne.s32.totalorder %s152, %s168
      %p170 = scmp.eq.s32.totalorder %s24, 0
      %p171 = por %p169, %p170
      %p172 = scmp.le.s32.totalorder 1, %s18
      %p173 = scmp.lt.s32.totalorder %s18, 3
      %p174 = pnand %p172, %p173
      %p175 = pneg %p174
      // Predicated region
      $region9: #{hausdorff_dt_loss.1} parent=5 // pred_check
        _
      $region10: #{hausdorff_dt_loss.1} parent=5 // pred_check_branch
        %177 = sbr.rel (%p174) target = $region12
      $region11: #{hausdorff_dt_loss.1} parent=5 // pred_region
        %s178 = ssub.s32 %s18, 1
      $region12: #{hausdorff_dt_loss.1} parent=5 // pred_fallthru
        _
      %p179 = scmp.lt.s32.totalorder %s18, 2
      // Predicated region
      $region13: #{hausdorff_dt_loss.1} parent=5 // pred_check
        %p180 = pneg %p179
      $region14: #{hausdorff_dt_loss.1} parent=5 // pred_check_branch
        %182 = sbr.rel (%p180) target = $region16
      $region15: #{hausdorff_dt_loss.1} parent=5 // pred_region
        // Predicated region
        $region17: #{hausdorff_dt_loss.1} parent=15 // pred_check
          %p183 = pneg %p50
        $region18: #{hausdorff_dt_loss.1} parent=15 // pred_check_branch
          %185 = sbr.rel (%p183) target = $region20
        $region19: #{hausdorff_dt_loss.1} parent=15 // pred_region
          %p186 = scmp.lt.s32.totalorder %s26, 1
          %s187 = scalar_select %p186, %s26, 1
          %s188 = smul.addr %s187, 2
          %s189 = scalar_lea.vmem %s1, %s188
        $region20: #{hausdorff_dt_loss.1} parent=15 // pred_fallthru
          _
        // Predicated region
        $region21: #{hausdorff_dt_loss.1} parent=15 // pred_check
          %p190 = pneg %p76
        $region22: #{hausdorff_dt_loss.1} parent=15 // pred_check_branch
          %192 = sbr.rel (%p190) target = $region24
        $region23: #{hausdorff_dt_loss.1} parent=15 // pred_region
          %p193 = scmp.lt.s32.totalorder %s26, 1
          %s194 = scalar_select %p193, %s26, 1
          %s195 = smul.addr %s194, 2
          %s196 = scalar_lea.vmem %s2, %s195
        $region24: #{hausdorff_dt_loss.1} parent=15 // pred_fallthru
          _
        // Predicated region
        $region25: #{hausdorff_dt_loss.1} parent=15 // pred_check
          %p197 = pneg %p104
        $region26: #{hausdorff_dt_loss.1} parent=15 // pred_check_branch
          %199 = sbr.rel (%p197) target = $region28
        $region27: #{hausdorff_dt_loss.1} parent=15 // pred_region
          %s200 = smul.u32 32, %s25
          %p201 = scmp.lt.s32.totalorder %s26, 1
          %s202 = scalar_select %p201, %s26, 1
          %p203 = scmp.lt.s32.totalorder %s200, 31
          %s204 = scalar_select %p203, %s200, 31
          %s205 = smul.addr %s202, 32
          %s206 = sadd.s32 %s204, %s205
          %s207 = smul.addr %s206, 8
          %s208 = scalar_lea.vmem %s3, %s207
          %s209 = smul.u32 32, %s25
        $region28: #{hausdorff_dt_loss.1} parent=15 // pred_fallthru
          _
        // Predicated region
        $region29: #{hausdorff_dt_loss.1} parent=15 // pred_check
          %p210 = pneg %p132
        $region30: #{hausdorff_dt_loss.1} parent=15 // pred_check_branch
          %212 = sbr.rel (%p210) target = $region32
        $region31: #{hausdorff_dt_loss.1} parent=15 // pred_region
          %s213 = smul.u32 32, %s25
          %p214 = scmp.lt.s32.totalorder %s26, 1
          %s215 = scalar_select %p214, %s26, 1
          %p216 = scmp.lt.s32.totalorder %s213, 31
          %s217 = scalar_select %p216, %s213, 31
          %s218 = smul.addr %s215, 32
          %s219 = sadd.s32 %s217, %s218
          %s220 = smul.addr %s219, 8
          %s221 = scalar_lea.vmem %s4, %s220
          %s222 = smul.u32 32, %s25
        $region32: #{hausdorff_dt_loss.1} parent=15 // pred_fallthru
          _
      $region16: #{hausdorff_dt_loss.1} parent=5 // pred_fallthru
        _
      %p223 = scmp.le.s32.totalorder 1, %s18
      %p224 = scmp.lt.s32.totalorder %s18, 3
      %p225 = pnand %p223, %p224
      %p226 = pneg %p225
      // Predicated region
      $region33: #{hausdorff_dt_loss.1} parent=5 // pred_check
        _
      $region34: #{hausdorff_dt_loss.1} parent=5 // pred_check_branch
        %228 = sbr.rel (%p225) target = $region36
      $region35: #{hausdorff_dt_loss.1} parent=5 // pred_region
        %s229 = ssub.s32 %s18, 1
        %p230 = scmp.lt.s32.totalorder %s28, 1
        %s231 = scalar_select %p230, %s28, 1
        %s232 = smul.addr %s231, 2
        %s233 = scalar_lea.vmem %s1, %s232
        %p234 = pneg %p56
        %p235 = pneg %p53
        %p236 = scmp.lt.s32.totalorder %s28, 1
        %s237 = scalar_select %p236, %s28, 1
        %s238 = smul.addr %s237, 2
        %s239 = scalar_lea.vmem %s2, %s238
        %p240 = pneg %p82
        %p241 = pneg %p79
        %s242 = smul.u32 32, %s27
        %p243 = scmp.lt.s32.totalorder %s28, 1
        %s244 = scalar_select %p243, %s28, 1
        %p245 = scmp.lt.s32.totalorder %s242, 31
        %s246 = scalar_select %p245, %s242, 31
        %s247 = smul.addr %s244, 32
        %s248 = sadd.s32 %s246, %s247
        %s249 = smul.addr %s248, 8
        %s250 = scalar_lea.vmem %s3, %s249
        %p251 = pneg %p110
        %p252 = pneg %p107
        %s253 = smul.u32 32, %s27
        %p254 = scmp.lt.s32.totalorder %s28, 1
        %s255 = scalar_select %p254, %s28, 1
        %p256 = scmp.lt.s32.totalorder %s253, 31
        %s257 = scalar_select %p256, %s253, 31
        %s258 = smul.addr %s255, 32
        %s259 = sadd.s32 %s257, %s258
        %s260 = smul.addr %s259, 8
        %s261 = scalar_lea.vmem %s4, %s260
        %p262 = pneg %p138
        %p263 = pneg %p135
        %p264 = pneg %p164
        %p265 = pneg %p161
        %p266 = scmp.lt.s32.totalorder %s28, 1
        %s267 = scalar_select %p266, %s28, 1
        %s268 = smul.addr %s267, 2
        %s269 = scalar_lea.vmem %s1, %s268
        %p270 = scmp.lt.s32.totalorder %s28, 1
        %s271 = scalar_select %p270, %s28, 1
        %s272 = smul.addr %s271, 2
        %s273 = scalar_lea.vmem %s2, %s272
        %s274 = smul.u32 32, %s27
        %p275 = scmp.lt.s32.totalorder %s28, 1
        %s276 = scalar_select %p275, %s28, 1
        %p277 = scmp.lt.s32.totalorder %s274, 31
        %s278 = scalar_select %p277, %s274, 31
        %s279 = smul.addr %s276, 32
        %s280 = sadd.s32 %s278, %s279
        %s281 = smul.addr %s280, 8
        %s282 = scalar_lea.vmem %s3, %s281
        %s283 = smul.u32 32, %s27
        %s284 = smul.u32 32, %s27
        %p285 = scmp.lt.s32.totalorder %s28, 1
        %s286 = scalar_select %p285, %s28, 1
        %p287 = scmp.lt.s32.totalorder %s284, 31
        %s288 = scalar_select %p287, %s284, 31
        %s289 = smul.addr %s286, 32
        %s290 = sadd.s32 %s288, %s289
        %s291 = smul.addr %s290, 8
        %s292 = scalar_lea.vmem %s4, %s291
        %s293 = smul.u32 32, %s27
        %v294 = vlaneseq
        %v295 = vshrl.u32 %v294, 7
        %v296 = vadd.s32 %v295, 8
        %v297 = vadd.s32 %v295, 16
        %v298 = vadd.s32 %v295, 24
        %v299 = vadd.s32 %v295, 32
        %v300 = vadd.s32 %v295, 40
        %v301 = vadd.s32 %v295, 48
        %v302 = vadd.s32 %v295, 56
        %v303 = vadd.s32 %v295, 64
        %v304 = vadd.s32 %v295, 72
        %v305 = vadd.s32 %v295, 80
        %v306 = vadd.s32 %v295, 88
        %v307 = vadd.s32 %v295, 96
        %v308 = vadd.s32 %v295, 104
        %v309 = vadd.s32 %v295, 112
        %v310 = vadd.s32 %v295, 120
        %v311 = vadd.s32 %v295, 128
        %v312 = vadd.s32 %v295, 136
        %v313 = vadd.s32 %v295, 144
        %v314 = vadd.s32 %v295, 152
        %v315 = vadd.s32 %v295, 160
        %v316 = vadd.s32 %v295, 168
        %v317 = vadd.s32 %v295, 176
        %v318 = vadd.s32 %v295, 184
        %v319 = vadd.s32 %v295, 192
        %v320 = vadd.s32 %v295, 200
        %v321 = vadd.s32 %v295, 208
        %v322 = vadd.s32 %v295, 216
        %v323 = vadd.s32 %v295, 224
        %v324 = vadd.s32 %v295, 232
        %v325 = vadd.s32 %v295, 240
        %v326 = vadd.s32 %v295, 248
        %s327 = smul.u32 %s27, 256
        %v328 = vstv %s327
        %v329 = vadd.s32 %v295, %v328
        %v330 = vadd.s32 %v296, %v328
        %v331 = vadd.s32 %v297, %v328
        %v332 = vadd.s32 %v298, %v328
        %v333 = vadd.s32 %v299, %v328
        %v334 = vadd.s32 %v300, %v328
        %v335 = vadd.s32 %v301, %v328
        %v336 = vadd.s32 %v302, %v328
        %v337 = vadd.s32 %v303, %v328
        %v338 = vadd.s32 %v304, %v328
        %v339 = vadd.s32 %v305, %v328
        %v340 = vadd.s32 %v306, %v328
        %v341 = vadd.s32 %v307, %v328
        %v342 = vadd.s32 %v308, %v328
        %v343 = vadd.s32 %v309, %v328
        %v344 = vadd.s32 %v310, %v328
        %v345 = vadd.s32 %v311, %v328
        %v346 = vadd.s32 %v312, %v328
        %v347 = vadd.s32 %v313, %v328
        %v348 = vadd.s32 %v314, %v328
        %v349 = vadd.s32 %v315, %v328
        %v350 = vadd.s32 %v316, %v328
        %v351 = vadd.s32 %v317, %v328
        %v352 = vadd.s32 %v318, %v328
        %v353 = vadd.s32 %v319, %v328
        %v354 = vadd.s32 %v320, %v328
        %v355 = vadd.s32 %v321, %v328
        %v356 = vadd.s32 %v322, %v328
        %v357 = vadd.s32 %v323, %v328
        %v358 = vadd.s32 %v324, %v328
        %v359 = vadd.s32 %v325, %v328
        %v360 = vadd.s32 %v326, %v328
        %v361 = vcvt.s32.f32 %v329
        %v362 = vcvt.s32.f32 %v330
        %v363 = vcvt.s32.f32 %v331
        %v364 = vcvt.s32.f32 %v332
        %v365 = vcvt.s32.f32 %v333
        %v366 = vcvt.s32.f32 %v334
        %v367 = vcvt.s32.f32 %v335
        %v368 = vcvt.s32.f32 %v336
        %v369 = vcvt.s32.f32 %v337
        %v370 = vcvt.s32.f32 %v338
        %v371 = vcvt.s32.f32 %v339
        %v372 = vcvt.s32.f32 %v340
        %v373 = vcvt.s32.f32 %v341
        %v374 = vcvt.s32.f32 %v342
        %v375 = vcvt.s32.f32 %v343
        %v376 = vcvt.s32.f32 %v344
        %v377 = vcvt.s32.f32 %v345
        %v378 = vcvt.s32.f32 %v346
        %v379 = vcvt.s32.f32 %v347
        %v380 = vcvt.s32.f32 %v348
        %v381 = vcvt.s32.f32 %v349
        %v382 = vcvt.s32.f32 %v350
        %v383 = vcvt.s32.f32 %v351
        %v384 = vcvt.s32.f32 %v352
        %v385 = vcvt.s32.f32 %v353
        %v386 = vcvt.s32.f32 %v354
        %v387 = vcvt.s32.f32 %v355
        %v388 = vcvt.s32.f32 %v356
        %v389 = vcvt.s32.f32 %v357
        %v390 = vcvt.s32.f32 %v358
        %v391 = vcvt.s32.f32 %v359
        %v392 = vcvt.s32.f32 %v360
        %v393 = vmul.f32 %v361, 0.0625
        %v394 = vmul.f32 %v362, 0.0625
        %v395 = vmul.f32 %v363, 0.0625
        %v396 = vmul.f32 %v364, 0.0625
        %v397 = vmul.f32 %v365, 0.0625
        %v398 = vmul.f32 %v366, 0.0625
        %v399 = vmul.f32 %v367, 0.0625
        %v400 = vmul.f32 %v368, 0.0625
        %v401 = vmul.f32 %v369, 0.0625
        %v402 = vmul.f32 %v370, 0.0625
        %v403 = vmul.f32 %v371, 0.0625
        %v404 = vmul.f32 %v372, 0.0625
        %v405 = vmul.f32 %v373, 0.0625
        %v406 = vmul.f32 %v374, 0.0625
        %v407 = vmul.f32 %v375, 0.0625
        %v408 = vmul.f32 %v376, 0.0625
        %v409 = vmul.f32 %v377, 0.0625
        %v410 = vmul.f32 %v378, 0.0625
        %v411 = vmul.f32 %v379, 0.0625
        %v412 = vmul.f32 %v380, 0.0625
        %v413 = vmul.f32 %v381, 0.0625
        %v414 = vmul.f32 %v382, 0.0625
        %v415 = vmul.f32 %v383, 0.0625
        %v416 = vmul.f32 %v384, 0.0625
        %v417 = vmul.f32 %v385, 0.0625
        %v418 = vmul.f32 %v386, 0.0625
        %v419 = vmul.f32 %v387, 0.0625
        %v420 = vmul.f32 %v388, 0.0625
        %v421 = vmul.f32 %v389, 0.0625
        %v422 = vmul.f32 %v390, 0.0625
        %v423 = vmul.f32 %v391, 0.0625
        %v424 = vmul.f32 %v392, 0.0625
        %v425 = vfloor.f32 %v393
        %v426 = vfloor.f32 %v394
        %v427 = vfloor.f32 %v395
        %v428 = vfloor.f32 %v396
        %v429 = vfloor.f32 %v397
        %v430 = vfloor.f32 %v398
        %v431 = vfloor.f32 %v399
        %v432 = vfloor.f32 %v400
        %v433 = vfloor.f32 %v401
        %v434 = vfloor.f32 %v402
        %v435 = vfloor.f32 %v403
        %v436 = vfloor.f32 %v404
        %v437 = vfloor.f32 %v405
        %v438 = vfloor.f32 %v406
        %v439 = vfloor.f32 %v407
        %v440 = vfloor.f32 %v408
        %v441 = vfloor.f32 %v409
        %v442 = vfloor.f32 %v410
        %v443 = vfloor.f32 %v411
        %v444 = vfloor.f32 %v412
        %v445 = vfloor.f32 %v413
        %v446 = vfloor.f32 %v414
        %v447 = vfloor.f32 %v415
        %v448 = vfloor.f32 %v416
        %v449 = vfloor.f32 %v417
        %v450 = vfloor.f32 %v418
        %v451 = vfloor.f32 %v419
        %v452 = vfloor.f32 %v420
        %v453 = vfloor.f32 %v421
        %v454 = vfloor.f32 %v422
        %v455 = vfloor.f32 %v423
        %v456 = vfloor.f32 %v424
        %v457 = vmul.f32 %v425, 16.0
        %v458 = vmul.f32 %v426, 16.0
        %v459 = vmul.f32 %v427, 16.0
        %v460 = vmul.f32 %v428, 16.0
        %v461 = vmul.f32 %v429, 16.0
        %v462 = vmul.f32 %v430, 16.0
        %v463 = vmul.f32 %v431, 16.0
        %v464 = vmul.f32 %v432, 16.0
        %v465 = vmul.f32 %v433, 16.0
        %v466 = vmul.f32 %v434, 16.0
        %v467 = vmul.f32 %v435, 16.0
        %v468 = vmul.f32 %v436, 16.0
        %v469 = vmul.f32 %v437, 16.0
        %v470 = vmul.f32 %v438, 16.0
        %v471 = vmul.f32 %v439, 16.0
        %v472 = vmul.f32 %v440, 16.0
        %v473 = vmul.f32 %v441, 16.0
        %v474 = vmul.f32 %v442, 16.0
        %v475 = vmul.f32 %v443, 16.0
        %v476 = vmul.f32 %v444, 16.0
        %v477 = vmul.f32 %v445, 16.0
        %v478 = vmul.f32 %v446, 16.0
        %v479 = vmul.f32 %v447, 16.0
        %v480 = vmul.f32 %v448, 16.0
        %v481 = vmul.f32 %v449, 16.0
        %v482 = vmul.f32 %v450, 16.0
        %v483 = vmul.f32 %v451, 16.0
        %v484 = vmul.f32 %v452, 16.0
        %v485 = vmul.f32 %v453, 16.0
        %v486 = vmul.f32 %v454, 16.0
        %v487 = vmul.f32 %v455, 16.0
        %v488 = vmul.f32 %v456, 16.0
        %vm489 = vcmp.gt.f32.partialorder %v457, %v361
        %vm490 = vcmp.gt.f32.partialorder %v458, %v362
        %vm491 = vcmp.gt.f32.partialorder %v459, %v363
        %vm492 = vcmp.gt.f32.partialorder %v460, %v364
        %vm493 = vcmp.gt.f32.partialorder %v461, %v365
        %vm494 = vcmp.gt.f32.partialorder %v462, %v366
        %vm495 = vcmp.gt.f32.partialorder %v463, %v367
        %vm496 = vcmp.gt.f32.partialorder %v464, %v368
        %vm497 = vcmp.gt.f32.partialorder %v465, %v369
        %vm498 = vcmp.gt.f32.partialorder %v466, %v370
        %vm499 = vcmp.gt.f32.partialorder %v467, %v371
        %vm500 = vcmp.gt.f32.partialorder %v468, %v372
        %vm501 = vcmp.gt.f32.partialorder %v469, %v373
        %vm502 = vcmp.gt.f32.partialorder %v470, %v374
        %vm503 = vcmp.gt.f32.partialorder %v471, %v375
        %vm504 = vcmp.gt.f32.partialorder %v472, %v376
        %vm505 = vcmp.gt.f32.partialorder %v473, %v377
        %vm506 = vcmp.gt.f32.partialorder %v474, %v378
        %vm507 = vcmp.gt.f32.partialorder %v475, %v379
        %vm508 = vcmp.gt.f32.partialorder %v476, %v380
        %vm509 = vcmp.gt.f32.partialorder %v477, %v381
        %vm510 = vcmp.gt.f32.partialorder %v478, %v382
        %vm511 = vcmp.gt.f32.partialorder %v479, %v383
        %vm512 = vcmp.gt.f32.partialorder %v480, %v384
        %vm513 = vcmp.gt.f32.partialorder %v481, %v385
        %vm514 = vcmp.gt.f32.partialorder %v482, %v386
        %vm515 = vcmp.gt.f32.partialorder %v483, %v387
        %vm516 = vcmp.gt.f32.partialorder %v484, %v388
        %vm517 = vcmp.gt.f32.partialorder %v485, %v389
        %vm518 = vcmp.gt.f32.partialorder %v486, %v390
        %vm519 = vcmp.gt.f32.partialorder %v487, %v391
        %vm520 = vcmp.gt.f32.partialorder %v488, %v392
        %v521 = vsub.f32 %v425, 1.0
        %v522 = vsub.f32 %v426, 1.0
        %v523 = vsub.f32 %v427, 1.0
        %v524 = vsub.f32 %v428, 1.0
        %v525 = vsub.f32 %v429, 1.0
        %v526 = vsub.f32 %v430, 1.0
        %v527 = vsub.f32 %v431, 1.0
        %v528 = vsub.f32 %v432, 1.0
        %v529 = vsub.f32 %v433, 1.0
        %v530 = vsub.f32 %v434, 1.0
        %v531 = vsub.f32 %v435, 1.0
        %v532 = vsub.f32 %v436, 1.0
        %v533 = vsub.f32 %v437, 1.0
        %v534 = vsub.f32 %v438, 1.0
        %v535 = vsub.f32 %v439, 1.0
        %v536 = vsub.f32 %v440, 1.0
        %v537 = vsub.f32 %v441, 1.0
        %v538 = vsub.f32 %v442, 1.0
        %v539 = vsub.f32 %v443, 1.0
        %v540 = vsub.f32 %v444, 1.0
        %v541 = vsub.f32 %v445, 1.0
        %v542 = vsub.f32 %v446, 1.0
        %v543 = vsub.f32 %v447, 1.0
        %v544 = vsub.f32 %v448, 1.0
        %v545 = vsub.f32 %v449, 1.0
        %v546 = vsub.f32 %v450, 1.0
        %v547 = vsub.f32 %v451, 1.0
        %v548 = vsub.f32 %v452, 1.0
        %v549 = vsub.f32 %v453, 1.0
        %v550 = vsub.f32 %v454, 1.0
        %v551 = vsub.f32 %v455, 1.0
        %v552 = vsub.f32 %v456, 1.0
        %v553 = vsel %vm489, %v521, %v425
        %v554 = vsel %vm490, %v522, %v426
        %v555 = vsel %vm491, %v523, %v427
        %v556 = vsel %vm492, %v524, %v428
        %v557 = vsel %vm493, %v525, %v429
        %v558 = vsel %vm494, %v526, %v430
        %v559 = vsel %vm495, %v527, %v431
        %v560 = vsel %vm496, %v528, %v432
        %v561 = vsel %vm497, %v529, %v433
        %v562 = vsel %vm498, %v530, %v434
        %v563 = vsel %vm499, %v531, %v435
        %v564 = vsel %vm500, %v532, %v436
        %v565 = vsel %vm501, %v533, %v437
        %v566 = vsel %vm502, %v534, %v438
        %v567 = vsel %vm503, %v535, %v439
        %v568 = vsel %vm504, %v536, %v440
        %v569 = vsel %vm505, %v537, %v441
        %v570 = vsel %vm506, %v538, %v442
        %v571 = vsel %vm507, %v539, %v443
        %v572 = vsel %vm508, %v540, %v444
        %v573 = vsel %vm509, %v541, %v445
        %v574 = vsel %vm510, %v542, %v446
        %v575 = vsel %vm511, %v543, %v447
        %v576 = vsel %vm512, %v544, %v448
        %v577 = vsel %vm513, %v545, %v449
        %v578 = vsel %vm514, %v546, %v450
        %v579 = vsel %vm515, %v547, %v451
        %v580 = vsel %vm516, %v548, %v452
        %v581 = vsel %vm517, %v549, %v453
        %v582 = vsel %vm518, %v550, %v454
        %v583 = vsel %vm519, %v551, %v455
        %v584 = vsel %vm520, %v552, %v456
        %v585 = vadd.f32 %v553, 1.0
        %v586 = vadd.f32 %v554, 1.0
        %v587 = vadd.f32 %v555, 1.0
        %v588 = vadd.f32 %v556, 1.0
        %v589 = vadd.f32 %v557, 1.0
        %v590 = vadd.f32 %v558, 1.0
        %v591 = vadd.f32 %v559, 1.0
        %v592 = vadd.f32 %v560, 1.0
        %v593 = vadd.f32 %v561, 1.0
        %v594 = vadd.f32 %v562, 1.0
        %v595 = vadd.f32 %v563, 1.0
        %v596 = vadd.f32 %v564, 1.0
        %v597 = vadd.f32 %v565, 1.0
        %v598 = vadd.f32 %v566, 1.0
        %v599 = vadd.f32 %v567, 1.0
        %v600 = vadd.f32 %v568, 1.0
        %v601 = vadd.f32 %v569, 1.0
        %v602 = vadd.f32 %v570, 1.0
        %v603 = vadd.f32 %v571, 1.0
        %v604 = vadd.f32 %v572, 1.0
        %v605 = vadd.f32 %v573, 1.0
        %v606 = vadd.f32 %v574, 1.0
        %v607 = vadd.f32 %v575, 1.0
        %v608 = vadd.f32 %v576, 1.0
        %v609 = vadd.f32 %v577, 1.0
        %v610 = vadd.f32 %v578, 1.0
        %v611 = vadd.f32 %v579, 1.0
        %v612 = vadd.f32 %v580, 1.0
        %v613 = vadd.f32 %v581, 1.0
        %v614 = vadd.f32 %v582, 1.0
        %v615 = vadd.f32 %v583, 1.0
        %v616 = vadd.f32 %v584, 1.0
        %v617 = vmul.f32 %v585, 16.0
        %v618 = vmul.f32 %v586, 16.0
        %v619 = vmul.f32 %v587, 16.0
        %v620 = vmul.f32 %v588, 16.0
        %v621 = vmul.f32 %v589, 16.0
        %v622 = vmul.f32 %v590, 16.0
        %v623 = vmul.f32 %v591, 16.0
        %v624 = vmul.f32 %v592, 16.0
        %v625 = vmul.f32 %v593, 16.0
        %v626 = vmul.f32 %v594, 16.0
        %v627 = vmul.f32 %v595, 16.0
        %v628 = vmul.f32 %v596, 16.0
        %v629 = vmul.f32 %v597, 16.0
        %v630 = vmul.f32 %v598, 16.0
        %v631 = vmul.f32 %v599, 16.0
        %v632 = vmul.f32 %v600, 16.0
        %v633 = vmul.f32 %v601, 16.0
        %v634 = vmul.f32 %v602, 16.0
        %v635 = vmul.f32 %v603, 16.0
        %v636 = vmul.f32 %v604, 16.0
        %v637 = vmul.f32 %v605, 16.0
        %v638 = vmul.f32 %v606, 16.0
        %v639 = vmul.f32 %v607, 16.0
        %v640 = vmul.f32 %v608, 16.0
        %v641 = vmul.f32 %v609, 16.0
        %v642 = vmul.f32 %v610, 16.0
        %v643 = vmul.f32 %v611, 16.0
        %v644 = vmul.f32 %v612, 16.0
        %v645 = vmul.f32 %v613, 16.0
        %v646 = vmul.f32 %v614, 16.0
        %v647 = vmul.f32 %v615, 16.0
        %v648 = vmul.f32 %v616, 16.0
        %vm649 = vcmp.le.f32.partialorder %v617, %v361
        %vm650 = vcmp.le.f32.partialorder %v618, %v362
        %vm651 = vcmp.le.f32.partialorder %v619, %v363
        %vm652 = vcmp.le.f32.partialorder %v620, %v364
        %vm653 = vcmp.le.f32.partialorder %v621, %v365
        %vm654 = vcmp.le.f32.partialorder %v622, %v366
        %vm655 = vcmp.le.f32.partialorder %v623, %v367
        %vm656 = vcmp.le.f32.partialorder %v624, %v368
        %vm657 = vcmp.le.f32.partialorder %v625, %v369
        %vm658 = vcmp.le.f32.partialorder %v626, %v370
        %vm659 = vcmp.le.f32.partialorder %v627, %v371
        %vm660 = vcmp.le.f32.partialorder %v628, %v372
        %vm661 = vcmp.le.f32.partialorder %v629, %v373
        %vm662 = vcmp.le.f32.partialorder %v630, %v374
        %vm663 = vcmp.le.f32.partialorder %v631, %v375
        %vm664 = vcmp.le.f32.partialorder %v632, %v376
        %vm665 = vcmp.le.f32.partialorder %v633, %v377
        %vm666 = vcmp.le.f32.partialorder %v634, %v378
        %vm667 = vcmp.le.f32.partialorder %v635, %v379
        %vm668 = vcmp.le.f32.partialorder %v636, %v380
        %vm669 = vcmp.le.f32.partialorder %v637, %v381
        %vm670 = vcmp.le.f32.partialorder %v638, %v382
        %vm671 = vcmp.le.f32.partialorder %v639, %v383
        %vm672 = vcmp.le.f32.partialorder %v640, %v384
        %vm673 = vcmp.le.f32.partialorder %v641, %v385
        %vm674 = vcmp.le.f32.partialorder %v642, %v386
        %vm675 = vcmp.le.f32.partialorder %v643, %v387
        %vm676 = vcmp.le.f32.partialorder %v644, %v388
        %vm677 = vcmp.le.f32.partialorder %v645, %v389
        %vm678 = vcmp.le.f32.partialorder %v646, %v390
        %vm679 = vcmp.le.f32.partialorder %v647, %v391
        %vm680 = vcmp.le.f32.partialorder %v648, %v392
        %v681 = vsel %vm649, %v585, %v553
        %v682 = vsel %vm650, %v586, %v554
        %v683 = vsel %vm651, %v587, %v555
        %v684 = vsel %vm652, %v588, %v556
        %v685 = vsel %vm653, %v589, %v557
        %v686 = vsel %vm654, %v590, %v558
        %v687 = vsel %vm655, %v591, %v559
        %v688 = vsel %vm656, %v592, %v560
        %v689 = vsel %vm657, %v593, %v561
        %v690 = vsel %vm658, %v594, %v562
        %v691 = vsel %vm659, %v595, %v563
        %v692 = vsel %vm660, %v596, %v564
        %v693 = vsel %vm661, %v597, %v565
        %v694 = vsel %vm662, %v598, %v566
        %v695 = vsel %vm663, %v599, %v567
        %v696 = vsel %vm664, %v600, %v568
        %v697 = vsel %vm665, %v601, %v569
        %v698 = vsel %vm666, %v602, %v570
        %v699 = vsel %vm667, %v603, %v571
        %v700 = vsel %vm668, %v604, %v572
        %v701 = vsel %vm669, %v605, %v573
        %v702 = vsel %vm670, %v606, %v574
        %v703 = vsel %vm671, %v607, %v575
        %v704 = vsel %vm672, %v608, %v576
        %v705 = vsel %vm673, %v609, %v577
        %v706 = vsel %vm674, %v610, %v578
        %v707 = vsel %vm675, %v611, %v579
        %v708 = vsel %vm676, %v612, %v580
        %v709 = vsel %vm677, %v613, %v581
        %v710 = vsel %vm678, %v614, %v582
        %v711 = vsel %vm679, %v615, %v583
        %v712 = vsel %vm680, %v616, %v584
        %v713 = vmul.f32 %v681, 16.0
        %v714 = vmul.f32 %v682, 16.0
        %v715 = vmul.f32 %v683, 16.0
        %v716 = vmul.f32 %v684, 16.0
        %v717 = vmul.f32 %v685, 16.0
        %v718 = vmul.f32 %v686, 16.0
        %v719 = vmul.f32 %v687, 16.0
        %v720 = vmul.f32 %v688, 16.0
        %v721 = vmul.f32 %v689, 16.0
        %v722 = vmul.f32 %v690, 16.0
        %v723 = vmul.f32 %v691, 16.0
        %v724 = vmul.f32 %v692, 16.0
        %v725 = vmul.f32 %v693, 16.0
        %v726 = vmul.f32 %v694, 16.0
        %v727 = vmul.f32 %v695, 16.0
        %v728 = vmul.f32 %v696, 16.0
        %v729 = vmul.f32 %v697, 16.0
        %v730 = vmul.f32 %v698, 16.0
        %v731 = vmul.f32 %v699, 16.0
        %v732 = vmul.f32 %v700, 16.0
        %v733 = vmul.f32 %v701, 16.0
        %v734 = vmul.f32 %v702, 16.0
        %v735 = vmul.f32 %v703, 16.0
        %v736 = vmul.f32 %v704, 16.0
        %v737 = vmul.f32 %v705, 16.0
        %v738 = vmul.f32 %v706, 16.0
        %v739 = vmul.f32 %v707, 16.0
        %v740 = vmul.f32 %v708, 16.0
        %v741 = vmul.f32 %v709, 16.0
        %v742 = vmul.f32 %v710, 16.0
        %v743 = vmul.f32 %v711, 16.0
        %v744 = vmul.f32 %v712, 16.0
        %v745 = vsub.f32 %v361, %v713
        %v746 = vsub.f32 %v362, %v714
        %v747 = vsub.f32 %v363, %v715
        %v748 = vsub.f32 %v364, %v716
        %v749 = vsub.f32 %v365, %v717
        %v750 = vsub.f32 %v366, %v718
        %v751 = vsub.f32 %v367, %v719
        %v752 = vsub.f32 %v368, %v720
        %v753 = vsub.f32 %v369, %v721
        %v754 = vsub.f32 %v370, %v722
        %v755 = vsub.f32 %v371, %v723
        %v756 = vsub.f32 %v372, %v724
        %v757 = vsub.f32 %v373, %v725
        %v758 = vsub.f32 %v374, %v726
        %v759 = vsub.f32 %v375, %v727
        %v760 = vsub.f32 %v376, %v728
        %v761 = vsub.f32 %v377, %v729
        %v762 = vsub.f32 %v378, %v730
        %v763 = vsub.f32 %v379, %v731
        %v764 = vsub.f32 %v380, %v732
        %v765 = vsub.f32 %v381, %v733
        %v766 = vsub.f32 %v382, %v734
        %v767 = vsub.f32 %v383, %v735
        %v768 = vsub.f32 %v384, %v736
        %v769 = vsub.f32 %v385, %v737
        %v770 = vsub.f32 %v386, %v738
        %v771 = vsub.f32 %v387, %v739
        %v772 = vsub.f32 %v388, %v740
        %v773 = vsub.f32 %v389, %v741
        %v774 = vsub.f32 %v390, %v742
        %v775 = vsub.f32 %v391, %v743
        %v776 = vsub.f32 %v392, %v744
        %vm777 = vcmp.lt.f32.partialorder %v361, 256.0
        %vm778 = vcmp.lt.f32.partialorder %v362, 256.0
        %vm779 = vcmp.lt.f32.partialorder %v363, 256.0
        %vm780 = vcmp.lt.f32.partialorder %v364, 256.0
        %vm781 = vcmp.lt.f32.partialorder %v365, 256.0
        %vm782 = vcmp.lt.f32.partialorder %v366, 256.0
        %vm783 = vcmp.lt.f32.partialorder %v367, 256.0
        %vm784 = vcmp.lt.f32.partialorder %v368, 256.0
        %vm785 = vcmp.lt.f32.partialorder %v369, 256.0
        %vm786 = vcmp.lt.f32.partialorder %v370, 256.0
        %vm787 = vcmp.lt.f32.partialorder %v371, 256.0
        %vm788 = vcmp.lt.f32.partialorder %v372, 256.0
        %vm789 = vcmp.lt.f32.partialorder %v373, 256.0
        %vm790 = vcmp.lt.f32.partialorder %v374, 256.0
        %vm791 = vcmp.lt.f32.partialorder %v375, 256.0
        %vm792 = vcmp.lt.f32.partialorder %v376, 256.0
        %vm793 = vcmp.lt.f32.partialorder %v377, 256.0
        %vm794 = vcmp.lt.f32.partialorder %v378, 256.0
        %vm795 = vcmp.lt.f32.partialorder %v379, 256.0
        %vm796 = vcmp.lt.f32.partialorder %v380, 256.0
        %vm797 = vcmp.lt.f32.partialorder %v381, 256.0
        %vm798 = vcmp.lt.f32.partialorder %v382, 256.0
        %vm799 = vcmp.lt.f32.partialorder %v383, 256.0
        %vm800 = vcmp.lt.f32.partialorder %v384, 256.0
        %vm801 = vcmp.lt.f32.partialorder %v385, 256.0
        %vm802 = vcmp.lt.f32.partialorder %v386, 256.0
        %vm803 = vcmp.lt.f32.partialorder %v387, 256.0
        %vm804 = vcmp.lt.f32.partialorder %v388, 256.0
        %vm805 = vcmp.lt.f32.partialorder %v389, 256.0
        %vm806 = vcmp.lt.f32.partialorder %v390, 256.0
        %vm807 = vcmp.lt.f32.partialorder %v391, 256.0
        %vm808 = vcmp.lt.f32.partialorder %v392, 256.0
        %v809 = vld [vmem:[%s282] sm:$0xff]
        %v810 = vld [vmem:[%s282 + $0x8] sm:$0xff]
        %v811 = vld [vmem:[%s282 + $0x10] sm:$0xff]
        %v812 = vld [vmem:[%s282 + $0x18] sm:$0xff]
        %v813 = vld [vmem:[%s282 + $0x20] sm:$0xff]
        %v814 = vld [vmem:[%s282 + $0x28] sm:$0xff]
        %v815 = vld [vmem:[%s282 + $0x30] sm:$0xff]
        %v816 = vld [vmem:[%s282 + $0x38] sm:$0xff]
        %v817 = vld [vmem:[%s282 + $0x40] sm:$0xff]
        %v818 = vld [vmem:[%s282 + $0x48] sm:$0xff]
        %v819 = vld [vmem:[%s282 + $0x50] sm:$0xff]
        %v820 = vld [vmem:[%s282 + $0x58] sm:$0xff]
        %v821 = vld [vmem:[%s282 + $0x60] sm:$0xff]
        %v822 = vld [vmem:[%s282 + $0x68] sm:$0xff]
        %v823 = vld [vmem:[%s282 + $0x70] sm:$0xff]
        %v824 = vld [vmem:[%s282 + $0x78] sm:$0xff]
        %v825 = vld [vmem:[%s282 + $0x80] sm:$0xff]
        %v826 = vld [vmem:[%s282 + $0x88] sm:$0xff]
        %v827 = vld [vmem:[%s282 + $0x90] sm:$0xff]
        %v828 = vld [vmem:[%s282 + $0x98] sm:$0xff]
        %v829 = vld [vmem:[%s282 + $0xa0] sm:$0xff]
        %v830 = vld [vmem:[%s282 + $0xa8] sm:$0xff]
        %v831 = vld [vmem:[%s282 + $0xb0] sm:$0xff]
        %v832 = vld [vmem:[%s282 + $0xb8] sm:$0xff]
        %v833 = vld [vmem:[%s282 + $0xc0] sm:$0xff]
        %v834 = vld [vmem:[%s282 + $0xc8] sm:$0xff]
        %v835 = vld [vmem:[%s282 + $0xd0] sm:$0xff]
        %v836 = vld [vmem:[%s282 + $0xd8] sm:$0xff]
        %v837 = vld [vmem:[%s282 + $0xe0] sm:$0xff]
        %v838 = vld [vmem:[%s282 + $0xe8] sm:$0xff]
        %v839 = vld [vmem:[%s282 + $0xf0] sm:$0xff]
        %v840 = vld [vmem:[%s282 + $0xf8] sm:$0xff]
        %v841 = vld [vmem:[%s292] sm:$0xff]
        %v842 = vld [vmem:[%s292 + $0x8] sm:$0xff]
        %v843 = vld [vmem:[%s292 + $0x10] sm:$0xff]
        %v844 = vld [vmem:[%s292 + $0x18] sm:$0xff]
        %v845 = vld [vmem:[%s292 + $0x20] sm:$0xff]
        %v846 = vld [vmem:[%s292 + $0x28] sm:$0xff]
        %v847 = vld [vmem:[%s292 + $0x30] sm:$0xff]
        %v848 = vld [vmem:[%s292 + $0x38] sm:$0xff]
        %v849 = vld [vmem:[%s292 + $0x40] sm:$0xff]
        %v850 = vld [vmem:[%s292 + $0x48] sm:$0xff]
        %v851 = vld [vmem:[%s292 + $0x50] sm:$0xff]
        %v852 = vld [vmem:[%s292 + $0x58] sm:$0xff]
        %v853 = vld [vmem:[%s292 + $0x60] sm:$0xff]
        %v854 = vld [vmem:[%s292 + $0x68] sm:$0xff]
        %v855 = vld [vmem:[%s292 + $0x70] sm:$0xff]
        %v856 = vld [vmem:[%s292 + $0x78] sm:$0xff]
        %v857 = vld [vmem:[%s292 + $0x80] sm:$0xff]
        %v858 = vld [vmem:[%s292 + $0x88] sm:$0xff]
        %v859 = vld [vmem:[%s292 + $0x90] sm:$0xff]
        %v860 = vld [vmem:[%s292 + $0x98] sm:$0xff]
        %v861 = vld [vmem:[%s292 + $0xa0] sm:$0xff]
        %v862 = vld [vmem:[%s292 + $0xa8] sm:$0xff]
        %v863 = vld [vmem:[%s292 + $0xb0] sm:$0xff]
        %v864 = vld [vmem:[%s292 + $0xb8] sm:$0xff]
        %v865 = vld [vmem:[%s292 + $0xc0] sm:$0xff]
        %v866 = vld [vmem:[%s292 + $0xc8] sm:$0xff]
        %v867 = vld [vmem:[%s292 + $0xd0] sm:$0xff]
        %v868 = vld [vmem:[%s292 + $0xd8] sm:$0xff]
        %v869 = vld [vmem:[%s292 + $0xe0] sm:$0xff]
        %v870 = vld [vmem:[%s292 + $0xe8] sm:$0xff]
        %v871 = vld [vmem:[%s292 + $0xf0] sm:$0xff]
        %v872 = vld [vmem:[%s292 + $0xf8] sm:$0xff]
        %vm873 = vcmp.gt.f32.partialorder %v809, 0.5
        %vm874 = vcmp.gt.f32.partialorder %v810, 0.5
        %vm875 = vcmp.gt.f32.partialorder %v811, 0.5
        %vm876 = vcmp.gt.f32.partialorder %v812, 0.5
        %vm877 = vcmp.gt.f32.partialorder %v813, 0.5
        %vm878 = vcmp.gt.f32.partialorder %v814, 0.5
        %vm879 = vcmp.gt.f32.partialorder %v815, 0.5
        %vm880 = vcmp.gt.f32.partialorder %v816, 0.5
        %vm881 = vcmp.gt.f32.partialorder %v817, 0.5
        %vm882 = vcmp.gt.f32.partialorder %v818, 0.5
        %vm883 = vcmp.gt.f32.partialorder %v819, 0.5
        %vm884 = vcmp.gt.f32.partialorder %v820, 0.5
        %vm885 = vcmp.gt.f32.partialorder %v821, 0.5
        %vm886 = vcmp.gt.f32.partialorder %v822, 0.5
        %vm887 = vcmp.gt.f32.partialorder %v823, 0.5
        %vm888 = vcmp.gt.f32.partialorder %v824, 0.5
        %vm889 = vcmp.gt.f32.partialorder %v825, 0.5
        %vm890 = vcmp.gt.f32.partialorder %v826, 0.5
        %vm891 = vcmp.gt.f32.partialorder %v827, 0.5
        %vm892 = vcmp.gt.f32.partialorder %v828, 0.5
        %vm893 = vcmp.gt.f32.partialorder %v829, 0.5
        %vm894 = vcmp.gt.f32.partialorder %v830, 0.5
        %vm895 = vcmp.gt.f32.partialorder %v831, 0.5
        %vm896 = vcmp.gt.f32.partialorder %v832, 0.5
        %vm897 = vcmp.gt.f32.partialorder %v833, 0.5
        %vm898 = vcmp.gt.f32.partialorder %v834, 0.5
        %vm899 = vcmp.gt.f32.partialorder %v835, 0.5
        %vm900 = vcmp.gt.f32.partialorder %v836, 0.5
        %vm901 = vcmp.gt.f32.partialorder %v837, 0.5
        %vm902 = vcmp.gt.f32.partialorder %v838, 0.5
        %vm903 = vcmp.gt.f32.partialorder %v839, 0.5
        %vm904 = vcmp.gt.f32.partialorder %v840, 0.5
        %vm905 = vcmp.gt.f32.partialorder %v841, 0.5
        %vm906 = vcmp.gt.f32.partialorder %v842, 0.5
        %vm907 = vcmp.gt.f32.partialorder %v843, 0.5
        %vm908 = vcmp.gt.f32.partialorder %v844, 0.5
        %vm909 = vcmp.gt.f32.partialorder %v845, 0.5
        %vm910 = vcmp.gt.f32.partialorder %v846, 0.5
        %vm911 = vcmp.gt.f32.partialorder %v847, 0.5
        %vm912 = vcmp.gt.f32.partialorder %v848, 0.5
        %vm913 = vcmp.gt.f32.partialorder %v849, 0.5
        %vm914 = vcmp.gt.f32.partialorder %v850, 0.5
        %vm915 = vcmp.gt.f32.partialorder %v851, 0.5
        %vm916 = vcmp.gt.f32.partialorder %v852, 0.5
        %vm917 = vcmp.gt.f32.partialorder %v853, 0.5
        %vm918 = vcmp.gt.f32.partialorder %v854, 0.5
        %vm919 = vcmp.gt.f32.partialorder %v855, 0.5
        %vm920 = vcmp.gt.f32.partialorder %v856, 0.5
        %vm921 = vcmp.gt.f32.partialorder %v857, 0.5
        %vm922 = vcmp.gt.f32.partialorder %v858, 0.5
        %vm923 = vcmp.gt.f32.partialorder %v859, 0.5
        %vm924 = vcmp.gt.f32.partialorder %v860, 0.5
        %vm925 = vcmp.gt.f32.partialorder %v861, 0.5
        %vm926 = vcmp.gt.f32.partialorder %v862, 0.5
        %vm927 = vcmp.gt.f32.partialorder %v863, 0.5
        %vm928 = vcmp.gt.f32.partialorder %v864, 0.5
        %vm929 = vcmp.gt.f32.partialorder %v865, 0.5
        %vm930 = vcmp.gt.f32.partialorder %v866, 0.5
        %vm931 = vcmp.gt.f32.partialorder %v867, 0.5
        %vm932 = vcmp.gt.f32.partialorder %v868, 0.5
        %vm933 = vcmp.gt.f32.partialorder %v869, 0.5
        %vm934 = vcmp.gt.f32.partialorder %v870, 0.5
        %vm935 = vcmp.gt.f32.partialorder %v871, 0.5
        %vm936 = vcmp.gt.f32.partialorder %v872, 0.5
        %s937 = smul.u32 %s28, 128
        %s938 = sld [smem:[#allocation4 + %s937]]
        %p939 = scmp.gt.s32.totalorder %s938, 0
        %s940 = scalar_select %p939, 1.0, 0.0
        %s941 = sadd.s32 %s937, 1
        %s942 = sld [smem:[#allocation4 + %s941]]
        %p943 = scmp.gt.s32.totalorder %s942, 0
        %s944 = scalar_select %p943, 1.0, 0.0
        %p945 = scmp.eq.s32.totalorder %s28, 0
        // Predicated region
        $region37: #{hausdorff_dt_loss.1} parent=35 // pred_check
          %p946 = pneg %p945
        $region38: #{hausdorff_dt_loss.1} parent=35 // pred_check_branch
          %948 = sbr.rel (%p946) target = $region40
        $region39: #{hausdorff_dt_loss.1} parent=35 // pred_region
          %v949 = vlaneseq
          %v950 = vand.u32 %v949, 127
          %v951 = vadd.s32 %v950, 128
          %v952 = vcvt.s32.f32 %v950
          %v953 = vcvt.s32.f32 %v951
          %v954 = vmul.f32 %v952, 0.0625
          %v955 = vmul.f32 %v953, 0.0625
          %v956 = vfloor.f32 %v954
          %v957 = vfloor.f32 %v955
          %v958 = vmul.f32 %v956, 16.0
          %v959 = vmul.f32 %v957, 16.0
          %vm960 = vcmp.gt.f32.partialorder %v958, %v952
          %vm961 = vcmp.gt.f32.partialorder %v959, %v953
          %v962 = vsub.f32 %v956, 1.0
          %v963 = vsub.f32 %v957, 1.0
          %v964 = vsel %vm960, %v962, %v956
          %v965 = vsel %vm961, %v963, %v957
          %v966 = vadd.f32 %v964, 1.0
          %v967 = vadd.f32 %v965, 1.0
          %v968 = vmul.f32 %v966, 16.0
          %v969 = vmul.f32 %v967, 16.0
          %vm970 = vcmp.le.f32.partialorder %v968, %v952
          %vm971 = vcmp.le.f32.partialorder %v969, %v953
          %v972 = vsel %vm970, %v966, %v964
          %v973 = vsel %vm971, %v967, %v965
          %v974 = vmul.f32 %v972, 16.0
          %v975 = vmul.f32 %v973, 16.0
          %v976 = vsub.f32 %v952, %v974
          %v977 = vsub.f32 %v953, %v975
          %v978 = vsub.f32 %v681, %v972
          %v979 = vsub.f32 %v681, %v973
          %v980 = vsub.f32 %v682, %v972
          %v981 = vsub.f32 %v682, %v973
          %v982 = vsub.f32 %v683, %v972
          %v983 = vsub.f32 %v683, %v973
          %v984 = vsub.f32 %v684, %v972
          %v985 = vsub.f32 %v684, %v973
          %v986 = vsub.f32 %v685, %v972
          %v987 = vsub.f32 %v685, %v973
          %v988 = vsub.f32 %v686, %v972
          %v989 = vsub.f32 %v686, %v973
          %v990 = vsub.f32 %v687, %v972
          %v991 = vsub.f32 %v687, %v973
          %v992 = vsub.f32 %v688, %v972
          %v993 = vsub.f32 %v688, %v973
          %v994 = vsub.f32 %v689, %v972
          %v995 = vsub.f32 %v689, %v973
          %v996 = vsub.f32 %v690, %v972
          %v997 = vsub.f32 %v690, %v973
          %v998 = vsub.f32 %v691, %v972
          %v999 = vsub.f32 %v691, %v973
          %v1000 = vsub.f32 %v692, %v972
          %v1001 = vsub.f32 %v692, %v973
          %v1002 = vsub.f32 %v693, %v972
          %v1003 = vsub.f32 %v693, %v973
          %v1004 = vsub.f32 %v694, %v972
          %v1005 = vsub.f32 %v694, %v973
          %v1006 = vsub.f32 %v695, %v972
          %v1007 = vsub.f32 %v695, %v973
          %v1008 = vsub.f32 %v696, %v972
          %v1009 = vsub.f32 %v696, %v973
          %v1010 = vsub.f32 %v697, %v972
          %v1011 = vsub.f32 %v697, %v973
          %v1012 = vsub.f32 %v698, %v972
          %v1013 = vsub.f32 %v698, %v973
          %v1014 = vsub.f32 %v699, %v972
          %v1015 = vsub.f32 %v699, %v973
          %v1016 = vsub.f32 %v700, %v972
          %v1017 = vsub.f32 %v700, %v973
          %v1018 = vsub.f32 %v701, %v972
          %v1019 = vsub.f32 %v701, %v973
          %v1020 = vsub.f32 %v702, %v972
          %v1021 = vsub.f32 %v702, %v973
          %v1022 = vsub.f32 %v703, %v972
          %v1023 = vsub.f32 %v703, %v973
          %v1024 = vsub.f32 %v704, %v972
          %v1025 = vsub.f32 %v704, %v973
          %v1026 = vsub.f32 %v705, %v972
          %v1027 = vsub.f32 %v705, %v973
          %v1028 = vsub.f32 %v706, %v972
          %v1029 = vsub.f32 %v706, %v973
          %v1030 = vsub.f32 %v707, %v972
          %v1031 = vsub.f32 %v707, %v973
          %v1032 = vsub.f32 %v708, %v972
          %v1033 = vsub.f32 %v708, %v973
          %v1034 = vsub.f32 %v709, %v972
          %v1035 = vsub.f32 %v709, %v973
          %v1036 = vsub.f32 %v710, %v972
          %v1037 = vsub.f32 %v710, %v973
          %v1038 = vsub.f32 %v711, %v972
          %v1039 = vsub.f32 %v711, %v973
          %v1040 = vsub.f32 %v712, %v972
          %v1041 = vsub.f32 %v712, %v973
          %v1042 = vsub.f32 %v745, %v976
          %v1043 = vsub.f32 %v745, %v977
          %v1044 = vsub.f32 %v746, %v976
          %v1045 = vsub.f32 %v746, %v977
          %v1046 = vsub.f32 %v747, %v976
          %v1047 = vsub.f32 %v747, %v977
          %v1048 = vsub.f32 %v748, %v976
          %v1049 = vsub.f32 %v748, %v977
          %v1050 = vsub.f32 %v749, %v976
          %v1051 = vsub.f32 %v749, %v977
          %v1052 = vsub.f32 %v750, %v976
          %v1053 = vsub.f32 %v750, %v977
          %v1054 = vsub.f32 %v751, %v976
          %v1055 = vsub.f32 %v751, %v977
          %v1056 = vsub.f32 %v752, %v976
          %v1057 = vsub.f32 %v752, %v977
          %v1058 = vsub.f32 %v753, %v976
          %v1059 = vsub.f32 %v753, %v977
          %v1060 = vsub.f32 %v754, %v976
          %v1061 = vsub.f32 %v754, %v977
          %v1062 = vsub.f32 %v755, %v976
          %v1063 = vsub.f32 %v755, %v977
          %v1064 = vsub.f32 %v756, %v976
          %v1065 = vsub.f32 %v756, %v977
          %v1066 = vsub.f32 %v757, %v976
          %v1067 = vsub.f32 %v757, %v977
          %v1068 = vsub.f32 %v758, %v976
          %v1069 = vsub.f32 %v758, %v977
          %v1070 = vsub.f32 %v759, %v976
          %v1071 = vsub.f32 %v759, %v977
          %v1072 = vsub.f32 %v760, %v976
          %v1073 = vsub.f32 %v760, %v977
          %v1074 = vsub.f32 %v761, %v976
          %v1075 = vsub.f32 %v761, %v977
          %v1076 = vsub.f32 %v762, %v976
          %v1077 = vsub.f32 %v762, %v977
          %v1078 = vsub.f32 %v763, %v976
          %v1079 = vsub.f32 %v763, %v977
          %v1080 = vsub.f32 %v764, %v976
          %v1081 = vsub.f32 %v764, %v977
          %v1082 = vsub.f32 %v765, %v976
          %v1083 = vsub.f32 %v765, %v977
          %v1084 = vsub.f32 %v766, %v976
          %v1085 = vsub.f32 %v766, %v977
          %v1086 = vsub.f32 %v767, %v976
          %v1087 = vsub.f32 %v767, %v977
          %v1088 = vsub.f32 %v768, %v976
          %v1089 = vsub.f32 %v768, %v977
          %v1090 = vsub.f32 %v769, %v976
          %v1091 = vsub.f32 %v769, %v977
          %v1092 = vsub.f32 %v770, %v976
          %v1093 = vsub.f32 %v770, %v977
          %v1094 = vsub.f32 %v771, %v976
          %v1095 = vsub.f32 %v771, %v977
          %v1096 = vsub.f32 %v772, %v976
          %v1097 = vsub.f32 %v772, %v977
          %v1098 = vsub.f32 %v773, %v976
          %v1099 = vsub.f32 %v773, %v977
          %v1100 = vsub.f32 %v774, %v976
          %v1101 = vsub.f32 %v774, %v977
          %v1102 = vsub.f32 %v775, %v976
          %v1103 = vsub.f32 %v775, %v977
          %v1104 = vsub.f32 %v776, %v976
          %v1105 = vsub.f32 %v776, %v977
          %v1106 = vmul.f32 %v978, %v978
          %v1107 = vmul.f32 %v979, %v979
          %v1108 = vmul.f32 %v980, %v980
          %v1109 = vmul.f32 %v981, %v981
          %v1110 = vmul.f32 %v982, %v982
          %v1111 = vmul.f32 %v983, %v983
          %v1112 = vmul.f32 %v984, %v984
          %v1113 = vmul.f32 %v985, %v985
          %v1114 = vmul.f32 %v986, %v986
          %v1115 = vmul.f32 %v987, %v987
          %v1116 = vmul.f32 %v988, %v988
          %v1117 = vmul.f32 %v989, %v989
          %v1118 = vmul.f32 %v990, %v990
          %v1119 = vmul.f32 %v991, %v991
          %v1120 = vmul.f32 %v992, %v992
          %v1121 = vmul.f32 %v993, %v993
          %v1122 = vmul.f32 %v994, %v994
          %v1123 = vmul.f32 %v995, %v995
          %v1124 = vmul.f32 %v996, %v996
          %v1125 = vmul.f32 %v997, %v997
          %v1126 = vmul.f32 %v998, %v998
          %v1127 = vmul.f32 %v999, %v999
          %v1128 = vmul.f32 %v1000, %v1000
          %v1129 = vmul.f32 %v1001, %v1001
          %v1130 = vmul.f32 %v1002, %v1002
          %v1131 = vmul.f32 %v1003, %v1003
          %v1132 = vmul.f32 %v1004, %v1004
          %v1133 = vmul.f32 %v1005, %v1005
          %v1134 = vmul.f32 %v1006, %v1006
          %v1135 = vmul.f32 %v1007, %v1007
          %v1136 = vmul.f32 %v1008, %v1008
          %v1137 = vmul.f32 %v1009, %v1009
          %v1138 = vmul.f32 %v1010, %v1010
          %v1139 = vmul.f32 %v1011, %v1011
          %v1140 = vmul.f32 %v1012, %v1012
          %v1141 = vmul.f32 %v1013, %v1013
          %v1142 = vmul.f32 %v1014, %v1014
          %v1143 = vmul.f32 %v1015, %v1015
          %v1144 = vmul.f32 %v1016, %v1016
          %v1145 = vmul.f32 %v1017, %v1017
          %v1146 = vmul.f32 %v1018, %v1018
          %v1147 = vmul.f32 %v1019, %v1019
          %v1148 = vmul.f32 %v1020, %v1020
          %v1149 = vmul.f32 %v1021, %v1021
          %v1150 = vmul.f32 %v1022, %v1022
          %v1151 = vmul.f32 %v1023, %v1023
          %v1152 = vmul.f32 %v1024, %v1024
          %v1153 = vmul.f32 %v1025, %v1025
          %v1154 = vmul.f32 %v1026, %v1026
          %v1155 = vmul.f32 %v1027, %v1027
          %v1156 = vmul.f32 %v1028, %v1028
          %v1157 = vmul.f32 %v1029, %v1029
          %v1158 = vmul.f32 %v1030, %v1030
          %v1159 = vmul.f32 %v1031, %v1031
          %v1160 = vmul.f32 %v1032, %v1032
          %v1161 = vmul.f32 %v1033, %v1033
          %v1162 = vmul.f32 %v1034, %v1034
          %v1163 = vmul.f32 %v1035, %v1035
          %v1164 = vmul.f32 %v1036, %v1036
          %v1165 = vmul.f32 %v1037, %v1037
          %v1166 = vmul.f32 %v1038, %v1038
          %v1167 = vmul.f32 %v1039, %v1039
          %v1168 = vmul.f32 %v1040, %v1040
          %v1169 = vmul.f32 %v1041, %v1041
          %v1170 = vmul.f32 %v1042, %v1042
          %v1171 = vmul.f32 %v1043, %v1043
          %v1172 = vmul.f32 %v1044, %v1044
          %v1173 = vmul.f32 %v1045, %v1045
          %v1174 = vmul.f32 %v1046, %v1046
          %v1175 = vmul.f32 %v1047, %v1047
          %v1176 = vmul.f32 %v1048, %v1048
          %v1177 = vmul.f32 %v1049, %v1049
          %v1178 = vmul.f32 %v1050, %v1050
          %v1179 = vmul.f32 %v1051, %v1051
          %v1180 = vmul.f32 %v1052, %v1052
          %v1181 = vmul.f32 %v1053, %v1053
          %v1182 = vmul.f32 %v1054, %v1054
          %v1183 = vmul.f32 %v1055, %v1055
          %v1184 = vmul.f32 %v1056, %v1056
          %v1185 = vmul.f32 %v1057, %v1057
          %v1186 = vmul.f32 %v1058, %v1058
          %v1187 = vmul.f32 %v1059, %v1059
          %v1188 = vmul.f32 %v1060, %v1060
          %v1189 = vmul.f32 %v1061, %v1061
          %v1190 = vmul.f32 %v1062, %v1062
          %v1191 = vmul.f32 %v1063, %v1063
          %v1192 = vmul.f32 %v1064, %v1064
          %v1193 = vmul.f32 %v1065, %v1065
          %v1194 = vmul.f32 %v1066, %v1066
          %v1195 = vmul.f32 %v1067, %v1067
          %v1196 = vmul.f32 %v1068, %v1068
          %v1197 = vmul.f32 %v1069, %v1069
          %v1198 = vmul.f32 %v1070, %v1070
          %v1199 = vmul.f32 %v1071, %v1071
          %v1200 = vmul.f32 %v1072, %v1072
          %v1201 = vmul.f32 %v1073, %v1073
          %v1202 = vmul.f32 %v1074, %v1074
          %v1203 = vmul.f32 %v1075, %v1075
          %v1204 = vmul.f32 %v1076, %v1076
          %v1205 = vmul.f32 %v1077, %v1077
          %v1206 = vmul.f32 %v1078, %v1078
          %v1207 = vmul.f32 %v1079, %v1079
          %v1208 = vmul.f32 %v1080, %v1080
          %v1209 = vmul.f32 %v1081, %v1081
          %v1210 = vmul.f32 %v1082, %v1082
          %v1211 = vmul.f32 %v1083, %v1083
          %v1212 = vmul.f32 %v1084, %v1084
          %v1213 = vmul.f32 %v1085, %v1085
          %v1214 = vmul.f32 %v1086, %v1086
          %v1215 = vmul.f32 %v1087, %v1087
          %v1216 = vmul.f32 %v1088, %v1088
          %v1217 = vmul.f32 %v1089, %v1089
          %v1218 = vmul.f32 %v1090, %v1090
          %v1219 = vmul.f32 %v1091, %v1091
          %v1220 = vmul.f32 %v1092, %v1092
          %v1221 = vmul.f32 %v1093, %v1093
          %v1222 = vmul.f32 %v1094, %v1094
          %v1223 = vmul.f32 %v1095, %v1095
          %v1224 = vmul.f32 %v1096, %v1096
          %v1225 = vmul.f32 %v1097, %v1097
          %v1226 = vmul.f32 %v1098, %v1098
          %v1227 = vmul.f32 %v1099, %v1099
          %v1228 = vmul.f32 %v1100, %v1100
          %v1229 = vmul.f32 %v1101, %v1101
          %v1230 = vmul.f32 %v1102, %v1102
          %v1231 = vmul.f32 %v1103, %v1103
          %v1232 = vmul.f32 %v1104, %v1104
          %v1233 = vmul.f32 %v1105, %v1105
          %v1234 = vadd.f32 %v1106, %v1170
          %v1235 = vadd.f32 %v1107, %v1171
          %v1236 = vadd.f32 %v1108, %v1172
          %v1237 = vadd.f32 %v1109, %v1173
          %v1238 = vadd.f32 %v1110, %v1174
          %v1239 = vadd.f32 %v1111, %v1175
          %v1240 = vadd.f32 %v1112, %v1176
          %v1241 = vadd.f32 %v1113, %v1177
          %v1242 = vadd.f32 %v1114, %v1178
          %v1243 = vadd.f32 %v1115, %v1179
          %v1244 = vadd.f32 %v1116, %v1180
          %v1245 = vadd.f32 %v1117, %v1181
          %v1246 = vadd.f32 %v1118, %v1182
          %v1247 = vadd.f32 %v1119, %v1183
          %v1248 = vadd.f32 %v1120, %v1184
          %v1249 = vadd.f32 %v1121, %v1185
          %v1250 = vadd.f32 %v1122, %v1186
          %v1251 = vadd.f32 %v1123, %v1187
          %v1252 = vadd.f32 %v1124, %v1188
          %v1253 = vadd.f32 %v1125, %v1189
          %v1254 = vadd.f32 %v1126, %v1190
          %v1255 = vadd.f32 %v1127, %v1191
          %v1256 = vadd.f32 %v1128, %v1192
          %v1257 = vadd.f32 %v1129, %v1193
          %v1258 = vadd.f32 %v1130, %v1194
          %v1259 = vadd.f32 %v1131, %v1195
          %v1260 = vadd.f32 %v1132, %v1196
          %v1261 = vadd.f32 %v1133, %v1197
          %v1262 = vadd.f32 %v1134, %v1198
          %v1263 = vadd.f32 %v1135, %v1199
          %v1264 = vadd.f32 %v1136, %v1200
          %v1265 = vadd.f32 %v1137, %v1201
          %v1266 = vadd.f32 %v1138, %v1202
          %v1267 = vadd.f32 %v1139, %v1203
          %v1268 = vadd.f32 %v1140, %v1204
          %v1269 = vadd.f32 %v1141, %v1205
          %v1270 = vadd.f32 %v1142, %v1206
          %v1271 = vadd.f32 %v1143, %v1207
          %v1272 = vadd.f32 %v1144, %v1208
          %v1273 = vadd.f32 %v1145, %v1209
          %v1274 = vadd.f32 %v1146, %v1210
          %v1275 = vadd.f32 %v1147, %v1211
          %v1276 = vadd.f32 %v1148, %v1212
          %v1277 = vadd.f32 %v1149, %v1213
          %v1278 = vadd.f32 %v1150, %v1214
          %v1279 = vadd.f32 %v1151, %v1215
          %v1280 = vadd.f32 %v1152, %v1216
          %v1281 = vadd.f32 %v1153, %v1217
          %v1282 = vadd.f32 %v1154, %v1218
          %v1283 = vadd.f32 %v1155, %v1219
          %v1284 = vadd.f32 %v1156, %v1220
          %v1285 = vadd.f32 %v1157, %v1221
          %v1286 = vadd.f32 %v1158, %v1222
          %v1287 = vadd.f32 %v1159, %v1223
          %v1288 = vadd.f32 %v1160, %v1224
          %v1289 = vadd.f32 %v1161, %v1225
          %v1290 = vadd.f32 %v1162, %v1226
          %v1291 = vadd.f32 %v1163, %v1227
          %v1292 = vadd.f32 %v1164, %v1228
          %v1293 = vadd.f32 %v1165, %v1229
          %v1294 = vadd.f32 %v1166, %v1230
          %v1295 = vadd.f32 %v1167, %v1231
          %v1296 = vadd.f32 %v1168, %v1232
          %v1297 = vadd.f32 %v1169, %v1233
          %1298 = vst [vmem:[#allocation2] sm:$0xff] %v1234
          %1299 = vst [vmem:[#allocation2 + $0x8] sm:$0xff] %v1235
          %1300 = vst [vmem:[#allocation2 + $0x10] sm:$0xff] %v1236
          %1301 = vst [vmem:[#allocation2 + $0x18] sm:$0xff] %v1237
          %1302 = vst [vmem:[#allocation2 + $0x20] sm:$0xff] %v1238
          %1303 = vst [vmem:[#allocation2 + $0x28] sm:$0xff] %v1239
          %1304 = vst [vmem:[#allocation2 + $0x30] sm:$0xff] %v1240
          %1305 = vst [vmem:[#allocation2 + $0x38] sm:$0xff] %v1241
          %1306 = vst [vmem:[#allocation2 + $0x40] sm:$0xff] %v1242
          %1307 = vst [vmem:[#allocation2 + $0x48] sm:$0xff] %v1243
          %1308 = vst [vmem:[#allocation2 + $0x50] sm:$0xff] %v1244
          %1309 = vst [vmem:[#allocation2 + $0x58] sm:$0xff] %v1245
          %1310 = vst [vmem:[#allocation2 + $0x60] sm:$0xff] %v1246
          %1311 = vst [vmem:[#allocation2 + $0x68] sm:$0xff] %v1247
          %1312 = vst [vmem:[#allocation2 + $0x70] sm:$0xff] %v1248
          %1313 = vst [vmem:[#allocation2 + $0x78] sm:$0xff] %v1249
          %1314 = vst [vmem:[#allocation2 + $0x80] sm:$0xff] %v1250
          %1315 = vst [vmem:[#allocation2 + $0x88] sm:$0xff] %v1251
          %1316 = vst [vmem:[#allocation2 + $0x90] sm:$0xff] %v1252
          %1317 = vst [vmem:[#allocation2 + $0x98] sm:$0xff] %v1253
          %1318 = vst [vmem:[#allocation2 + $0xa0] sm:$0xff] %v1254
          %1319 = vst [vmem:[#allocation2 + $0xa8] sm:$0xff] %v1255
          %1320 = vst [vmem:[#allocation2 + $0xb0] sm:$0xff] %v1256
          %1321 = vst [vmem:[#allocation2 + $0xb8] sm:$0xff] %v1257
          %1322 = vst [vmem:[#allocation2 + $0xc0] sm:$0xff] %v1258
          %1323 = vst [vmem:[#allocation2 + $0xc8] sm:$0xff] %v1259
          %1324 = vst [vmem:[#allocation2 + $0xd0] sm:$0xff] %v1260
          %1325 = vst [vmem:[#allocation2 + $0xd8] sm:$0xff] %v1261
          %1326 = vst [vmem:[#allocation2 + $0xe0] sm:$0xff] %v1262
          %1327 = vst [vmem:[#allocation2 + $0xe8] sm:$0xff] %v1263
          %1328 = vst [vmem:[#allocation2 + $0xf0] sm:$0xff] %v1264
          %1329 = vst [vmem:[#allocation2 + $0xf8] sm:$0xff] %v1265
          %1330 = vst [vmem:[#allocation2 + $0x100] sm:$0xff] %v1266
          %1331 = vst [vmem:[#allocation2 + $0x108] sm:$0xff] %v1267
          %1332 = vst [vmem:[#allocation2 + $0x110] sm:$0xff] %v1268
          %1333 = vst [vmem:[#allocation2 + $0x118] sm:$0xff] %v1269
          %1334 = vst [vmem:[#allocation2 + $0x120] sm:$0xff] %v1270
          %1335 = vst [vmem:[#allocation2 + $0x128] sm:$0xff] %v1271
          %1336 = vst [vmem:[#allocation2 + $0x130] sm:$0xff] %v1272
          %1337 = vst [vmem:[#allocation2 + $0x138] sm:$0xff] %v1273
          %1338 = vst [vmem:[#allocation2 + $0x140] sm:$0xff] %v1274
          %1339 = vst [vmem:[#allocation2 + $0x148] sm:$0xff] %v1275
          %1340 = vst [vmem:[#allocation2 + $0x150] sm:$0xff] %v1276
          %1341 = vst [vmem:[#allocation2 + $0x158] sm:$0xff] %v1277
          %1342 = vst [vmem:[#allocation2 + $0x160] sm:$0xff] %v1278
          %1343 = vst [vmem:[#allocation2 + $0x168] sm:$0xff] %v1279
          %1344 = vst [vmem:[#allocation2 + $0x170] sm:$0xff] %v1280
          %1345 = vst [vmem:[#allocation2 + $0x178] sm:$0xff] %v1281
          %1346 = vst [vmem:[#allocation2 + $0x180] sm:$0xff] %v1282
          %1347 = vst [vmem:[#allocation2 + $0x188] sm:$0xff] %v1283
          %1348 = vst [vmem:[#allocation2 + $0x190] sm:$0xff] %v1284
          %1349 = vst [vmem:[#allocation2 + $0x198] sm:$0xff] %v1285
          %1350 = vst [vmem:[#allocation2 + $0x1a0] sm:$0xff] %v1286
          %1351 = vst [vmem:[#allocation2 + $0x1a8] sm:$0xff] %v1287
          %1352 = vst [vmem:[#allocation2 + $0x1b0] sm:$0xff] %v1288
          %1353 = vst [vmem:[#allocation2 + $0x1b8] sm:$0xff] %v1289
          %1354 = vst [vmem:[#allocation2 + $0x1c0] sm:$0xff] %v1290
          %1355 = vst [vmem:[#allocation2 + $0x1c8] sm:$0xff] %v1291
          %1356 = vst [vmem:[#allocation2 + $0x1d0] sm:$0xff] %v1292
          %1357 = vst [vmem:[#allocation2 + $0x1d8] sm:$0xff] %v1293
          %1358 = vst [vmem:[#allocation2 + $0x1e0] sm:$0xff] %v1294
          %1359 = vst [vmem:[#allocation2 + $0x1e8] sm:$0xff] %v1295
          %1360 = vst [vmem:[#allocation2 + $0x1f0] sm:$0xff] %v1296
          %1361 = vst [vmem:[#allocation2 + $0x1f8] sm:$0xff] %v1297
        $region40: #{hausdorff_dt_loss.1} parent=35 // pred_fallthru
          _
        %v1362 = vld [vmem:[#allocation2] sm:$0xff]
        %v1363 = vld [vmem:[#allocation2 + $0x8] sm:$0xff]
        %v1364 = vld [vmem:[#allocation2 + $0x10] sm:$0xff]
        %v1365 = vld [vmem:[#allocation2 + $0x18] sm:$0xff]
        %v1366 = vld [vmem:[#allocation2 + $0x20] sm:$0xff]
        %v1367 = vld [vmem:[#allocation2 + $0x28] sm:$0xff]
        %v1368 = vld [vmem:[#allocation2 + $0x30] sm:$0xff]
        %v1369 = vld [vmem:[#allocation2 + $0x38] sm:$0xff]
        %v1370 = vld [vmem:[#allocation2 + $0x40] sm:$0xff]
        %v1371 = vld [vmem:[#allocation2 + $0x48] sm:$0xff]
        %v1372 = vld [vmem:[#allocation2 + $0x50] sm:$0xff]
        %v1373 = vld [vmem:[#allocation2 + $0x58] sm:$0xff]
        %v1374 = vld [vmem:[#allocation2 + $0x60] sm:$0xff]
        %v1375 = vld [vmem:[#allocation2 + $0x68] sm:$0xff]
        %v1376 = vld [vmem:[#allocation2 + $0x70] sm:$0xff]
        %v1377 = vld [vmem:[#allocation2 + $0x78] sm:$0xff]
        %v1378 = vld [vmem:[#allocation2 + $0x80] sm:$0xff]
        %v1379 = vld [vmem:[#allocation2 + $0x88] sm:$0xff]
        %v1380 = vld [vmem:[#allocation2 + $0x90] sm:$0xff]
        %v1381 = vld [vmem:[#allocation2 + $0x98] sm:$0xff]
        %v1382 = vld [vmem:[#allocation2 + $0xa0] sm:$0xff]
        %v1383 = vld [vmem:[#allocation2 + $0xa8] sm:$0xff]
        %v1384 = vld [vmem:[#allocation2 + $0xb0] sm:$0xff]
        %v1385 = vld [vmem:[#allocation2 + $0xb8] sm:$0xff]
        %v1386 = vld [vmem:[#allocation2 + $0xc0] sm:$0xff]
        %v1387 = vld [vmem:[#allocation2 + $0xc8] sm:$0xff]
        %v1388 = vld [vmem:[#allocation2 + $0xd0] sm:$0xff]
        %v1389 = vld [vmem:[#allocation2 + $0xd8] sm:$0xff]
        %v1390 = vld [vmem:[#allocation2 + $0xe0] sm:$0xff]
        %v1391 = vld [vmem:[#allocation2 + $0xe8] sm:$0xff]
        %v1392 = vld [vmem:[#allocation2 + $0xf0] sm:$0xff]
        %v1393 = vld [vmem:[#allocation2 + $0xf8] sm:$0xff]
        %v1394 = vld [vmem:[#allocation2 + $0x100] sm:$0xff]
        %v1395 = vld [vmem:[#allocation2 + $0x108] sm:$0xff]
        %v1396 = vld [vmem:[#allocation2 + $0x110] sm:$0xff]
        %v1397 = vld [vmem:[#allocation2 + $0x118] sm:$0xff]
        %v1398 = vld [vmem:[#allocation2 + $0x120] sm:$0xff]
        %v1399 = vld [vmem:[#allocation2 + $0x128] sm:$0xff]
        %v1400 = vld [vmem:[#allocation2 + $0x130] sm:$0xff]
        %v1401 = vld [vmem:[#allocation2 + $0x138] sm:$0xff]
        %v1402 = vld [vmem:[#allocation2 + $0x140] sm:$0xff]
        %v1403 = vld [vmem:[#allocation2 + $0x148] sm:$0xff]
        %v1404 = vld [vmem:[#allocation2 + $0x150] sm:$0xff]
        %v1405 = vld [vmem:[#allocation2 + $0x158] sm:$0xff]
        %v1406 = vld [vmem:[#allocation2 + $0x160] sm:$0xff]
        %v1407 = vld [vmem:[#allocation2 + $0x168] sm:$0xff]
        %v1408 = vld [vmem:[#allocation2 + $0x170] sm:$0xff]
        %v1409 = vld [vmem:[#allocation2 + $0x178] sm:$0xff]
        %v1410 = vld [vmem:[#allocation2 + $0x180] sm:$0xff]
        %v1411 = vld [vmem:[#allocation2 + $0x188] sm:$0xff]
        %v1412 = vld [vmem:[#allocation2 + $0x190] sm:$0xff]
        %v1413 = vld [vmem:[#allocation2 + $0x198] sm:$0xff]
        %v1414 = vld [vmem:[#allocation2 + $0x1a0] sm:$0xff]
        %v1415 = vld [vmem:[#allocation2 + $0x1a8] sm:$0xff]
        %v1416 = vld [vmem:[#allocation2 + $0x1b0] sm:$0xff]
        %v1417 = vld [vmem:[#allocation2 + $0x1b8] sm:$0xff]
        %v1418 = vld [vmem:[#allocation2 + $0x1c0] sm:$0xff]
        %v1419 = vld [vmem:[#allocation2 + $0x1c8] sm:$0xff]
        %v1420 = vld [vmem:[#allocation2 + $0x1d0] sm:$0xff]
        %v1421 = vld [vmem:[#allocation2 + $0x1d8] sm:$0xff]
        %v1422 = vld [vmem:[#allocation2 + $0x1e0] sm:$0xff]
        %v1423 = vld [vmem:[#allocation2 + $0x1e8] sm:$0xff]
        %v1424 = vld [vmem:[#allocation2 + $0x1f0] sm:$0xff]
        %v1425 = vld [vmem:[#allocation2 + $0x1f8] sm:$0xff]
        %v1426 = vld [vmem:[%s269] sm:$0x3]
        %v1427 = vld [vmem:[%s273] sm:$0x3]
        %vm1428 = vcmp.gt.f32.partialorder %v1426, 0.5
        %v1429 = vsel %vm873, 1, 0
        %v1430 = vsel %vm874, 1, 0
        %v1431 = vsel %vm875, 1, 0
        %v1432 = vsel %vm876, 1, 0
        %v1433 = vsel %vm877, 1, 0
        %v1434 = vsel %vm878, 1, 0
        %v1435 = vsel %vm879, 1, 0
        %v1436 = vsel %vm880, 1, 0
        %v1437 = vsel %vm881, 1, 0
        %v1438 = vsel %vm882, 1, 0
        %v1439 = vsel %vm883, 1, 0
        %v1440 = vsel %vm884, 1, 0
        %v1441 = vsel %vm885, 1, 0
        %v1442 = vsel %vm886, 1, 0
        %v1443 = vsel %vm887, 1, 0
        %v1444 = vsel %vm888, 1, 0
        %v1445 = vsel %vm889, 1, 0
        %v1446 = vsel %vm890, 1, 0
        %v1447 = vsel %vm891, 1, 0
        %v1448 = vsel %vm892, 1, 0
        %v1449 = vsel %vm893, 1, 0
        %v1450 = vsel %vm894, 1, 0
        %v1451 = vsel %vm895, 1, 0
        %v1452 = vsel %vm896, 1, 0
        %v1453 = vsel %vm897, 1, 0
        %v1454 = vsel %vm898, 1, 0
        %v1455 = vsel %vm899, 1, 0
        %v1456 = vsel %vm900, 1, 0
        %v1457 = vsel %vm901, 1, 0
        %v1458 = vsel %vm902, 1, 0
        %v1459 = vsel %vm903, 1, 0
        %v1460 = vsel %vm904, 1, 0
        %1461 = vset.pattern.permute.xlu0 0
        %1462 = vperm.xlu0 %1461, %v1429
        %v1463 = vpop.permute.xlu0 %1462
        %1464 = vset.pattern.permute.xlu0 0
        %1465 = vperm.xlu0 %1464, %v1430
        %v1466 = vpop.permute.xlu0 %1465
        %1467 = vset.pattern.permute.xlu0 0
        %1468 = vperm.xlu0 %1467, %v1431
        %v1469 = vpop.permute.xlu0 %1468
        %1470 = vset.pattern.permute.xlu0 0
        %1471 = vperm.xlu0 %1470, %v1432
        %v1472 = vpop.permute.xlu0 %1471
        %1473 = vset.pattern.permute.xlu0 0
        %1474 = vperm.xlu0 %1473, %v1433
        %v1475 = vpop.permute.xlu0 %1474
        %1476 = vset.pattern.permute.xlu0 0
        %1477 = vperm.xlu0 %1476, %v1434
        %v1478 = vpop.permute.xlu0 %1477
        %1479 = vset.pattern.permute.xlu0 0
        %1480 = vperm.xlu0 %1479, %v1435
        %v1481 = vpop.permute.xlu0 %1480
        %1482 = vset.pattern.permute.xlu0 0
        %1483 = vperm.xlu0 %1482, %v1436
        %v1484 = vpop.permute.xlu0 %1483
        %1485 = vset.pattern.permute.xlu0 0
        %1486 = vperm.xlu0 %1485, %v1437
        %v1487 = vpop.permute.xlu0 %1486
        %1488 = vset.pattern.permute.xlu0 0
        %1489 = vperm.xlu0 %1488, %v1438
        %v1490 = vpop.permute.xlu0 %1489
        %1491 = vset.pattern.permute.xlu0 0
        %1492 = vperm.xlu0 %1491, %v1439
        %v1493 = vpop.permute.xlu0 %1492
        %1494 = vset.pattern.permute.xlu0 0
        %1495 = vperm.xlu0 %1494, %v1440
        %v1496 = vpop.permute.xlu0 %1495
        %1497 = vset.pattern.permute.xlu0 0
        %1498 = vperm.xlu0 %1497, %v1441
        %v1499 = vpop.permute.xlu0 %1498
        %1500 = vset.pattern.permute.xlu0 0
        %1501 = vperm.xlu0 %1500, %v1442
        %v1502 = vpop.permute.xlu0 %1501
        %1503 = vset.pattern.permute.xlu0 0
        %1504 = vperm.xlu0 %1503, %v1443
        %v1505 = vpop.permute.xlu0 %1504
        %1506 = vset.pattern.permute.xlu0 0
        %1507 = vperm.xlu0 %1506, %v1444
        %v1508 = vpop.permute.xlu0 %1507
        %1509 = vset.pattern.permute.xlu0 0
        %1510 = vperm.xlu0 %1509, %v1445
        %v1511 = vpop.permute.xlu0 %1510
        %1512 = vset.pattern.permute.xlu0 0
        %1513 = vperm.xlu0 %1512, %v1446
        %v1514 = vpop.permute.xlu0 %1513
        %1515 = vset.pattern.permute.xlu0 0
        %1516 = vperm.xlu0 %1515, %v1447
        %v1517 = vpop.permute.xlu0 %1516
        %1518 = vset.pattern.permute.xlu0 0
        %1519 = vperm.xlu0 %1518, %v1448
        %v1520 = vpop.permute.xlu0 %1519
        %1521 = vset.pattern.permute.xlu0 0
        %1522 = vperm.xlu0 %1521, %v1449
        %v1523 = vpop.permute.xlu0 %1522
        %1524 = vset.pattern.permute.xlu0 0
        %1525 = vperm.xlu0 %1524, %v1450
        %v1526 = vpop.permute.xlu0 %1525
        %1527 = vset.pattern.permute.xlu0 0
        %1528 = vperm.xlu0 %1527, %v1451
        %v1529 = vpop.permute.xlu0 %1528
        %1530 = vset.pattern.permute.xlu0 0
        %1531 = vperm.xlu0 %1530, %v1452
        %v1532 = vpop.permute.xlu0 %1531
        %1533 = vset.pattern.permute.xlu0 0
        %1534 = vperm.xlu0 %1533, %v1453
        %v1535 = vpop.permute.xlu0 %1534
        %1536 = vset.pattern.permute.xlu0 0
        %1537 = vperm.xlu0 %1536, %v1454
        %v1538 = vpop.permute.xlu0 %1537
        %1539 = vset.pattern.permute.xlu0 0
        %1540 = vperm.xlu0 %1539, %v1455
        %v1541 = vpop.permute.xlu0 %1540
        %1542 = vset.pattern.permute.xlu0 0
        %1543 = vperm.xlu0 %1542, %v1456
        %v1544 = vpop.permute.xlu0 %1543
        %1545 = vset.pattern.permute.xlu0 0
        %1546 = vperm.xlu0 %1545, %v1457
        %v1547 = vpop.permute.xlu0 %1546
        %1548 = vset.pattern.permute.xlu0 0
        %1549 = vperm.xlu0 %1548, %v1458
        %v1550 = vpop.permute.xlu0 %1549
        %1551 = vset.pattern.permute.xlu0 0
        %1552 = vperm.xlu0 %1551, %v1459
        %v1553 = vpop.permute.xlu0 %1552
        %1554 = vset.pattern.permute.xlu0 0
        %1555 = vperm.xlu0 %1554, %v1460
        %v1556 = vpop.permute.xlu0 %1555
        %vm1557 = vcmp.eq.s32.totalorder %v1463, 1
        %vm1558 = vcmp.eq.s32.totalorder %v1466, 1
        %vm1559 = vcmp.eq.s32.totalorder %v1469, 1
        %vm1560 = vcmp.eq.s32.totalorder %v1472, 1
        %vm1561 = vcmp.eq.s32.totalorder %v1475, 1
        %vm1562 = vcmp.eq.s32.totalorder %v1478, 1
        %vm1563 = vcmp.eq.s32.totalorder %v1481, 1
        %vm1564 = vcmp.eq.s32.totalorder %v1484, 1
        %vm1565 = vcmp.eq.s32.totalorder %v1487, 1
        %vm1566 = vcmp.eq.s32.totalorder %v1490, 1
        %vm1567 = vcmp.eq.s32.totalorder %v1493, 1
        %vm1568 = vcmp.eq.s32.totalorder %v1496, 1
        %vm1569 = vcmp.eq.s32.totalorder %v1499, 1
        %vm1570 = vcmp.eq.s32.totalorder %v1502, 1
        %vm1571 = vcmp.eq.s32.totalorder %v1505, 1
        %vm1572 = vcmp.eq.s32.totalorder %v1508, 1
        %vm1573 = vcmp.eq.s32.totalorder %v1511, 1
        %vm1574 = vcmp.eq.s32.totalorder %v1514, 1
        %vm1575 = vcmp.eq.s32.totalorder %v1517, 1
        %vm1576 = vcmp.eq.s32.totalorder %v1520, 1
        %vm1577 = vcmp.eq.s32.totalorder %v1523, 1
        %vm1578 = vcmp.eq.s32.totalorder %v1526, 1
        %vm1579 = vcmp.eq.s32.totalorder %v1529, 1
        %vm1580 = vcmp.eq.s32.totalorder %v1532, 1
        %vm1581 = vcmp.eq.s32.totalorder %v1535, 1
        %vm1582 = vcmp.eq.s32.totalorder %v1538, 1
        %vm1583 = vcmp.eq.s32.totalorder %v1541, 1
        %vm1584 = vcmp.eq.s32.totalorder %v1544, 1
        %vm1585 = vcmp.eq.s32.totalorder %v1547, 1
        %vm1586 = vcmp.eq.s32.totalorder %v1550, 1
        %vm1587 = vcmp.eq.s32.totalorder %v1553, 1
        %vm1588 = vcmp.eq.s32.totalorder %v1556, 1
        %v1589 = vsel %vm1428, 1, 0
        %v1590 = vlaneseq
        %v1591 = vshrl.u32 %v1590, 7
        %v1592 = vsub.s32 0, %v1591
        %v1593 = vrot.slane %v1589, %v1592
        %v1594 = vlaneseq
        %v1595 = vshrl.u32 %v1594, 7
        %v1596 = vsub.s32 1, %v1595
        %v1597 = vrot.slane %v1589, %v1596
        %vm1598 = vcmp.eq.s32.totalorder %v1593, 1
        %vm1599 = vcmp.eq.s32.totalorder %v1597, 1
        %vm1600 = vmxor %vm1557, %vm1598
        %vm1601 = vmxor %vm1557, %vm1599
        %vm1602 = vmxor %vm1558, %vm1598
        %vm1603 = vmxor %vm1558, %vm1599
        %vm1604 = vmxor %vm1559, %vm1598
        %vm1605 = vmxor %vm1559, %vm1599
        %vm1606 = vmxor %vm1560, %vm1598
        %vm1607 = vmxor %vm1560, %vm1599
        %vm1608 = vmxor %vm1561, %vm1598
        %vm1609 = vmxor %vm1561, %vm1599
        %vm1610 = vmxor %vm1562, %vm1598
        %vm1611 = vmxor %vm1562, %vm1599
        %vm1612 = vmxor %vm1563, %vm1598
        %vm1613 = vmxor %vm1563, %vm1599
        %vm1614 = vmxor %vm1564, %vm1598
        %vm1615 = vmxor %vm1564, %vm1599
        %vm1616 = vmxor %vm1565, %vm1598
        %vm1617 = vmxor %vm1565, %vm1599
        %vm1618 = vmxor %vm1566, %vm1598
        %vm1619 = vmxor %vm1566, %vm1599
        %vm1620 = vmxor %vm1567, %vm1598
        %vm1621 = vmxor %vm1567, %vm1599
        %vm1622 = vmxor %vm1568, %vm1598
        %vm1623 = vmxor %vm1568, %vm1599
        %vm1624 = vmxor %vm1569, %vm1598
        %vm1625 = vmxor %vm1569, %vm1599
        %vm1626 = vmxor %vm1570, %vm1598
        %vm1627 = vmxor %vm1570, %vm1599
        %vm1628 = vmxor %vm1571, %vm1598
        %vm1629 = vmxor %vm1571, %vm1599
        %vm1630 = vmxor %vm1572, %vm1598
        %vm1631 = vmxor %vm1572, %vm1599
        %vm1632 = vmxor %vm1573, %vm1598
        %vm1633 = vmxor %vm1573, %vm1599
        %vm1634 = vmxor %vm1574, %vm1598
        %vm1635 = vmxor %vm1574, %vm1599
        %vm1636 = vmxor %vm1575, %vm1598
        %vm1637 = vmxor %vm1575, %vm1599
        %vm1638 = vmxor %vm1576, %vm1598
        %vm1639 = vmxor %vm1576, %vm1599
        %vm1640 = vmxor %vm1577, %vm1598
        %vm1641 = vmxor %vm1577, %vm1599
        %vm1642 = vmxor %vm1578, %vm1598
        %vm1643 = vmxor %vm1578, %vm1599
        %vm1644 = vmxor %vm1579, %vm1598
        %vm1645 = vmxor %vm1579, %vm1599
        %vm1646 = vmxor %vm1580, %vm1598
        %vm1647 = vmxor %vm1580, %vm1599
        %vm1648 = vmxor %vm1581, %vm1598
        %vm1649 = vmxor %vm1581, %vm1599
        %vm1650 = vmxor %vm1582, %vm1598
        %vm1651 = vmxor %vm1582, %vm1599
        %vm1652 = vmxor %vm1583, %vm1598
        %vm1653 = vmxor %vm1583, %vm1599
        %vm1654 = vmxor %vm1584, %vm1598
        %vm1655 = vmxor %vm1584, %vm1599
        %vm1656 = vmxor %vm1585, %vm1598
        %vm1657 = vmxor %vm1585, %vm1599
        %vm1658 = vmxor %vm1586, %vm1598
        %vm1659 = vmxor %vm1586, %vm1599
        %vm1660 = vmxor %vm1587, %vm1598
        %vm1661 = vmxor %vm1587, %vm1599
        %vm1662 = vmxor %vm1588, %vm1598
        %vm1663 = vmxor %vm1588, %vm1599
        %vm1664 = vcmp.gt.f32.partialorder %v1427, 0.5
        %v1665 = vsel %vm905, 1, 0
        %v1666 = vsel %vm906, 1, 0
        %v1667 = vsel %vm907, 1, 0
        %v1668 = vsel %vm908, 1, 0
        %v1669 = vsel %vm909, 1, 0
        %v1670 = vsel %vm910, 1, 0
        %v1671 = vsel %vm911, 1, 0
        %v1672 = vsel %vm912, 1, 0
        %v1673 = vsel %vm913, 1, 0
        %v1674 = vsel %vm914, 1, 0
        %v1675 = vsel %vm915, 1, 0
        %v1676 = vsel %vm916, 1, 0
        %v1677 = vsel %vm917, 1, 0
        %v1678 = vsel %vm918, 1, 0
        %v1679 = vsel %vm919, 1, 0
        %v1680 = vsel %vm920, 1, 0
        %v1681 = vsel %vm921, 1, 0
        %v1682 = vsel %vm922, 1, 0
        %v1683 = vsel %vm923, 1, 0
        %v1684 = vsel %vm924, 1, 0
        %v1685 = vsel %vm925, 1, 0
        %v1686 = vsel %vm926, 1, 0
        %v1687 = vsel %vm927, 1, 0
        %v1688 = vsel %vm928, 1, 0
        %v1689 = vsel %vm929, 1, 0
        %v1690 = vsel %vm930, 1, 0
        %v1691 = vsel %vm931, 1, 0
        %v1692 = vsel %vm932, 1, 0
        %v1693 = vsel %vm933, 1, 0
        %v1694 = vsel %vm934, 1, 0
        %v1695 = vsel %vm935, 1, 0
        %v1696 = vsel %vm936, 1, 0
        %1697 = vset.pattern.permute.xlu0 0
        %1698 = vperm.xlu0 %1697, %v1665
        %v1699 = vpop.permute.xlu0 %1698
        %1700 = vset.pattern.permute.xlu0 0
        %1701 = vperm.xlu0 %1700, %v1666
        %v1702 = vpop.permute.xlu0 %1701
        %1703 = vset.pattern.permute.xlu0 0
        %1704 = vperm.xlu0 %1703, %v1667
        %v1705 = vpop.permute.xlu0 %1704
        %1706 = vset.pattern.permute.xlu0 0
        %1707 = vperm.xlu0 %1706, %v1668
        %v1708 = vpop.permute.xlu0 %1707
        %1709 = vset.pattern.permute.xlu0 0
        %1710 = vperm.xlu0 %1709, %v1669
        %v1711 = vpop.permute.xlu0 %1710
        %1712 = vset.pattern.permute.xlu0 0
        %1713 = vperm.xlu0 %1712, %v1670
        %v1714 = vpop.permute.xlu0 %1713
        %1715 = vset.pattern.permute.xlu0 0
        %1716 = vperm.xlu0 %1715, %v1671
        %v1717 = vpop.permute.xlu0 %1716
        %1718 = vset.pattern.permute.xlu0 0
        %1719 = vperm.xlu0 %1718, %v1672
        %v1720 = vpop.permute.xlu0 %1719
        %1721 = vset.pattern.permute.xlu0 0
        %1722 = vperm.xlu0 %1721, %v1673
        %v1723 = vpop.permute.xlu0 %1722
        %1724 = vset.pattern.permute.xlu0 0
        %1725 = vperm.xlu0 %1724, %v1674
        %v1726 = vpop.permute.xlu0 %1725
        %1727 = vset.pattern.permute.xlu0 0
        %1728 = vperm.xlu0 %1727, %v1675
        %v1729 = vpop.permute.xlu0 %1728
        %1730 = vset.pattern.permute.xlu0 0
        %1731 = vperm.xlu0 %1730, %v1676
        %v1732 = vpop.permute.xlu0 %1731
        %1733 = vset.pattern.permute.xlu0 0
        %1734 = vperm.xlu0 %1733, %v1677
        %v1735 = vpop.permute.xlu0 %1734
        %1736 = vset.pattern.permute.xlu0 0
        %1737 = vperm.xlu0 %1736, %v1678
        %v1738 = vpop.permute.xlu0 %1737
        %1739 = vset.pattern.permute.xlu0 0
        %1740 = vperm.xlu0 %1739, %v1679
        %v1741 = vpop.permute.xlu0 %1740
        %1742 = vset.pattern.permute.xlu0 0
        %1743 = vperm.xlu0 %1742, %v1680
        %v1744 = vpop.permute.xlu0 %1743
        %1745 = vset.pattern.permute.xlu0 0
        %1746 = vperm.xlu0 %1745, %v1681
        %v1747 = vpop.permute.xlu0 %1746
        %1748 = vset.pattern.permute.xlu0 0
        %1749 = vperm.xlu0 %1748, %v1682
        %v1750 = vpop.permute.xlu0 %1749
        %1751 = vset.pattern.permute.xlu0 0
        %1752 = vperm.xlu0 %1751, %v1683
        %v1753 = vpop.permute.xlu0 %1752
        %1754 = vset.pattern.permute.xlu0 0
        %1755 = vperm.xlu0 %1754, %v1684
        %v1756 = vpop.permute.xlu0 %1755
        %1757 = vset.pattern.permute.xlu0 0
        %1758 = vperm.xlu0 %1757, %v1685
        %v1759 = vpop.permute.xlu0 %1758
        %1760 = vset.pattern.permute.xlu0 0
        %1761 = vperm.xlu0 %1760, %v1686
        %v1762 = vpop.permute.xlu0 %1761
        %1763 = vset.pattern.permute.xlu0 0
        %1764 = vperm.xlu0 %1763, %v1687
        %v1765 = vpop.permute.xlu0 %1764
        %1766 = vset.pattern.permute.xlu0 0
        %1767 = vperm.xlu0 %1766, %v1688
        %v1768 = vpop.permute.xlu0 %1767
        %1769 = vset.pattern.permute.xlu0 0
        %1770 = vperm.xlu0 %1769, %v1689
        %v1771 = vpop.permute.xlu0 %1770
        %1772 = vset.pattern.permute.xlu0 0
        %1773 = vperm.xlu0 %1772, %v1690
        %v1774 = vpop.permute.xlu0 %1773
        %1775 = vset.pattern.permute.xlu0 0
        %1776 = vperm.xlu0 %1775, %v1691
        %v1777 = vpop.permute.xlu0 %1776
        %1778 = vset.pattern.permute.xlu0 0
        %1779 = vperm.xlu0 %1778, %v1692
        %v1780 = vpop.permute.xlu0 %1779
        %1781 = vset.pattern.permute.xlu0 0
        %1782 = vperm.xlu0 %1781, %v1693
        %v1783 = vpop.permute.xlu0 %1782
        %1784 = vset.pattern.permute.xlu0 0
        %1785 = vperm.xlu0 %1784, %v1694
        %v1786 = vpop.permute.xlu0 %1785
        %1787 = vset.pattern.permute.xlu0 0
        %1788 = vperm.xlu0 %1787, %v1695
        %v1789 = vpop.permute.xlu0 %1788
        %1790 = vset.pattern.permute.xlu0 0
        %1791 = vperm.xlu0 %1790, %v1696
        %v1792 = vpop.permute.xlu0 %1791
        %vm1793 = vcmp.eq.s32.totalorder %v1699, 1
        %vm1794 = vcmp.eq.s32.totalorder %v1702, 1
        %vm1795 = vcmp.eq.s32.totalorder %v1705, 1
        %vm1796 = vcmp.eq.s32.totalorder %v1708, 1
        %vm1797 = vcmp.eq.s32.totalorder %v1711, 1
        %vm1798 = vcmp.eq.s32.totalorder %v1714, 1
        %vm1799 = vcmp.eq.s32.totalorder %v1717, 1
        %vm1800 = vcmp.eq.s32.totalorder %v1720, 1
        %vm1801 = vcmp.eq.s32.totalorder %v1723, 1
        %vm1802 = vcmp.eq.s32.totalorder %v1726, 1
        %vm1803 = vcmp.eq.s32.totalorder %v1729, 1
        %vm1804 = vcmp.eq.s32.totalorder %v1732, 1
        %vm1805 = vcmp.eq.s32.totalorder %v1735, 1
        %vm1806 = vcmp.eq.s32.totalorder %v1738, 1
        %vm1807 = vcmp.eq.s32.totalorder %v1741, 1
        %vm1808 = vcmp.eq.s32.totalorder %v1744, 1
        %vm1809 = vcmp.eq.s32.totalorder %v1747, 1
        %vm1810 = vcmp.eq.s32.totalorder %v1750, 1
        %vm1811 = vcmp.eq.s32.totalorder %v1753, 1
        %vm1812 = vcmp.eq.s32.totalorder %v1756, 1
        %vm1813 = vcmp.eq.s32.totalorder %v1759, 1
        %vm1814 = vcmp.eq.s32.totalorder %v1762, 1
        %vm1815 = vcmp.eq.s32.totalorder %v1765, 1
        %vm1816 = vcmp.eq.s32.totalorder %v1768, 1
        %vm1817 = vcmp.eq.s32.totalorder %v1771, 1
        %vm1818 = vcmp.eq.s32.totalorder %v1774, 1
        %vm1819 = vcmp.eq.s32.totalorder %v1777, 1
        %vm1820 = vcmp.eq.s32.totalorder %v1780, 1
        %vm1821 = vcmp.eq.s32.totalorder %v1783, 1
        %vm1822 = vcmp.eq.s32.totalorder %v1786, 1
        %vm1823 = vcmp.eq.s32.totalorder %v1789, 1
        %vm1824 = vcmp.eq.s32.totalorder %v1792, 1
        %v1825 = vsel %vm1664, 1, 0
        %v1826 = vlaneseq
        %v1827 = vshrl.u32 %v1826, 7
        %v1828 = vsub.s32 0, %v1827
        %v1829 = vrot.slane %v1825, %v1828
        %v1830 = vlaneseq
        %v1831 = vshrl.u32 %v1830, 7
        %v1832 = vsub.s32 1, %v1831
        %v1833 = vrot.slane %v1825, %v1832
        %vm1834 = vcmp.eq.s32.totalorder %v1829, 1
        %vm1835 = vcmp.eq.s32.totalorder %v1833, 1
        %vm1836 = vmxor %vm1793, %vm1834
        %vm1837 = vmxor %vm1793, %vm1835
        %vm1838 = vmxor %vm1794, %vm1834
        %vm1839 = vmxor %vm1794, %vm1835
        %vm1840 = vmxor %vm1795, %vm1834
        %vm1841 = vmxor %vm1795, %vm1835
        %vm1842 = vmxor %vm1796, %vm1834
        %vm1843 = vmxor %vm1796, %vm1835
        %vm1844 = vmxor %vm1797, %vm1834
        %vm1845 = vmxor %vm1797, %vm1835
        %vm1846 = vmxor %vm1798, %vm1834
        %vm1847 = vmxor %vm1798, %vm1835
        %vm1848 = vmxor %vm1799, %vm1834
        %vm1849 = vmxor %vm1799, %vm1835
        %vm1850 = vmxor %vm1800, %vm1834
        %vm1851 = vmxor %vm1800, %vm1835
        %vm1852 = vmxor %vm1801, %vm1834
        %vm1853 = vmxor %vm1801, %vm1835
        %vm1854 = vmxor %vm1802, %vm1834
        %vm1855 = vmxor %vm1802, %vm1835
        %vm1856 = vmxor %vm1803, %vm1834
        %vm1857 = vmxor %vm1803, %vm1835
        %vm1858 = vmxor %vm1804, %vm1834
        %vm1859 = vmxor %vm1804, %vm1835
        %vm1860 = vmxor %vm1805, %vm1834
        %vm1861 = vmxor %vm1805, %vm1835
        %vm1862 = vmxor %vm1806, %vm1834
        %vm1863 = vmxor %vm1806, %vm1835
        %vm1864 = vmxor %vm1807, %vm1834
        %vm1865 = vmxor %vm1807, %vm1835
        %vm1866 = vmxor %vm1808, %vm1834
        %vm1867 = vmxor %vm1808, %vm1835
        %vm1868 = vmxor %vm1809, %vm1834
        %vm1869 = vmxor %vm1809, %vm1835
        %vm1870 = vmxor %vm1810, %vm1834
        %vm1871 = vmxor %vm1810, %vm1835
        %vm1872 = vmxor %vm1811, %vm1834
        %vm1873 = vmxor %vm1811, %vm1835
        %vm1874 = vmxor %vm1812, %vm1834
        %vm1875 = vmxor %vm1812, %vm1835
        %vm1876 = vmxor %vm1813, %vm1834
        %vm1877 = vmxor %vm1813, %vm1835
        %vm1878 = vmxor %vm1814, %vm1834
        %vm1879 = vmxor %vm1814, %vm1835
        %vm1880 = vmxor %vm1815, %vm1834
        %vm1881 = vmxor %vm1815, %vm1835
        %vm1882 = vmxor %vm1816, %vm1834
        %vm1883 = vmxor %vm1816, %vm1835
        %vm1884 = vmxor %vm1817, %vm1834
        %vm1885 = vmxor %vm1817, %vm1835
        %vm1886 = vmxor %vm1818, %vm1834
        %vm1887 = vmxor %vm1818, %vm1835
        %vm1888 = vmxor %vm1819, %vm1834
        %vm1889 = vmxor %vm1819, %vm1835
        %vm1890 = vmxor %vm1820, %vm1834
        %vm1891 = vmxor %vm1820, %vm1835
        %vm1892 = vmxor %vm1821, %vm1834
        %vm1893 = vmxor %vm1821, %vm1835
        %vm1894 = vmxor %vm1822, %vm1834
        %vm1895 = vmxor %vm1822, %vm1835
        %vm1896 = vmxor %vm1823, %vm1834
        %vm1897 = vmxor %vm1823, %vm1835
        %vm1898 = vmxor %vm1824, %vm1834
        %vm1899 = vmxor %vm1824, %vm1835
        %v1900 = vsel %vm1600, %v1362, 1e+30
        %v1901 = vsel %vm1601, %v1363, 1e+30
        %v1902 = vsel %vm1602, %v1364, 1e+30
        %v1903 = vsel %vm1603, %v1365, 1e+30
        %v1904 = vsel %vm1604, %v1366, 1e+30
        %v1905 = vsel %vm1605, %v1367, 1e+30
        %v1906 = vsel %vm1606, %v1368, 1e+30
        %v1907 = vsel %vm1607, %v1369, 1e+30
        %v1908 = vsel %vm1608, %v1370, 1e+30
        %v1909 = vsel %vm1609, %v1371, 1e+30
        %v1910 = vsel %vm1610, %v1372, 1e+30
        %v1911 = vsel %vm1611, %v1373, 1e+30
        %v1912 = vsel %vm1612, %v1374, 1e+30
        %v1913 = vsel %vm1613, %v1375, 1e+30
        %v1914 = vsel %vm1614, %v1376, 1e+30
        %v1915 = vsel %vm1615, %v1377, 1e+30
        %v1916 = vsel %vm1616, %v1378, 1e+30
        %v1917 = vsel %vm1617, %v1379, 1e+30
        %v1918 = vsel %vm1618, %v1380, 1e+30
        %v1919 = vsel %vm1619, %v1381, 1e+30
        %v1920 = vsel %vm1620, %v1382, 1e+30
        %v1921 = vsel %vm1621, %v1383, 1e+30
        %v1922 = vsel %vm1622, %v1384, 1e+30
        %v1923 = vsel %vm1623, %v1385, 1e+30
        %v1924 = vsel %vm1624, %v1386, 1e+30
        %v1925 = vsel %vm1625, %v1387, 1e+30
        %v1926 = vsel %vm1626, %v1388, 1e+30
        %v1927 = vsel %vm1627, %v1389, 1e+30
        %v1928 = vsel %vm1628, %v1390, 1e+30
        %v1929 = vsel %vm1629, %v1391, 1e+30
        %v1930 = vsel %vm1630, %v1392, 1e+30
        %v1931 = vsel %vm1631, %v1393, 1e+30
        %v1932 = vsel %vm1632, %v1394, 1e+30
        %v1933 = vsel %vm1633, %v1395, 1e+30
        %v1934 = vsel %vm1634, %v1396, 1e+30
        %v1935 = vsel %vm1635, %v1397, 1e+30
        %v1936 = vsel %vm1636, %v1398, 1e+30
        %v1937 = vsel %vm1637, %v1399, 1e+30
        %v1938 = vsel %vm1638, %v1400, 1e+30
        %v1939 = vsel %vm1639, %v1401, 1e+30
        %v1940 = vsel %vm1640, %v1402, 1e+30
        %v1941 = vsel %vm1641, %v1403, 1e+30
        %v1942 = vsel %vm1642, %v1404, 1e+30
        %v1943 = vsel %vm1643, %v1405, 1e+30
        %v1944 = vsel %vm1644, %v1406, 1e+30
        %v1945 = vsel %vm1645, %v1407, 1e+30
        %v1946 = vsel %vm1646, %v1408, 1e+30
        %v1947 = vsel %vm1647, %v1409, 1e+30
        %v1948 = vsel %vm1648, %v1410, 1e+30
        %v1949 = vsel %vm1649, %v1411, 1e+30
        %v1950 = vsel %vm1650, %v1412, 1e+30
        %v1951 = vsel %vm1651, %v1413, 1e+30
        %v1952 = vsel %vm1652, %v1414, 1e+30
        %v1953 = vsel %vm1653, %v1415, 1e+30
        %v1954 = vsel %vm1654, %v1416, 1e+30
        %v1955 = vsel %vm1655, %v1417, 1e+30
        %v1956 = vsel %vm1656, %v1418, 1e+30
        %v1957 = vsel %vm1657, %v1419, 1e+30
        %v1958 = vsel %vm1658, %v1420, 1e+30
        %v1959 = vsel %vm1659, %v1421, 1e+30
        %v1960 = vsel %vm1660, %v1422, 1e+30
        %v1961 = vsel %vm1661, %v1423, 1e+30
        %v1962 = vsel %vm1662, %v1424, 1e+30
        %v1963 = vsel %vm1663, %v1425, 1e+30
        %v1964 = vmin.f32 %v1900, %v1901
        %1965 = vmin.xlane.f32.xlu0 %v1964
        %v1966 = vpop.xlane.xlu0 %1965
        %v1967 = vmin.f32 %v1902, %v1903
        %1968 = vmin.xlane.f32.xlu0 %v1967
        %v1969 = vpop.xlane.xlu0 %1968
        %v1970 = vmin.f32 %v1904, %v1905
        %1971 = vmin.xlane.f32.xlu0 %v1970
        %v1972 = vpop.xlane.xlu0 %1971
        %v1973 = vmin.f32 %v1906, %v1907
        %1974 = vmin.xlane.f32.xlu0 %v1973
        %v1975 = vpop.xlane.xlu0 %1974
        %v1976 = vmin.f32 %v1908, %v1909
        %1977 = vmin.xlane.f32.xlu0 %v1976
        %v1978 = vpop.xlane.xlu0 %1977
        %v1979 = vmin.f32 %v1910, %v1911
        %1980 = vmin.xlane.f32.xlu0 %v1979
        %v1981 = vpop.xlane.xlu0 %1980
        %v1982 = vmin.f32 %v1912, %v1913
        %1983 = vmin.xlane.f32.xlu0 %v1982
        %v1984 = vpop.xlane.xlu0 %1983
        %v1985 = vmin.f32 %v1914, %v1915
        %1986 = vmin.xlane.f32.xlu0 %v1985
        %v1987 = vpop.xlane.xlu0 %1986
        %v1988 = vmin.f32 %v1916, %v1917
        %1989 = vmin.xlane.f32.xlu0 %v1988
        %v1990 = vpop.xlane.xlu0 %1989
        %v1991 = vmin.f32 %v1918, %v1919
        %1992 = vmin.xlane.f32.xlu0 %v1991
        %v1993 = vpop.xlane.xlu0 %1992
        %v1994 = vmin.f32 %v1920, %v1921
        %1995 = vmin.xlane.f32.xlu0 %v1994
        %v1996 = vpop.xlane.xlu0 %1995
        %v1997 = vmin.f32 %v1922, %v1923
        %1998 = vmin.xlane.f32.xlu0 %v1997
        %v1999 = vpop.xlane.xlu0 %1998
        %v2000 = vmin.f32 %v1924, %v1925
        %2001 = vmin.xlane.f32.xlu0 %v2000
        %v2002 = vpop.xlane.xlu0 %2001
        %v2003 = vmin.f32 %v1926, %v1927
        %2004 = vmin.xlane.f32.xlu0 %v2003
        %v2005 = vpop.xlane.xlu0 %2004
        %v2006 = vmin.f32 %v1928, %v1929
        %2007 = vmin.xlane.f32.xlu0 %v2006
        %v2008 = vpop.xlane.xlu0 %2007
        %v2009 = vmin.f32 %v1930, %v1931
        %2010 = vmin.xlane.f32.xlu0 %v2009
        %v2011 = vpop.xlane.xlu0 %2010
        %v2012 = vmin.f32 %v1932, %v1933
        %2013 = vmin.xlane.f32.xlu0 %v2012
        %v2014 = vpop.xlane.xlu0 %2013
        %v2015 = vmin.f32 %v1934, %v1935
        %2016 = vmin.xlane.f32.xlu0 %v2015
        %v2017 = vpop.xlane.xlu0 %2016
        %v2018 = vmin.f32 %v1936, %v1937
        %2019 = vmin.xlane.f32.xlu0 %v2018
        %v2020 = vpop.xlane.xlu0 %2019
        %v2021 = vmin.f32 %v1938, %v1939
        %2022 = vmin.xlane.f32.xlu0 %v2021
        %v2023 = vpop.xlane.xlu0 %2022
        %v2024 = vmin.f32 %v1940, %v1941
        %2025 = vmin.xlane.f32.xlu0 %v2024
        %v2026 = vpop.xlane.xlu0 %2025
        %v2027 = vmin.f32 %v1942, %v1943
        %2028 = vmin.xlane.f32.xlu0 %v2027
        %v2029 = vpop.xlane.xlu0 %2028
        %v2030 = vmin.f32 %v1944, %v1945
        %2031 = vmin.xlane.f32.xlu0 %v2030
        %v2032 = vpop.xlane.xlu0 %2031
        %v2033 = vmin.f32 %v1946, %v1947
        %2034 = vmin.xlane.f32.xlu0 %v2033
        %v2035 = vpop.xlane.xlu0 %2034
        %v2036 = vmin.f32 %v1948, %v1949
        %2037 = vmin.xlane.f32.xlu0 %v2036
        %v2038 = vpop.xlane.xlu0 %2037
        %v2039 = vmin.f32 %v1950, %v1951
        %2040 = vmin.xlane.f32.xlu0 %v2039
        %v2041 = vpop.xlane.xlu0 %2040
        %v2042 = vmin.f32 %v1952, %v1953
        %2043 = vmin.xlane.f32.xlu0 %v2042
        %v2044 = vpop.xlane.xlu0 %2043
        %v2045 = vmin.f32 %v1954, %v1955
        %2046 = vmin.xlane.f32.xlu0 %v2045
        %v2047 = vpop.xlane.xlu0 %2046
        %v2048 = vmin.f32 %v1956, %v1957
        %2049 = vmin.xlane.f32.xlu0 %v2048
        %v2050 = vpop.xlane.xlu0 %2049
        %v2051 = vmin.f32 %v1958, %v1959
        %2052 = vmin.xlane.f32.xlu0 %v2051
        %v2053 = vpop.xlane.xlu0 %2052
        %v2054 = vmin.f32 %v1960, %v1961
        %2055 = vmin.xlane.f32.xlu0 %v2054
        %v2056 = vpop.xlane.xlu0 %2055
        %v2057 = vmin.f32 %v1962, %v1963
        %2058 = vmin.xlane.f32.xlu0 %v2057
        %v2059 = vpop.xlane.xlu0 %2058
        %v2060 = vsel %vm1836, %v1362, 1e+30
        %v2061 = vsel %vm1837, %v1363, 1e+30
        %v2062 = vsel %vm1838, %v1364, 1e+30
        %v2063 = vsel %vm1839, %v1365, 1e+30
        %v2064 = vsel %vm1840, %v1366, 1e+30
        %v2065 = vsel %vm1841, %v1367, 1e+30
        %v2066 = vsel %vm1842, %v1368, 1e+30
        %v2067 = vsel %vm1843, %v1369, 1e+30
        %v2068 = vsel %vm1844, %v1370, 1e+30
        %v2069 = vsel %vm1845, %v1371, 1e+30
        %v2070 = vsel %vm1846, %v1372, 1e+30
        %v2071 = vsel %vm1847, %v1373, 1e+30
        %v2072 = vsel %vm1848, %v1374, 1e+30
        %v2073 = vsel %vm1849, %v1375, 1e+30
        %v2074 = vsel %vm1850, %v1376, 1e+30
        %v2075 = vsel %vm1851, %v1377, 1e+30
        %v2076 = vsel %vm1852, %v1378, 1e+30
        %v2077 = vsel %vm1853, %v1379, 1e+30
        %v2078 = vsel %vm1854, %v1380, 1e+30
        %v2079 = vsel %vm1855, %v1381, 1e+30
        %v2080 = vsel %vm1856, %v1382, 1e+30
        %v2081 = vsel %vm1857, %v1383, 1e+30
        %v2082 = vsel %vm1858, %v1384, 1e+30
        %v2083 = vsel %vm1859, %v1385, 1e+30
        %v2084 = vsel %vm1860, %v1386, 1e+30
        %v2085 = vsel %vm1861, %v1387, 1e+30
        %v2086 = vsel %vm1862, %v1388, 1e+30
        %v2087 = vsel %vm1863, %v1389, 1e+30
        %v2088 = vsel %vm1864, %v1390, 1e+30
        %v2089 = vsel %vm1865, %v1391, 1e+30
        %v2090 = vsel %vm1866, %v1392, 1e+30
        %v2091 = vsel %vm1867, %v1393, 1e+30
        %v2092 = vsel %vm1868, %v1394, 1e+30
        %v2093 = vsel %vm1869, %v1395, 1e+30
        %v2094 = vsel %vm1870, %v1396, 1e+30
        %v2095 = vsel %vm1871, %v1397, 1e+30
        %v2096 = vsel %vm1872, %v1398, 1e+30
        %v2097 = vsel %vm1873, %v1399, 1e+30
        %v2098 = vsel %vm1874, %v1400, 1e+30
        %v2099 = vsel %vm1875, %v1401, 1e+30
        %v2100 = vsel %vm1876, %v1402, 1e+30
        %v2101 = vsel %vm1877, %v1403, 1e+30
        %v2102 = vsel %vm1878, %v1404, 1e+30
        %v2103 = vsel %vm1879, %v1405, 1e+30
        %v2104 = vsel %vm1880, %v1406, 1e+30
        %v2105 = vsel %vm1881, %v1407, 1e+30
        %v2106 = vsel %vm1882, %v1408, 1e+30
        %v2107 = vsel %vm1883, %v1409, 1e+30
        %v2108 = vsel %vm1884, %v1410, 1e+30
        %v2109 = vsel %vm1885, %v1411, 1e+30
        %v2110 = vsel %vm1886, %v1412, 1e+30
        %v2111 = vsel %vm1887, %v1413, 1e+30
        %v2112 = vsel %vm1888, %v1414, 1e+30
        %v2113 = vsel %vm1889, %v1415, 1e+30
        %v2114 = vsel %vm1890, %v1416, 1e+30
        %v2115 = vsel %vm1891, %v1417, 1e+30
        %v2116 = vsel %vm1892, %v1418, 1e+30
        %v2117 = vsel %vm1893, %v1419, 1e+30
        %v2118 = vsel %vm1894, %v1420, 1e+30
        %v2119 = vsel %vm1895, %v1421, 1e+30
        %v2120 = vsel %vm1896, %v1422, 1e+30
        %v2121 = vsel %vm1897, %v1423, 1e+30
        %v2122 = vsel %vm1898, %v1424, 1e+30
        %v2123 = vsel %vm1899, %v1425, 1e+30
        %v2124 = vmin.f32 %v2060, %v2061
        %2125 = vmin.xlane.f32.xlu0 %v2124
        %v2126 = vpop.xlane.xlu0 %2125
        %v2127 = vmin.f32 %v2062, %v2063
        %2128 = vmin.xlane.f32.xlu0 %v2127
        %v2129 = vpop.xlane.xlu0 %2128
        %v2130 = vmin.f32 %v2064, %v2065
        %2131 = vmin.xlane.f32.xlu0 %v2130
        %v2132 = vpop.xlane.xlu0 %2131
        %v2133 = vmin.f32 %v2066, %v2067
        %2134 = vmin.xlane.f32.xlu0 %v2133
        %v2135 = vpop.xlane.xlu0 %2134
        %v2136 = vmin.f32 %v2068, %v2069
        %2137 = vmin.xlane.f32.xlu0 %v2136
        %v2138 = vpop.xlane.xlu0 %2137
        %v2139 = vmin.f32 %v2070, %v2071
        %2140 = vmin.xlane.f32.xlu0 %v2139
        %v2141 = vpop.xlane.xlu0 %2140
        %v2142 = vmin.f32 %v2072, %v2073
        %2143 = vmin.xlane.f32.xlu0 %v2142
        %v2144 = vpop.xlane.xlu0 %2143
        %v2145 = vmin.f32 %v2074, %v2075
        %2146 = vmin.xlane.f32.xlu0 %v2145
        %v2147 = vpop.xlane.xlu0 %2146
        %v2148 = vmin.f32 %v2076, %v2077
        %2149 = vmin.xlane.f32.xlu0 %v2148
        %v2150 = vpop.xlane.xlu0 %2149
        %v2151 = vmin.f32 %v2078, %v2079
        %2152 = vmin.xlane.f32.xlu0 %v2151
        %v2153 = vpop.xlane.xlu0 %2152
        %v2154 = vmin.f32 %v2080, %v2081
        %2155 = vmin.xlane.f32.xlu0 %v2154
        %v2156 = vpop.xlane.xlu0 %2155
        %v2157 = vmin.f32 %v2082, %v2083
        %2158 = vmin.xlane.f32.xlu0 %v2157
        %v2159 = vpop.xlane.xlu0 %2158
        %v2160 = vmin.f32 %v2084, %v2085
        %2161 = vmin.xlane.f32.xlu0 %v2160
        %v2162 = vpop.xlane.xlu0 %2161
        %v2163 = vmin.f32 %v2086, %v2087
        %2164 = vmin.xlane.f32.xlu0 %v2163
        %v2165 = vpop.xlane.xlu0 %2164
        %v2166 = vmin.f32 %v2088, %v2089
        %2167 = vmin.xlane.f32.xlu0 %v2166
        %v2168 = vpop.xlane.xlu0 %2167
        %v2169 = vmin.f32 %v2090, %v2091
        %2170 = vmin.xlane.f32.xlu0 %v2169
        %v2171 = vpop.xlane.xlu0 %2170
        %v2172 = vmin.f32 %v2092, %v2093
        %2173 = vmin.xlane.f32.xlu0 %v2172
        %v2174 = vpop.xlane.xlu0 %2173
        %v2175 = vmin.f32 %v2094, %v2095
        %2176 = vmin.xlane.f32.xlu0 %v2175
        %v2177 = vpop.xlane.xlu0 %2176
        %v2178 = vmin.f32 %v2096, %v2097
        %2179 = vmin.xlane.f32.xlu0 %v2178
        %v2180 = vpop.xlane.xlu0 %2179
        %v2181 = vmin.f32 %v2098, %v2099
        %2182 = vmin.xlane.f32.xlu0 %v2181
        %v2183 = vpop.xlane.xlu0 %2182
        %v2184 = vmin.f32 %v2100, %v2101
        %2185 = vmin.xlane.f32.xlu0 %v2184
        %v2186 = vpop.xlane.xlu0 %2185
        %v2187 = vmin.f32 %v2102, %v2103
        %2188 = vmin.xlane.f32.xlu0 %v2187
        %v2189 = vpop.xlane.xlu0 %2188
        %v2190 = vmin.f32 %v2104, %v2105
        %2191 = vmin.xlane.f32.xlu0 %v2190
        %v2192 = vpop.xlane.xlu0 %2191
        %v2193 = vmin.f32 %v2106, %v2107
        %2194 = vmin.xlane.f32.xlu0 %v2193
        %v2195 = vpop.xlane.xlu0 %2194
        %v2196 = vmin.f32 %v2108, %v2109
        %2197 = vmin.xlane.f32.xlu0 %v2196
        %v2198 = vpop.xlane.xlu0 %2197
        %v2199 = vmin.f32 %v2110, %v2111
        %2200 = vmin.xlane.f32.xlu0 %v2199
        %v2201 = vpop.xlane.xlu0 %2200
        %v2202 = vmin.f32 %v2112, %v2113
        %2203 = vmin.xlane.f32.xlu0 %v2202
        %v2204 = vpop.xlane.xlu0 %2203
        %v2205 = vmin.f32 %v2114, %v2115
        %2206 = vmin.xlane.f32.xlu0 %v2205
        %v2207 = vpop.xlane.xlu0 %2206
        %v2208 = vmin.f32 %v2116, %v2117
        %2209 = vmin.xlane.f32.xlu0 %v2208
        %v2210 = vpop.xlane.xlu0 %2209
        %v2211 = vmin.f32 %v2118, %v2119
        %2212 = vmin.xlane.f32.xlu0 %v2211
        %v2213 = vpop.xlane.xlu0 %2212
        %v2214 = vmin.f32 %v2120, %v2121
        %2215 = vmin.xlane.f32.xlu0 %v2214
        %v2216 = vpop.xlane.xlu0 %2215
        %v2217 = vmin.f32 %v2122, %v2123
        %2218 = vmin.xlane.f32.xlu0 %v2217
        %v2219 = vpop.xlane.xlu0 %2218
        %v2220 = vmin.f32 %v1966, 1e+30
        %v2221 = vmin.f32 %v1969, 1e+30
        %v2222 = vmin.f32 %v1972, 1e+30
        %v2223 = vmin.f32 %v1975, 1e+30
        %v2224 = vmin.f32 %v1978, 1e+30
        %v2225 = vmin.f32 %v1981, 1e+30
        %v2226 = vmin.f32 %v1984, 1e+30
        %v2227 = vmin.f32 %v1987, 1e+30
        %v2228 = vmin.f32 %v1990, 1e+30
        %v2229 = vmin.f32 %v1993, 1e+30
        %v2230 = vmin.f32 %v1996, 1e+30
        %v2231 = vmin.f32 %v1999, 1e+30
        %v2232 = vmin.f32 %v2002, 1e+30
        %v2233 = vmin.f32 %v2005, 1e+30
        %v2234 = vmin.f32 %v2008, 1e+30
        %v2235 = vmin.f32 %v2011, 1e+30
        %v2236 = vmin.f32 %v2014, 1e+30
        %v2237 = vmin.f32 %v2017, 1e+30
        %v2238 = vmin.f32 %v2020, 1e+30
        %v2239 = vmin.f32 %v2023, 1e+30
        %v2240 = vmin.f32 %v2026, 1e+30
        %v2241 = vmin.f32 %v2029, 1e+30
        %v2242 = vmin.f32 %v2032, 1e+30
        %v2243 = vmin.f32 %v2035, 1e+30
        %v2244 = vmin.f32 %v2038, 1e+30
        %v2245 = vmin.f32 %v2041, 1e+30
        %v2246 = vmin.f32 %v2044, 1e+30
        %v2247 = vmin.f32 %v2047, 1e+30
        %v2248 = vmin.f32 %v2050, 1e+30
        %v2249 = vmin.f32 %v2053, 1e+30
        %v2250 = vmin.f32 %v2056, 1e+30
        %v2251 = vmin.f32 %v2059, 1e+30
        %v2252 = vmin.f32 %v2126, 1e+30
        %v2253 = vmin.f32 %v2129, 1e+30
        %v2254 = vmin.f32 %v2132, 1e+30
        %v2255 = vmin.f32 %v2135, 1e+30
        %v2256 = vmin.f32 %v2138, 1e+30
        %v2257 = vmin.f32 %v2141, 1e+30
        %v2258 = vmin.f32 %v2144, 1e+30
        %v2259 = vmin.f32 %v2147, 1e+30
        %v2260 = vmin.f32 %v2150, 1e+30
        %v2261 = vmin.f32 %v2153, 1e+30
        %v2262 = vmin.f32 %v2156, 1e+30
        %v2263 = vmin.f32 %v2159, 1e+30
        %v2264 = vmin.f32 %v2162, 1e+30
        %v2265 = vmin.f32 %v2165, 1e+30
        %v2266 = vmin.f32 %v2168, 1e+30
        %v2267 = vmin.f32 %v2171, 1e+30
        %v2268 = vmin.f32 %v2174, 1e+30
        %v2269 = vmin.f32 %v2177, 1e+30
        %v2270 = vmin.f32 %v2180, 1e+30
        %v2271 = vmin.f32 %v2183, 1e+30
        %v2272 = vmin.f32 %v2186, 1e+30
        %v2273 = vmin.f32 %v2189, 1e+30
        %v2274 = vmin.f32 %v2192, 1e+30
        %v2275 = vmin.f32 %v2195, 1e+30
        %v2276 = vmin.f32 %v2198, 1e+30
        %v2277 = vmin.f32 %v2201, 1e+30
        %v2278 = vmin.f32 %v2204, 1e+30
        %v2279 = vmin.f32 %v2207, 1e+30
        %v2280 = vmin.f32 %v2210, 1e+30
        %v2281 = vmin.f32 %v2213, 1e+30
        %v2282 = vmin.f32 %v2216, 1e+30
        %v2283 = vmin.f32 %v2219, 1e+30
        %v2284 = vrsqrt.pop %v2220
        %v2285 = vmul.f32 %v2220, %v2284
        %vm2286 = vcmp.eq.f32.partialorder %v2220, inf
        %v2287 = vsel %vm2286, %v2220, %v2285
        %vm2288 = vcmp.eq.f32.partialorder %v2220, 0.0
        %v2289 = vand.u32 %v2220, 2147483648
        %v2290 = vsel %vm2288, %v2289, %v2287
        %v2291 = vrsqrt.pop %v2221
        %v2292 = vmul.f32 %v2221, %v2291
        %vm2293 = vcmp.eq.f32.partialorder %v2221, inf
        %v2294 = vsel %vm2293, %v2221, %v2292
        %vm2295 = vcmp.eq.f32.partialorder %v2221, 0.0
        %v2296 = vand.u32 %v2221, 2147483648
        %v2297 = vsel %vm2295, %v2296, %v2294
        %v2298 = vrsqrt.pop %v2222
        %v2299 = vmul.f32 %v2222, %v2298
        %vm2300 = vcmp.eq.f32.partialorder %v2222, inf
        %v2301 = vsel %vm2300, %v2222, %v2299
        %vm2302 = vcmp.eq.f32.partialorder %v2222, 0.0
        %v2303 = vand.u32 %v2222, 2147483648
        %v2304 = vsel %vm2302, %v2303, %v2301
        %v2305 = vrsqrt.pop %v2223
        %v2306 = vmul.f32 %v2223, %v2305
        %vm2307 = vcmp.eq.f32.partialorder %v2223, inf
        %v2308 = vsel %vm2307, %v2223, %v2306
        %vm2309 = vcmp.eq.f32.partialorder %v2223, 0.0
        %v2310 = vand.u32 %v2223, 2147483648
        %v2311 = vsel %vm2309, %v2310, %v2308
        %v2312 = vrsqrt.pop %v2224
        %v2313 = vmul.f32 %v2224, %v2312
        %vm2314 = vcmp.eq.f32.partialorder %v2224, inf
        %v2315 = vsel %vm2314, %v2224, %v2313
        %vm2316 = vcmp.eq.f32.partialorder %v2224, 0.0
        %v2317 = vand.u32 %v2224, 2147483648
        %v2318 = vsel %vm2316, %v2317, %v2315
        %v2319 = vrsqrt.pop %v2225
        %v2320 = vmul.f32 %v2225, %v2319
        %vm2321 = vcmp.eq.f32.partialorder %v2225, inf
        %v2322 = vsel %vm2321, %v2225, %v2320
        %vm2323 = vcmp.eq.f32.partialorder %v2225, 0.0
        %v2324 = vand.u32 %v2225, 2147483648
        %v2325 = vsel %vm2323, %v2324, %v2322
        %v2326 = vrsqrt.pop %v2226
        %v2327 = vmul.f32 %v2226, %v2326
        %vm2328 = vcmp.eq.f32.partialorder %v2226, inf
        %v2329 = vsel %vm2328, %v2226, %v2327
        %vm2330 = vcmp.eq.f32.partialorder %v2226, 0.0
        %v2331 = vand.u32 %v2226, 2147483648
        %v2332 = vsel %vm2330, %v2331, %v2329
        %v2333 = vrsqrt.pop %v2227
        %v2334 = vmul.f32 %v2227, %v2333
        %vm2335 = vcmp.eq.f32.partialorder %v2227, inf
        %v2336 = vsel %vm2335, %v2227, %v2334
        %vm2337 = vcmp.eq.f32.partialorder %v2227, 0.0
        %v2338 = vand.u32 %v2227, 2147483648
        %v2339 = vsel %vm2337, %v2338, %v2336
        %v2340 = vrsqrt.pop %v2228
        %v2341 = vmul.f32 %v2228, %v2340
        %vm2342 = vcmp.eq.f32.partialorder %v2228, inf
        %v2343 = vsel %vm2342, %v2228, %v2341
        %vm2344 = vcmp.eq.f32.partialorder %v2228, 0.0
        %v2345 = vand.u32 %v2228, 2147483648
        %v2346 = vsel %vm2344, %v2345, %v2343
        %v2347 = vrsqrt.pop %v2229
        %v2348 = vmul.f32 %v2229, %v2347
        %vm2349 = vcmp.eq.f32.partialorder %v2229, inf
        %v2350 = vsel %vm2349, %v2229, %v2348
        %vm2351 = vcmp.eq.f32.partialorder %v2229, 0.0
        %v2352 = vand.u32 %v2229, 2147483648
        %v2353 = vsel %vm2351, %v2352, %v2350
        %v2354 = vrsqrt.pop %v2230
        %v2355 = vmul.f32 %v2230, %v2354
        %vm2356 = vcmp.eq.f32.partialorder %v2230, inf
        %v2357 = vsel %vm2356, %v2230, %v2355
        %vm2358 = vcmp.eq.f32.partialorder %v2230, 0.0
        %v2359 = vand.u32 %v2230, 2147483648
        %v2360 = vsel %vm2358, %v2359, %v2357
        %v2361 = vrsqrt.pop %v2231
        %v2362 = vmul.f32 %v2231, %v2361
        %vm2363 = vcmp.eq.f32.partialorder %v2231, inf
        %v2364 = vsel %vm2363, %v2231, %v2362
        %vm2365 = vcmp.eq.f32.partialorder %v2231, 0.0
        %v2366 = vand.u32 %v2231, 2147483648
        %v2367 = vsel %vm2365, %v2366, %v2364
        %v2368 = vrsqrt.pop %v2232
        %v2369 = vmul.f32 %v2232, %v2368
        %vm2370 = vcmp.eq.f32.partialorder %v2232, inf
        %v2371 = vsel %vm2370, %v2232, %v2369
        %vm2372 = vcmp.eq.f32.partialorder %v2232, 0.0
        %v2373 = vand.u32 %v2232, 2147483648
        %v2374 = vsel %vm2372, %v2373, %v2371
        %v2375 = vrsqrt.pop %v2233
        %v2376 = vmul.f32 %v2233, %v2375
        %vm2377 = vcmp.eq.f32.partialorder %v2233, inf
        %v2378 = vsel %vm2377, %v2233, %v2376
        %vm2379 = vcmp.eq.f32.partialorder %v2233, 0.0
        %v2380 = vand.u32 %v2233, 2147483648
        %v2381 = vsel %vm2379, %v2380, %v2378
        %v2382 = vrsqrt.pop %v2234
        %v2383 = vmul.f32 %v2234, %v2382
        %vm2384 = vcmp.eq.f32.partialorder %v2234, inf
        %v2385 = vsel %vm2384, %v2234, %v2383
        %vm2386 = vcmp.eq.f32.partialorder %v2234, 0.0
        %v2387 = vand.u32 %v2234, 2147483648
        %v2388 = vsel %vm2386, %v2387, %v2385
        %v2389 = vrsqrt.pop %v2235
        %v2390 = vmul.f32 %v2235, %v2389
        %vm2391 = vcmp.eq.f32.partialorder %v2235, inf
        %v2392 = vsel %vm2391, %v2235, %v2390
        %vm2393 = vcmp.eq.f32.partialorder %v2235, 0.0
        %v2394 = vand.u32 %v2235, 2147483648
        %v2395 = vsel %vm2393, %v2394, %v2392
        %v2396 = vrsqrt.pop %v2236
        %v2397 = vmul.f32 %v2236, %v2396
        %vm2398 = vcmp.eq.f32.partialorder %v2236, inf
        %v2399 = vsel %vm2398, %v2236, %v2397
        %vm2400 = vcmp.eq.f32.partialorder %v2236, 0.0
        %v2401 = vand.u32 %v2236, 2147483648
        %v2402 = vsel %vm2400, %v2401, %v2399
        %v2403 = vrsqrt.pop %v2237
        %v2404 = vmul.f32 %v2237, %v2403
        %vm2405 = vcmp.eq.f32.partialorder %v2237, inf
        %v2406 = vsel %vm2405, %v2237, %v2404
        %vm2407 = vcmp.eq.f32.partialorder %v2237, 0.0
        %v2408 = vand.u32 %v2237, 2147483648
        %v2409 = vsel %vm2407, %v2408, %v2406
        %v2410 = vrsqrt.pop %v2238
        %v2411 = vmul.f32 %v2238, %v2410
        %vm2412 = vcmp.eq.f32.partialorder %v2238, inf
        %v2413 = vsel %vm2412, %v2238, %v2411
        %vm2414 = vcmp.eq.f32.partialorder %v2238, 0.0
        %v2415 = vand.u32 %v2238, 2147483648
        %v2416 = vsel %vm2414, %v2415, %v2413
        %v2417 = vrsqrt.pop %v2239
        %v2418 = vmul.f32 %v2239, %v2417
        %vm2419 = vcmp.eq.f32.partialorder %v2239, inf
        %v2420 = vsel %vm2419, %v2239, %v2418
        %vm2421 = vcmp.eq.f32.partialorder %v2239, 0.0
        %v2422 = vand.u32 %v2239, 2147483648
        %v2423 = vsel %vm2421, %v2422, %v2420
        %v2424 = vrsqrt.pop %v2240
        %v2425 = vmul.f32 %v2240, %v2424
        %vm2426 = vcmp.eq.f32.partialorder %v2240, inf
        %v2427 = vsel %vm2426, %v2240, %v2425
        %vm2428 = vcmp.eq.f32.partialorder %v2240, 0.0
        %v2429 = vand.u32 %v2240, 2147483648
        %v2430 = vsel %vm2428, %v2429, %v2427
        %v2431 = vrsqrt.pop %v2241
        %v2432 = vmul.f32 %v2241, %v2431
        %vm2433 = vcmp.eq.f32.partialorder %v2241, inf
        %v2434 = vsel %vm2433, %v2241, %v2432
        %vm2435 = vcmp.eq.f32.partialorder %v2241, 0.0
        %v2436 = vand.u32 %v2241, 2147483648
        %v2437 = vsel %vm2435, %v2436, %v2434
        %v2438 = vrsqrt.pop %v2242
        %v2439 = vmul.f32 %v2242, %v2438
        %vm2440 = vcmp.eq.f32.partialorder %v2242, inf
        %v2441 = vsel %vm2440, %v2242, %v2439
        %vm2442 = vcmp.eq.f32.partialorder %v2242, 0.0
        %v2443 = vand.u32 %v2242, 2147483648
        %v2444 = vsel %vm2442, %v2443, %v2441
        %v2445 = vrsqrt.pop %v2243
        %v2446 = vmul.f32 %v2243, %v2445
        %vm2447 = vcmp.eq.f32.partialorder %v2243, inf
        %v2448 = vsel %vm2447, %v2243, %v2446
        %vm2449 = vcmp.eq.f32.partialorder %v2243, 0.0
        %v2450 = vand.u32 %v2243, 2147483648
        %v2451 = vsel %vm2449, %v2450, %v2448
        %v2452 = vrsqrt.pop %v2244
        %v2453 = vmul.f32 %v2244, %v2452
        %vm2454 = vcmp.eq.f32.partialorder %v2244, inf
        %v2455 = vsel %vm2454, %v2244, %v2453
        %vm2456 = vcmp.eq.f32.partialorder %v2244, 0.0
        %v2457 = vand.u32 %v2244, 2147483648
        %v2458 = vsel %vm2456, %v2457, %v2455
        %v2459 = vrsqrt.pop %v2245
        %v2460 = vmul.f32 %v2245, %v2459
        %vm2461 = vcmp.eq.f32.partialorder %v2245, inf
        %v2462 = vsel %vm2461, %v2245, %v2460
        %vm2463 = vcmp.eq.f32.partialorder %v2245, 0.0
        %v2464 = vand.u32 %v2245, 2147483648
        %v2465 = vsel %vm2463, %v2464, %v2462
        %v2466 = vrsqrt.pop %v2246
        %v2467 = vmul.f32 %v2246, %v2466
        %vm2468 = vcmp.eq.f32.partialorder %v2246, inf
        %v2469 = vsel %vm2468, %v2246, %v2467
        %vm2470 = vcmp.eq.f32.partialorder %v2246, 0.0
        %v2471 = vand.u32 %v2246, 2147483648
        %v2472 = vsel %vm2470, %v2471, %v2469
        %v2473 = vrsqrt.pop %v2247
        %v2474 = vmul.f32 %v2247, %v2473
        %vm2475 = vcmp.eq.f32.partialorder %v2247, inf
        %v2476 = vsel %vm2475, %v2247, %v2474
        %vm2477 = vcmp.eq.f32.partialorder %v2247, 0.0
        %v2478 = vand.u32 %v2247, 2147483648
        %v2479 = vsel %vm2477, %v2478, %v2476
        %v2480 = vrsqrt.pop %v2248
        %v2481 = vmul.f32 %v2248, %v2480
        %vm2482 = vcmp.eq.f32.partialorder %v2248, inf
        %v2483 = vsel %vm2482, %v2248, %v2481
        %vm2484 = vcmp.eq.f32.partialorder %v2248, 0.0
        %v2485 = vand.u32 %v2248, 2147483648
        %v2486 = vsel %vm2484, %v2485, %v2483
        %v2487 = vrsqrt.pop %v2249
        %v2488 = vmul.f32 %v2249, %v2487
        %vm2489 = vcmp.eq.f32.partialorder %v2249, inf
        %v2490 = vsel %vm2489, %v2249, %v2488
        %vm2491 = vcmp.eq.f32.partialorder %v2249, 0.0
        %v2492 = vand.u32 %v2249, 2147483648
        %v2493 = vsel %vm2491, %v2492, %v2490
        %v2494 = vrsqrt.pop %v2250
        %v2495 = vmul.f32 %v2250, %v2494
        %vm2496 = vcmp.eq.f32.partialorder %v2250, inf
        %v2497 = vsel %vm2496, %v2250, %v2495
        %vm2498 = vcmp.eq.f32.partialorder %v2250, 0.0
        %v2499 = vand.u32 %v2250, 2147483648
        %v2500 = vsel %vm2498, %v2499, %v2497
        %v2501 = vrsqrt.pop %v2251
        %v2502 = vmul.f32 %v2251, %v2501
        %vm2503 = vcmp.eq.f32.partialorder %v2251, inf
        %v2504 = vsel %vm2503, %v2251, %v2502
        %vm2505 = vcmp.eq.f32.partialorder %v2251, 0.0
        %v2506 = vand.u32 %v2251, 2147483648
        %v2507 = vsel %vm2505, %v2506, %v2504
        %v2508 = vstv %s940
        %v2509 = vmul.f32 %v2290, %v2508
        %v2510 = vmul.f32 %v2297, %v2508
        %v2511 = vmul.f32 %v2304, %v2508
        %v2512 = vmul.f32 %v2311, %v2508
        %v2513 = vmul.f32 %v2318, %v2508
        %v2514 = vmul.f32 %v2325, %v2508
        %v2515 = vmul.f32 %v2332, %v2508
        %v2516 = vmul.f32 %v2339, %v2508
        %v2517 = vmul.f32 %v2346, %v2508
        %v2518 = vmul.f32 %v2353, %v2508
        %v2519 = vmul.f32 %v2360, %v2508
        %v2520 = vmul.f32 %v2367, %v2508
        %v2521 = vmul.f32 %v2374, %v2508
        %v2522 = vmul.f32 %v2381, %v2508
        %v2523 = vmul.f32 %v2388, %v2508
        %v2524 = vmul.f32 %v2395, %v2508
        %v2525 = vmul.f32 %v2402, %v2508
        %v2526 = vmul.f32 %v2409, %v2508
        %v2527 = vmul.f32 %v2416, %v2508
        %v2528 = vmul.f32 %v2423, %v2508
        %v2529 = vmul.f32 %v2430, %v2508
        %v2530 = vmul.f32 %v2437, %v2508
        %v2531 = vmul.f32 %v2444, %v2508
        %v2532 = vmul.f32 %v2451, %v2508
        %v2533 = vmul.f32 %v2458, %v2508
        %v2534 = vmul.f32 %v2465, %v2508
        %v2535 = vmul.f32 %v2472, %v2508
        %v2536 = vmul.f32 %v2479, %v2508
        %v2537 = vmul.f32 %v2486, %v2508
        %v2538 = vmul.f32 %v2493, %v2508
        %v2539 = vmul.f32 %v2500, %v2508
        %v2540 = vmul.f32 %v2507, %v2508
        %v2541 = vrsqrt.pop %v2252
        %v2542 = vmul.f32 %v2252, %v2541
        %vm2543 = vcmp.eq.f32.partialorder %v2252, inf
        %v2544 = vsel %vm2543, %v2252, %v2542
        %vm2545 = vcmp.eq.f32.partialorder %v2252, 0.0
        %v2546 = vand.u32 %v2252, 2147483648
        %v2547 = vsel %vm2545, %v2546, %v2544
        %v2548 = vrsqrt.pop %v2253
        %v2549 = vmul.f32 %v2253, %v2548
        %vm2550 = vcmp.eq.f32.partialorder %v2253, inf
        %v2551 = vsel %vm2550, %v2253, %v2549
        %vm2552 = vcmp.eq.f32.partialorder %v2253, 0.0
        %v2553 = vand.u32 %v2253, 2147483648
        %v2554 = vsel %vm2552, %v2553, %v2551
        %v2555 = vrsqrt.pop %v2254
        %v2556 = vmul.f32 %v2254, %v2555
        %vm2557 = vcmp.eq.f32.partialorder %v2254, inf
        %v2558 = vsel %vm2557, %v2254, %v2556
        %vm2559 = vcmp.eq.f32.partialorder %v2254, 0.0
        %v2560 = vand.u32 %v2254, 2147483648
        %v2561 = vsel %vm2559, %v2560, %v2558
        %v2562 = vrsqrt.pop %v2255
        %v2563 = vmul.f32 %v2255, %v2562
        %vm2564 = vcmp.eq.f32.partialorder %v2255, inf
        %v2565 = vsel %vm2564, %v2255, %v2563
        %vm2566 = vcmp.eq.f32.partialorder %v2255, 0.0
        %v2567 = vand.u32 %v2255, 2147483648
        %v2568 = vsel %vm2566, %v2567, %v2565
        %v2569 = vrsqrt.pop %v2256
        %v2570 = vmul.f32 %v2256, %v2569
        %vm2571 = vcmp.eq.f32.partialorder %v2256, inf
        %v2572 = vsel %vm2571, %v2256, %v2570
        %vm2573 = vcmp.eq.f32.partialorder %v2256, 0.0
        %v2574 = vand.u32 %v2256, 2147483648
        %v2575 = vsel %vm2573, %v2574, %v2572
        %v2576 = vrsqrt.pop %v2257
        %v2577 = vmul.f32 %v2257, %v2576
        %vm2578 = vcmp.eq.f32.partialorder %v2257, inf
        %v2579 = vsel %vm2578, %v2257, %v2577
        %vm2580 = vcmp.eq.f32.partialorder %v2257, 0.0
        %v2581 = vand.u32 %v2257, 2147483648
        %v2582 = vsel %vm2580, %v2581, %v2579
        %v2583 = vrsqrt.pop %v2258
        %v2584 = vmul.f32 %v2258, %v2583
        %vm2585 = vcmp.eq.f32.partialorder %v2258, inf
        %v2586 = vsel %vm2585, %v2258, %v2584
        %vm2587 = vcmp.eq.f32.partialorder %v2258, 0.0
        %v2588 = vand.u32 %v2258, 2147483648
        %v2589 = vsel %vm2587, %v2588, %v2586
        %v2590 = vrsqrt.pop %v2259
        %v2591 = vmul.f32 %v2259, %v2590
        %vm2592 = vcmp.eq.f32.partialorder %v2259, inf
        %v2593 = vsel %vm2592, %v2259, %v2591
        %vm2594 = vcmp.eq.f32.partialorder %v2259, 0.0
        %v2595 = vand.u32 %v2259, 2147483648
        %v2596 = vsel %vm2594, %v2595, %v2593
        %v2597 = vrsqrt.pop %v2260
        %v2598 = vmul.f32 %v2260, %v2597
        %vm2599 = vcmp.eq.f32.partialorder %v2260, inf
        %v2600 = vsel %vm2599, %v2260, %v2598
        %vm2601 = vcmp.eq.f32.partialorder %v2260, 0.0
        %v2602 = vand.u32 %v2260, 2147483648
        %v2603 = vsel %vm2601, %v2602, %v2600
        %v2604 = vrsqrt.pop %v2261
        %v2605 = vmul.f32 %v2261, %v2604
        %vm2606 = vcmp.eq.f32.partialorder %v2261, inf
        %v2607 = vsel %vm2606, %v2261, %v2605
        %vm2608 = vcmp.eq.f32.partialorder %v2261, 0.0
        %v2609 = vand.u32 %v2261, 2147483648
        %v2610 = vsel %vm2608, %v2609, %v2607
        %v2611 = vrsqrt.pop %v2262
        %v2612 = vmul.f32 %v2262, %v2611
        %vm2613 = vcmp.eq.f32.partialorder %v2262, inf
        %v2614 = vsel %vm2613, %v2262, %v2612
        %vm2615 = vcmp.eq.f32.partialorder %v2262, 0.0
        %v2616 = vand.u32 %v2262, 2147483648
        %v2617 = vsel %vm2615, %v2616, %v2614
        %v2618 = vrsqrt.pop %v2263
        %v2619 = vmul.f32 %v2263, %v2618
        %vm2620 = vcmp.eq.f32.partialorder %v2263, inf
        %v2621 = vsel %vm2620, %v2263, %v2619
        %vm2622 = vcmp.eq.f32.partialorder %v2263, 0.0
        %v2623 = vand.u32 %v2263, 2147483648
        %v2624 = vsel %vm2622, %v2623, %v2621
        %v2625 = vrsqrt.pop %v2264
        %v2626 = vmul.f32 %v2264, %v2625
        %vm2627 = vcmp.eq.f32.partialorder %v2264, inf
        %v2628 = vsel %vm2627, %v2264, %v2626
        %vm2629 = vcmp.eq.f32.partialorder %v2264, 0.0
        %v2630 = vand.u32 %v2264, 2147483648
        %v2631 = vsel %vm2629, %v2630, %v2628
        %v2632 = vrsqrt.pop %v2265
        %v2633 = vmul.f32 %v2265, %v2632
        %vm2634 = vcmp.eq.f32.partialorder %v2265, inf
        %v2635 = vsel %vm2634, %v2265, %v2633
        %vm2636 = vcmp.eq.f32.partialorder %v2265, 0.0
        %v2637 = vand.u32 %v2265, 2147483648
        %v2638 = vsel %vm2636, %v2637, %v2635
        %v2639 = vrsqrt.pop %v2266
        %v2640 = vmul.f32 %v2266, %v2639
        %vm2641 = vcmp.eq.f32.partialorder %v2266, inf
        %v2642 = vsel %vm2641, %v2266, %v2640
        %vm2643 = vcmp.eq.f32.partialorder %v2266, 0.0
        %v2644 = vand.u32 %v2266, 2147483648
        %v2645 = vsel %vm2643, %v2644, %v2642
        %v2646 = vrsqrt.pop %v2267
        %v2647 = vmul.f32 %v2267, %v2646
        %vm2648 = vcmp.eq.f32.partialorder %v2267, inf
        %v2649 = vsel %vm2648, %v2267, %v2647
        %vm2650 = vcmp.eq.f32.partialorder %v2267, 0.0
        %v2651 = vand.u32 %v2267, 2147483648
        %v2652 = vsel %vm2650, %v2651, %v2649
        %v2653 = vrsqrt.pop %v2268
        %v2654 = vmul.f32 %v2268, %v2653
        %vm2655 = vcmp.eq.f32.partialorder %v2268, inf
        %v2656 = vsel %vm2655, %v2268, %v2654
        %vm2657 = vcmp.eq.f32.partialorder %v2268, 0.0
        %v2658 = vand.u32 %v2268, 2147483648
        %v2659 = vsel %vm2657, %v2658, %v2656
        %v2660 = vrsqrt.pop %v2269
        %v2661 = vmul.f32 %v2269, %v2660
        %vm2662 = vcmp.eq.f32.partialorder %v2269, inf
        %v2663 = vsel %vm2662, %v2269, %v2661
        %vm2664 = vcmp.eq.f32.partialorder %v2269, 0.0
        %v2665 = vand.u32 %v2269, 2147483648
        %v2666 = vsel %vm2664, %v2665, %v2663
        %v2667 = vrsqrt.pop %v2270
        %v2668 = vmul.f32 %v2270, %v2667
        %vm2669 = vcmp.eq.f32.partialorder %v2270, inf
        %v2670 = vsel %vm2669, %v2270, %v2668
        %vm2671 = vcmp.eq.f32.partialorder %v2270, 0.0
        %v2672 = vand.u32 %v2270, 2147483648
        %v2673 = vsel %vm2671, %v2672, %v2670
        %v2674 = vrsqrt.pop %v2271
        %v2675 = vmul.f32 %v2271, %v2674
        %vm2676 = vcmp.eq.f32.partialorder %v2271, inf
        %v2677 = vsel %vm2676, %v2271, %v2675
        %vm2678 = vcmp.eq.f32.partialorder %v2271, 0.0
        %v2679 = vand.u32 %v2271, 2147483648
        %v2680 = vsel %vm2678, %v2679, %v2677
        %v2681 = vrsqrt.pop %v2272
        %v2682 = vmul.f32 %v2272, %v2681
        %vm2683 = vcmp.eq.f32.partialorder %v2272, inf
        %v2684 = vsel %vm2683, %v2272, %v2682
        %vm2685 = vcmp.eq.f32.partialorder %v2272, 0.0
        %v2686 = vand.u32 %v2272, 2147483648
        %v2687 = vsel %vm2685, %v2686, %v2684
        %v2688 = vrsqrt.pop %v2273
        %v2689 = vmul.f32 %v2273, %v2688
        %vm2690 = vcmp.eq.f32.partialorder %v2273, inf
        %v2691 = vsel %vm2690, %v2273, %v2689
        %vm2692 = vcmp.eq.f32.partialorder %v2273, 0.0
        %v2693 = vand.u32 %v2273, 2147483648
        %v2694 = vsel %vm2692, %v2693, %v2691
        %v2695 = vrsqrt.pop %v2274
        %v2696 = vmul.f32 %v2274, %v2695
        %vm2697 = vcmp.eq.f32.partialorder %v2274, inf
        %v2698 = vsel %vm2697, %v2274, %v2696
        %vm2699 = vcmp.eq.f32.partialorder %v2274, 0.0
        %v2700 = vand.u32 %v2274, 2147483648
        %v2701 = vsel %vm2699, %v2700, %v2698
        %v2702 = vrsqrt.pop %v2275
        %v2703 = vmul.f32 %v2275, %v2702
        %vm2704 = vcmp.eq.f32.partialorder %v2275, inf
        %v2705 = vsel %vm2704, %v2275, %v2703
        %vm2706 = vcmp.eq.f32.partialorder %v2275, 0.0
        %v2707 = vand.u32 %v2275, 2147483648
        %v2708 = vsel %vm2706, %v2707, %v2705
        %v2709 = vrsqrt.pop %v2276
        %v2710 = vmul.f32 %v2276, %v2709
        %vm2711 = vcmp.eq.f32.partialorder %v2276, inf
        %v2712 = vsel %vm2711, %v2276, %v2710
        %vm2713 = vcmp.eq.f32.partialorder %v2276, 0.0
        %v2714 = vand.u32 %v2276, 2147483648
        %v2715 = vsel %vm2713, %v2714, %v2712
        %v2716 = vrsqrt.pop %v2277
        %v2717 = vmul.f32 %v2277, %v2716
        %vm2718 = vcmp.eq.f32.partialorder %v2277, inf
        %v2719 = vsel %vm2718, %v2277, %v2717
        %vm2720 = vcmp.eq.f32.partialorder %v2277, 0.0
        %v2721 = vand.u32 %v2277, 2147483648
        %v2722 = vsel %vm2720, %v2721, %v2719
        %v2723 = vrsqrt.pop %v2278
        %v2724 = vmul.f32 %v2278, %v2723
        %vm2725 = vcmp.eq.f32.partialorder %v2278, inf
        %v2726 = vsel %vm2725, %v2278, %v2724
        %vm2727 = vcmp.eq.f32.partialorder %v2278, 0.0
        %v2728 = vand.u32 %v2278, 2147483648
        %v2729 = vsel %vm2727, %v2728, %v2726
        %v2730 = vrsqrt.pop %v2279
        %v2731 = vmul.f32 %v2279, %v2730
        %vm2732 = vcmp.eq.f32.partialorder %v2279, inf
        %v2733 = vsel %vm2732, %v2279, %v2731
        %vm2734 = vcmp.eq.f32.partialorder %v2279, 0.0
        %v2735 = vand.u32 %v2279, 2147483648
        %v2736 = vsel %vm2734, %v2735, %v2733
        %v2737 = vrsqrt.pop %v2280
        %v2738 = vmul.f32 %v2280, %v2737
        %vm2739 = vcmp.eq.f32.partialorder %v2280, inf
        %v2740 = vsel %vm2739, %v2280, %v2738
        %vm2741 = vcmp.eq.f32.partialorder %v2280, 0.0
        %v2742 = vand.u32 %v2280, 2147483648
        %v2743 = vsel %vm2741, %v2742, %v2740
        %v2744 = vrsqrt.pop %v2281
        %v2745 = vmul.f32 %v2281, %v2744
        %vm2746 = vcmp.eq.f32.partialorder %v2281, inf
        %v2747 = vsel %vm2746, %v2281, %v2745
        %vm2748 = vcmp.eq.f32.partialorder %v2281, 0.0
        %v2749 = vand.u32 %v2281, 2147483648
        %v2750 = vsel %vm2748, %v2749, %v2747
        %v2751 = vrsqrt.pop %v2282
        %v2752 = vmul.f32 %v2282, %v2751
        %vm2753 = vcmp.eq.f32.partialorder %v2282, inf
        %v2754 = vsel %vm2753, %v2282, %v2752
        %vm2755 = vcmp.eq.f32.partialorder %v2282, 0.0
        %v2756 = vand.u32 %v2282, 2147483648
        %v2757 = vsel %vm2755, %v2756, %v2754
        %v2758 = vrsqrt.pop %v2283
        %v2759 = vmul.f32 %v2283, %v2758
        %vm2760 = vcmp.eq.f32.partialorder %v2283, inf
        %v2761 = vsel %vm2760, %v2283, %v2759
        %vm2762 = vcmp.eq.f32.partialorder %v2283, 0.0
        %v2763 = vand.u32 %v2283, 2147483648
        %v2764 = vsel %vm2762, %v2763, %v2761
        %v2765 = vstv %s944
        %v2766 = vmul.f32 %v2547, %v2765
        %v2767 = vmul.f32 %v2554, %v2765
        %v2768 = vmul.f32 %v2561, %v2765
        %v2769 = vmul.f32 %v2568, %v2765
        %v2770 = vmul.f32 %v2575, %v2765
        %v2771 = vmul.f32 %v2582, %v2765
        %v2772 = vmul.f32 %v2589, %v2765
        %v2773 = vmul.f32 %v2596, %v2765
        %v2774 = vmul.f32 %v2603, %v2765
        %v2775 = vmul.f32 %v2610, %v2765
        %v2776 = vmul.f32 %v2617, %v2765
        %v2777 = vmul.f32 %v2624, %v2765
        %v2778 = vmul.f32 %v2631, %v2765
        %v2779 = vmul.f32 %v2638, %v2765
        %v2780 = vmul.f32 %v2645, %v2765
        %v2781 = vmul.f32 %v2652, %v2765
        %v2782 = vmul.f32 %v2659, %v2765
        %v2783 = vmul.f32 %v2666, %v2765
        %v2784 = vmul.f32 %v2673, %v2765
        %v2785 = vmul.f32 %v2680, %v2765
        %v2786 = vmul.f32 %v2687, %v2765
        %v2787 = vmul.f32 %v2694, %v2765
        %v2788 = vmul.f32 %v2701, %v2765
        %v2789 = vmul.f32 %v2708, %v2765
        %v2790 = vmul.f32 %v2715, %v2765
        %v2791 = vmul.f32 %v2722, %v2765
        %v2792 = vmul.f32 %v2729, %v2765
        %v2793 = vmul.f32 %v2736, %v2765
        %v2794 = vmul.f32 %v2743, %v2765
        %v2795 = vmul.f32 %v2750, %v2765
        %v2796 = vmul.f32 %v2757, %v2765
        %v2797 = vmul.f32 %v2764, %v2765
        %v2798 = vsub.f32 %v809, %v841
        %v2799 = vsub.f32 %v810, %v842
        %v2800 = vsub.f32 %v811, %v843
        %v2801 = vsub.f32 %v812, %v844
        %v2802 = vsub.f32 %v813, %v845
        %v2803 = vsub.f32 %v814, %v846
        %v2804 = vsub.f32 %v815, %v847
        %v2805 = vsub.f32 %v816, %v848
        %v2806 = vsub.f32 %v817, %v849
        %v2807 = vsub.f32 %v818, %v850
        %v2808 = vsub.f32 %v819, %v851
        %v2809 = vsub.f32 %v820, %v852
        %v2810 = vsub.f32 %v821, %v853
        %v2811 = vsub.f32 %v822, %v854
        %v2812 = vsub.f32 %v823, %v855
        %v2813 = vsub.f32 %v824, %v856
        %v2814 = vsub.f32 %v825, %v857
        %v2815 = vsub.f32 %v826, %v858
        %v2816 = vsub.f32 %v827, %v859
        %v2817 = vsub.f32 %v828, %v860
        %v2818 = vsub.f32 %v829, %v861
        %v2819 = vsub.f32 %v830, %v862
        %v2820 = vsub.f32 %v831, %v863
        %v2821 = vsub.f32 %v832, %v864
        %v2822 = vsub.f32 %v833, %v865
        %v2823 = vsub.f32 %v834, %v866
        %v2824 = vsub.f32 %v835, %v867
        %v2825 = vsub.f32 %v836, %v868
        %v2826 = vsub.f32 %v837, %v869
        %v2827 = vsub.f32 %v838, %v870
        %v2828 = vsub.f32 %v839, %v871
        %v2829 = vsub.f32 %v840, %v872
        %v2830 = vmul.f32 %v2798, %v2798
        %v2831 = vmul.f32 %v2799, %v2799
        %v2832 = vmul.f32 %v2800, %v2800
        %v2833 = vmul.f32 %v2801, %v2801
        %v2834 = vmul.f32 %v2802, %v2802
        %v2835 = vmul.f32 %v2803, %v2803
        %v2836 = vmul.f32 %v2804, %v2804
        %v2837 = vmul.f32 %v2805, %v2805
        %v2838 = vmul.f32 %v2806, %v2806
        %v2839 = vmul.f32 %v2807, %v2807
        %v2840 = vmul.f32 %v2808, %v2808
        %v2841 = vmul.f32 %v2809, %v2809
        %v2842 = vmul.f32 %v2810, %v2810
        %v2843 = vmul.f32 %v2811, %v2811
        %v2844 = vmul.f32 %v2812, %v2812
        %v2845 = vmul.f32 %v2813, %v2813
        %v2846 = vmul.f32 %v2814, %v2814
        %v2847 = vmul.f32 %v2815, %v2815
        %v2848 = vmul.f32 %v2816, %v2816
        %v2849 = vmul.f32 %v2817, %v2817
        %v2850 = vmul.f32 %v2818, %v2818
        %v2851 = vmul.f32 %v2819, %v2819
        %v2852 = vmul.f32 %v2820, %v2820
        %v2853 = vmul.f32 %v2821, %v2821
        %v2854 = vmul.f32 %v2822, %v2822
        %v2855 = vmul.f32 %v2823, %v2823
        %v2856 = vmul.f32 %v2824, %v2824
        %v2857 = vmul.f32 %v2825, %v2825
        %v2858 = vmul.f32 %v2826, %v2826
        %v2859 = vmul.f32 %v2827, %v2827
        %v2860 = vmul.f32 %v2828, %v2828
        %v2861 = vmul.f32 %v2829, %v2829
        %v2862 = vmul.f32 %v2509, %v2509
        %v2863 = vmul.f32 %v2510, %v2510
        %v2864 = vmul.f32 %v2511, %v2511
        %v2865 = vmul.f32 %v2512, %v2512
        %v2866 = vmul.f32 %v2513, %v2513
        %v2867 = vmul.f32 %v2514, %v2514
        %v2868 = vmul.f32 %v2515, %v2515
        %v2869 = vmul.f32 %v2516, %v2516
        %v2870 = vmul.f32 %v2517, %v2517
        %v2871 = vmul.f32 %v2518, %v2518
        %v2872 = vmul.f32 %v2519, %v2519
        %v2873 = vmul.f32 %v2520, %v2520
        %v2874 = vmul.f32 %v2521, %v2521
        %v2875 = vmul.f32 %v2522, %v2522
        %v2876 = vmul.f32 %v2523, %v2523
        %v2877 = vmul.f32 %v2524, %v2524
        %v2878 = vmul.f32 %v2525, %v2525
        %v2879 = vmul.f32 %v2526, %v2526
        %v2880 = vmul.f32 %v2527, %v2527
        %v2881 = vmul.f32 %v2528, %v2528
        %v2882 = vmul.f32 %v2529, %v2529
        %v2883 = vmul.f32 %v2530, %v2530
        %v2884 = vmul.f32 %v2531, %v2531
        %v2885 = vmul.f32 %v2532, %v2532
        %v2886 = vmul.f32 %v2533, %v2533
        %v2887 = vmul.f32 %v2534, %v2534
        %v2888 = vmul.f32 %v2535, %v2535
        %v2889 = vmul.f32 %v2536, %v2536
        %v2890 = vmul.f32 %v2537, %v2537
        %v2891 = vmul.f32 %v2538, %v2538
        %v2892 = vmul.f32 %v2539, %v2539
        %v2893 = vmul.f32 %v2540, %v2540
        %v2894 = vmul.f32 %v2766, %v2766
        %v2895 = vmul.f32 %v2767, %v2767
        %v2896 = vmul.f32 %v2768, %v2768
        %v2897 = vmul.f32 %v2769, %v2769
        %v2898 = vmul.f32 %v2770, %v2770
        %v2899 = vmul.f32 %v2771, %v2771
        %v2900 = vmul.f32 %v2772, %v2772
        %v2901 = vmul.f32 %v2773, %v2773
        %v2902 = vmul.f32 %v2774, %v2774
        %v2903 = vmul.f32 %v2775, %v2775
        %v2904 = vmul.f32 %v2776, %v2776
        %v2905 = vmul.f32 %v2777, %v2777
        %v2906 = vmul.f32 %v2778, %v2778
        %v2907 = vmul.f32 %v2779, %v2779
        %v2908 = vmul.f32 %v2780, %v2780
        %v2909 = vmul.f32 %v2781, %v2781
        %v2910 = vmul.f32 %v2782, %v2782
        %v2911 = vmul.f32 %v2783, %v2783
        %v2912 = vmul.f32 %v2784, %v2784
        %v2913 = vmul.f32 %v2785, %v2785
        %v2914 = vmul.f32 %v2786, %v2786
        %v2915 = vmul.f32 %v2787, %v2787
        %v2916 = vmul.f32 %v2788, %v2788
        %v2917 = vmul.f32 %v2789, %v2789
        %v2918 = vmul.f32 %v2790, %v2790
        %v2919 = vmul.f32 %v2791, %v2791
        %v2920 = vmul.f32 %v2792, %v2792
        %v2921 = vmul.f32 %v2793, %v2793
        %v2922 = vmul.f32 %v2794, %v2794
        %v2923 = vmul.f32 %v2795, %v2795
        %v2924 = vmul.f32 %v2796, %v2796
        %v2925 = vmul.f32 %v2797, %v2797
        %v2926 = vadd.f32 %v2862, %v2894
        %v2927 = vadd.f32 %v2863, %v2895
        %v2928 = vadd.f32 %v2864, %v2896
        %v2929 = vadd.f32 %v2865, %v2897
        %v2930 = vadd.f32 %v2866, %v2898
        %v2931 = vadd.f32 %v2867, %v2899
        %v2932 = vadd.f32 %v2868, %v2900
        %v2933 = vadd.f32 %v2869, %v2901
        %v2934 = vadd.f32 %v2870, %v2902
        %v2935 = vadd.f32 %v2871, %v2903
        %v2936 = vadd.f32 %v2872, %v2904
        %v2937 = vadd.f32 %v2873, %v2905
        %v2938 = vadd.f32 %v2874, %v2906
        %v2939 = vadd.f32 %v2875, %v2907
        %v2940 = vadd.f32 %v2876, %v2908
        %v2941 = vadd.f32 %v2877, %v2909
        %v2942 = vadd.f32 %v2878, %v2910
        %v2943 = vadd.f32 %v2879, %v2911
        %v2944 = vadd.f32 %v2880, %v2912
        %v2945 = vadd.f32 %v2881, %v2913
        %v2946 = vadd.f32 %v2882, %v2914
        %v2947 = vadd.f32 %v2883, %v2915
        %v2948 = vadd.f32 %v2884, %v2916
        %v2949 = vadd.f32 %v2885, %v2917
        %v2950 = vadd.f32 %v2886, %v2918
        %v2951 = vadd.f32 %v2887, %v2919
        %v2952 = vadd.f32 %v2888, %v2920
        %v2953 = vadd.f32 %v2889, %v2921
        %v2954 = vadd.f32 %v2890, %v2922
        %v2955 = vadd.f32 %v2891, %v2923
        %v2956 = vadd.f32 %v2892, %v2924
        %v2957 = vadd.f32 %v2893, %v2925
        %v2958 = vmul.f32 %v2830, %v2926
        %v2959 = vmul.f32 %v2831, %v2927
        %v2960 = vmul.f32 %v2832, %v2928
        %v2961 = vmul.f32 %v2833, %v2929
        %v2962 = vmul.f32 %v2834, %v2930
        %v2963 = vmul.f32 %v2835, %v2931
        %v2964 = vmul.f32 %v2836, %v2932
        %v2965 = vmul.f32 %v2837, %v2933
        %v2966 = vmul.f32 %v2838, %v2934
        %v2967 = vmul.f32 %v2839, %v2935
        %v2968 = vmul.f32 %v2840, %v2936
        %v2969 = vmul.f32 %v2841, %v2937
        %v2970 = vmul.f32 %v2842, %v2938
        %v2971 = vmul.f32 %v2843, %v2939
        %v2972 = vmul.f32 %v2844, %v2940
        %v2973 = vmul.f32 %v2845, %v2941
        %v2974 = vmul.f32 %v2846, %v2942
        %v2975 = vmul.f32 %v2847, %v2943
        %v2976 = vmul.f32 %v2848, %v2944
        %v2977 = vmul.f32 %v2849, %v2945
        %v2978 = vmul.f32 %v2850, %v2946
        %v2979 = vmul.f32 %v2851, %v2947
        %v2980 = vmul.f32 %v2852, %v2948
        %v2981 = vmul.f32 %v2853, %v2949
        %v2982 = vmul.f32 %v2854, %v2950
        %v2983 = vmul.f32 %v2855, %v2951
        %v2984 = vmul.f32 %v2856, %v2952
        %v2985 = vmul.f32 %v2857, %v2953
        %v2986 = vmul.f32 %v2858, %v2954
        %v2987 = vmul.f32 %v2859, %v2955
        %v2988 = vmul.f32 %v2860, %v2956
        %v2989 = vmul.f32 %v2861, %v2957
        %v2990 = vrsqrt.pop %v2958
        %v2991 = vmul.f32 %v2958, %v2990
        %vm2992 = vcmp.eq.f32.partialorder %v2958, inf
        %v2993 = vsel %vm2992, %v2958, %v2991
        %vm2994 = vcmp.eq.f32.partialorder %v2958, 0.0
        %v2995 = vand.u32 %v2958, 2147483648
        %v2996 = vsel %vm2994, %v2995, %v2993
        %v2997 = vrsqrt.pop %v2959
        %v2998 = vmul.f32 %v2959, %v2997
        %vm2999 = vcmp.eq.f32.partialorder %v2959, inf
        %v3000 = vsel %vm2999, %v2959, %v2998
        %vm3001 = vcmp.eq.f32.partialorder %v2959, 0.0
        %v3002 = vand.u32 %v2959, 2147483648
        %v3003 = vsel %vm3001, %v3002, %v3000
        %v3004 = vrsqrt.pop %v2960
        %v3005 = vmul.f32 %v2960, %v3004
        %vm3006 = vcmp.eq.f32.partialorder %v2960, inf
        %v3007 = vsel %vm3006, %v2960, %v3005
        %vm3008 = vcmp.eq.f32.partialorder %v2960, 0.0
        %v3009 = vand.u32 %v2960, 2147483648
        %v3010 = vsel %vm3008, %v3009, %v3007
        %v3011 = vrsqrt.pop %v2961
        %v3012 = vmul.f32 %v2961, %v3011
        %vm3013 = vcmp.eq.f32.partialorder %v2961, inf
        %v3014 = vsel %vm3013, %v2961, %v3012
        %vm3015 = vcmp.eq.f32.partialorder %v2961, 0.0
        %v3016 = vand.u32 %v2961, 2147483648
        %v3017 = vsel %vm3015, %v3016, %v3014
        %v3018 = vrsqrt.pop %v2962
        %v3019 = vmul.f32 %v2962, %v3018
        %vm3020 = vcmp.eq.f32.partialorder %v2962, inf
        %v3021 = vsel %vm3020, %v2962, %v3019
        %vm3022 = vcmp.eq.f32.partialorder %v2962, 0.0
        %v3023 = vand.u32 %v2962, 2147483648
        %v3024 = vsel %vm3022, %v3023, %v3021
        %v3025 = vrsqrt.pop %v2963
        %v3026 = vmul.f32 %v2963, %v3025
        %vm3027 = vcmp.eq.f32.partialorder %v2963, inf
        %v3028 = vsel %vm3027, %v2963, %v3026
        %vm3029 = vcmp.eq.f32.partialorder %v2963, 0.0
        %v3030 = vand.u32 %v2963, 2147483648
        %v3031 = vsel %vm3029, %v3030, %v3028
        %v3032 = vrsqrt.pop %v2964
        %v3033 = vmul.f32 %v2964, %v3032
        %vm3034 = vcmp.eq.f32.partialorder %v2964, inf
        %v3035 = vsel %vm3034, %v2964, %v3033
        %vm3036 = vcmp.eq.f32.partialorder %v2964, 0.0
        %v3037 = vand.u32 %v2964, 2147483648
        %v3038 = vsel %vm3036, %v3037, %v3035
        %v3039 = vrsqrt.pop %v2965
        %v3040 = vmul.f32 %v2965, %v3039
        %vm3041 = vcmp.eq.f32.partialorder %v2965, inf
        %v3042 = vsel %vm3041, %v2965, %v3040
        %vm3043 = vcmp.eq.f32.partialorder %v2965, 0.0
        %v3044 = vand.u32 %v2965, 2147483648
        %v3045 = vsel %vm3043, %v3044, %v3042
        %v3046 = vrsqrt.pop %v2966
        %v3047 = vmul.f32 %v2966, %v3046
        %vm3048 = vcmp.eq.f32.partialorder %v2966, inf
        %v3049 = vsel %vm3048, %v2966, %v3047
        %vm3050 = vcmp.eq.f32.partialorder %v2966, 0.0
        %v3051 = vand.u32 %v2966, 2147483648
        %v3052 = vsel %vm3050, %v3051, %v3049
        %v3053 = vrsqrt.pop %v2967
        %v3054 = vmul.f32 %v2967, %v3053
        %vm3055 = vcmp.eq.f32.partialorder %v2967, inf
        %v3056 = vsel %vm3055, %v2967, %v3054
        %vm3057 = vcmp.eq.f32.partialorder %v2967, 0.0
        %v3058 = vand.u32 %v2967, 2147483648
        %v3059 = vsel %vm3057, %v3058, %v3056
        %v3060 = vrsqrt.pop %v2968
        %v3061 = vmul.f32 %v2968, %v3060
        %vm3062 = vcmp.eq.f32.partialorder %v2968, inf
        %v3063 = vsel %vm3062, %v2968, %v3061
        %vm3064 = vcmp.eq.f32.partialorder %v2968, 0.0
        %v3065 = vand.u32 %v2968, 2147483648
        %v3066 = vsel %vm3064, %v3065, %v3063
        %v3067 = vrsqrt.pop %v2969
        %v3068 = vmul.f32 %v2969, %v3067
        %vm3069 = vcmp.eq.f32.partialorder %v2969, inf
        %v3070 = vsel %vm3069, %v2969, %v3068
        %vm3071 = vcmp.eq.f32.partialorder %v2969, 0.0
        %v3072 = vand.u32 %v2969, 2147483648
        %v3073 = vsel %vm3071, %v3072, %v3070
        %v3074 = vrsqrt.pop %v2970
        %v3075 = vmul.f32 %v2970, %v3074
        %vm3076 = vcmp.eq.f32.partialorder %v2970, inf
        %v3077 = vsel %vm3076, %v2970, %v3075
        %vm3078 = vcmp.eq.f32.partialorder %v2970, 0.0
        %v3079 = vand.u32 %v2970, 2147483648
        %v3080 = vsel %vm3078, %v3079, %v3077
        %v3081 = vrsqrt.pop %v2971
        %v3082 = vmul.f32 %v2971, %v3081
        %vm3083 = vcmp.eq.f32.partialorder %v2971, inf
        %v3084 = vsel %vm3083, %v2971, %v3082
        %vm3085 = vcmp.eq.f32.partialorder %v2971, 0.0
        %v3086 = vand.u32 %v2971, 2147483648
        %v3087 = vsel %vm3085, %v3086, %v3084
        %v3088 = vrsqrt.pop %v2972
        %v3089 = vmul.f32 %v2972, %v3088
        %vm3090 = vcmp.eq.f32.partialorder %v2972, inf
        %v3091 = vsel %vm3090, %v2972, %v3089
        %vm3092 = vcmp.eq.f32.partialorder %v2972, 0.0
        %v3093 = vand.u32 %v2972, 2147483648
        %v3094 = vsel %vm3092, %v3093, %v3091
        %v3095 = vrsqrt.pop %v2973
        %v3096 = vmul.f32 %v2973, %v3095
        %vm3097 = vcmp.eq.f32.partialorder %v2973, inf
        %v3098 = vsel %vm3097, %v2973, %v3096
        %vm3099 = vcmp.eq.f32.partialorder %v2973, 0.0
        %v3100 = vand.u32 %v2973, 2147483648
        %v3101 = vsel %vm3099, %v3100, %v3098
        %v3102 = vrsqrt.pop %v2974
        %v3103 = vmul.f32 %v2974, %v3102
        %vm3104 = vcmp.eq.f32.partialorder %v2974, inf
        %v3105 = vsel %vm3104, %v2974, %v3103
        %vm3106 = vcmp.eq.f32.partialorder %v2974, 0.0
        %v3107 = vand.u32 %v2974, 2147483648
        %v3108 = vsel %vm3106, %v3107, %v3105
        %v3109 = vrsqrt.pop %v2975
        %v3110 = vmul.f32 %v2975, %v3109
        %vm3111 = vcmp.eq.f32.partialorder %v2975, inf
        %v3112 = vsel %vm3111, %v2975, %v3110
        %vm3113 = vcmp.eq.f32.partialorder %v2975, 0.0
        %v3114 = vand.u32 %v2975, 2147483648
        %v3115 = vsel %vm3113, %v3114, %v3112
        %v3116 = vrsqrt.pop %v2976
        %v3117 = vmul.f32 %v2976, %v3116
        %vm3118 = vcmp.eq.f32.partialorder %v2976, inf
        %v3119 = vsel %vm3118, %v2976, %v3117
        %vm3120 = vcmp.eq.f32.partialorder %v2976, 0.0
        %v3121 = vand.u32 %v2976, 2147483648
        %v3122 = vsel %vm3120, %v3121, %v3119
        %v3123 = vrsqrt.pop %v2977
        %v3124 = vmul.f32 %v2977, %v3123
        %vm3125 = vcmp.eq.f32.partialorder %v2977, inf
        %v3126 = vsel %vm3125, %v2977, %v3124
        %vm3127 = vcmp.eq.f32.partialorder %v2977, 0.0
        %v3128 = vand.u32 %v2977, 2147483648
        %v3129 = vsel %vm3127, %v3128, %v3126
        %v3130 = vrsqrt.pop %v2978
        %v3131 = vmul.f32 %v2978, %v3130
        %vm3132 = vcmp.eq.f32.partialorder %v2978, inf
        %v3133 = vsel %vm3132, %v2978, %v3131
        %vm3134 = vcmp.eq.f32.partialorder %v2978, 0.0
        %v3135 = vand.u32 %v2978, 2147483648
        %v3136 = vsel %vm3134, %v3135, %v3133
        %v3137 = vrsqrt.pop %v2979
        %v3138 = vmul.f32 %v2979, %v3137
        %vm3139 = vcmp.eq.f32.partialorder %v2979, inf
        %v3140 = vsel %vm3139, %v2979, %v3138
        %vm3141 = vcmp.eq.f32.partialorder %v2979, 0.0
        %v3142 = vand.u32 %v2979, 2147483648
        %v3143 = vsel %vm3141, %v3142, %v3140
        %v3144 = vrsqrt.pop %v2980
        %v3145 = vmul.f32 %v2980, %v3144
        %vm3146 = vcmp.eq.f32.partialorder %v2980, inf
        %v3147 = vsel %vm3146, %v2980, %v3145
        %vm3148 = vcmp.eq.f32.partialorder %v2980, 0.0
        %v3149 = vand.u32 %v2980, 2147483648
        %v3150 = vsel %vm3148, %v3149, %v3147
        %v3151 = vrsqrt.pop %v2981
        %v3152 = vmul.f32 %v2981, %v3151
        %vm3153 = vcmp.eq.f32.partialorder %v2981, inf
        %v3154 = vsel %vm3153, %v2981, %v3152
        %vm3155 = vcmp.eq.f32.partialorder %v2981, 0.0
        %v3156 = vand.u32 %v2981, 2147483648
        %v3157 = vsel %vm3155, %v3156, %v3154
        %v3158 = vrsqrt.pop %v2982
        %v3159 = vmul.f32 %v2982, %v3158
        %vm3160 = vcmp.eq.f32.partialorder %v2982, inf
        %v3161 = vsel %vm3160, %v2982, %v3159
        %vm3162 = vcmp.eq.f32.partialorder %v2982, 0.0
        %v3163 = vand.u32 %v2982, 2147483648
        %v3164 = vsel %vm3162, %v3163, %v3161
        %v3165 = vrsqrt.pop %v2983
        %v3166 = vmul.f32 %v2983, %v3165
        %vm3167 = vcmp.eq.f32.partialorder %v2983, inf
        %v3168 = vsel %vm3167, %v2983, %v3166
        %vm3169 = vcmp.eq.f32.partialorder %v2983, 0.0
        %v3170 = vand.u32 %v2983, 2147483648
        %v3171 = vsel %vm3169, %v3170, %v3168
        %v3172 = vrsqrt.pop %v2984
        %v3173 = vmul.f32 %v2984, %v3172
        %vm3174 = vcmp.eq.f32.partialorder %v2984, inf
        %v3175 = vsel %vm3174, %v2984, %v3173
        %vm3176 = vcmp.eq.f32.partialorder %v2984, 0.0
        %v3177 = vand.u32 %v2984, 2147483648
        %v3178 = vsel %vm3176, %v3177, %v3175
        %v3179 = vrsqrt.pop %v2985
        %v3180 = vmul.f32 %v2985, %v3179
        %vm3181 = vcmp.eq.f32.partialorder %v2985, inf
        %v3182 = vsel %vm3181, %v2985, %v3180
        %vm3183 = vcmp.eq.f32.partialorder %v2985, 0.0
        %v3184 = vand.u32 %v2985, 2147483648
        %v3185 = vsel %vm3183, %v3184, %v3182
        %v3186 = vrsqrt.pop %v2986
        %v3187 = vmul.f32 %v2986, %v3186
        %vm3188 = vcmp.eq.f32.partialorder %v2986, inf
        %v3189 = vsel %vm3188, %v2986, %v3187
        %vm3190 = vcmp.eq.f32.partialorder %v2986, 0.0
        %v3191 = vand.u32 %v2986, 2147483648
        %v3192 = vsel %vm3190, %v3191, %v3189
        %v3193 = vrsqrt.pop %v2987
        %v3194 = vmul.f32 %v2987, %v3193
        %vm3195 = vcmp.eq.f32.partialorder %v2987, inf
        %v3196 = vsel %vm3195, %v2987, %v3194
        %vm3197 = vcmp.eq.f32.partialorder %v2987, 0.0
        %v3198 = vand.u32 %v2987, 2147483648
        %v3199 = vsel %vm3197, %v3198, %v3196
        %v3200 = vrsqrt.pop %v2988
        %v3201 = vmul.f32 %v2988, %v3200
        %vm3202 = vcmp.eq.f32.partialorder %v2988, inf
        %v3203 = vsel %vm3202, %v2988, %v3201
        %vm3204 = vcmp.eq.f32.partialorder %v2988, 0.0
        %v3205 = vand.u32 %v2988, 2147483648
        %v3206 = vsel %vm3204, %v3205, %v3203
        %v3207 = vrsqrt.pop %v2989
        %v3208 = vmul.f32 %v2989, %v3207
        %vm3209 = vcmp.eq.f32.partialorder %v2989, inf
        %v3210 = vsel %vm3209, %v2989, %v3208
        %vm3211 = vcmp.eq.f32.partialorder %v2989, 0.0
        %v3212 = vand.u32 %v2989, 2147483648
        %v3213 = vsel %vm3211, %v3212, %v3210
        %v3214 = vsel %vm777, %v2996, 0.0
        %v3215 = vsel %vm778, %v3003, 0.0
        %v3216 = vsel %vm779, %v3010, 0.0
        %v3217 = vsel %vm780, %v3017, 0.0
        %v3218 = vsel %vm781, %v3024, 0.0
        %v3219 = vsel %vm782, %v3031, 0.0
        %v3220 = vsel %vm783, %v3038, 0.0
        %v3221 = vsel %vm784, %v3045, 0.0
        %v3222 = vsel %vm785, %v3052, 0.0
        %v3223 = vsel %vm786, %v3059, 0.0
        %v3224 = vsel %vm787, %v3066, 0.0
        %v3225 = vsel %vm788, %v3073, 0.0
        %v3226 = vsel %vm789, %v3080, 0.0
        %v3227 = vsel %vm790, %v3087, 0.0
        %v3228 = vsel %vm791, %v3094, 0.0
        %v3229 = vsel %vm792, %v3101, 0.0
        %v3230 = vsel %vm793, %v3108, 0.0
        %v3231 = vsel %vm794, %v3115, 0.0
        %v3232 = vsel %vm795, %v3122, 0.0
        %v3233 = vsel %vm796, %v3129, 0.0
        %v3234 = vsel %vm797, %v3136, 0.0
        %v3235 = vsel %vm798, %v3143, 0.0
        %v3236 = vsel %vm799, %v3150, 0.0
        %v3237 = vsel %vm800, %v3157, 0.0
        %v3238 = vsel %vm801, %v3164, 0.0
        %v3239 = vsel %vm802, %v3171, 0.0
        %v3240 = vsel %vm803, %v3178, 0.0
        %v3241 = vsel %vm804, %v3185, 0.0
        %v3242 = vsel %vm805, %v3192, 0.0
        %v3243 = vsel %vm806, %v3199, 0.0
        %v3244 = vsel %vm807, %v3206, 0.0
        %v3245 = vsel %vm808, %v3213, 0.0
        %vm3246 = vcmask 7168
        %v3247 = vsel %vm3246, %v3214, 0.0
        %v3248 = vsel %vm3246, %v3215, 0.0
        %v3249 = vadd.f32 %v3247, %v3248
        %v3250 = vsel %vm3246, %v3216, 0.0
        %v3251 = vadd.f32 %v3249, %v3250
        %v3252 = vsel %vm3246, %v3217, 0.0
        %v3253 = vadd.f32 %v3251, %v3252
        %v3254 = vsel %vm3246, %v3218, 0.0
        %v3255 = vadd.f32 %v3253, %v3254
        %v3256 = vsel %vm3246, %v3219, 0.0
        %v3257 = vadd.f32 %v3255, %v3256
        %v3258 = vsel %vm3246, %v3220, 0.0
        %v3259 = vadd.f32 %v3257, %v3258
        %v3260 = vsel %vm3246, %v3221, 0.0
        %v3261 = vadd.f32 %v3259, %v3260
        %v3262 = vsel %vm3246, %v3222, 0.0
        %v3263 = vadd.f32 %v3261, %v3262
        %v3264 = vsel %vm3246, %v3223, 0.0
        %v3265 = vadd.f32 %v3263, %v3264
        %v3266 = vsel %vm3246, %v3224, 0.0
        %v3267 = vadd.f32 %v3265, %v3266
        %v3268 = vsel %vm3246, %v3225, 0.0
        %v3269 = vadd.f32 %v3267, %v3268
        %v3270 = vsel %vm3246, %v3226, 0.0
        %v3271 = vadd.f32 %v3269, %v3270
        %v3272 = vsel %vm3246, %v3227, 0.0
        %v3273 = vadd.f32 %v3271, %v3272
        %v3274 = vsel %vm3246, %v3228, 0.0
        %v3275 = vadd.f32 %v3273, %v3274
        %v3276 = vsel %vm3246, %v3229, 0.0
        %v3277 = vadd.f32 %v3275, %v3276
        %v3278 = vsel %vm3246, %v3230, 0.0
        %v3279 = vadd.f32 %v3277, %v3278
        %v3280 = vsel %vm3246, %v3231, 0.0
        %v3281 = vadd.f32 %v3279, %v3280
        %v3282 = vsel %vm3246, %v3232, 0.0
        %v3283 = vadd.f32 %v3281, %v3282
        %v3284 = vsel %vm3246, %v3233, 0.0
        %v3285 = vadd.f32 %v3283, %v3284
        %v3286 = vsel %vm3246, %v3234, 0.0
        %v3287 = vadd.f32 %v3285, %v3286
        %v3288 = vsel %vm3246, %v3235, 0.0
        %v3289 = vadd.f32 %v3287, %v3288
        %v3290 = vsel %vm3246, %v3236, 0.0
        %v3291 = vadd.f32 %v3289, %v3290
        %v3292 = vsel %vm3246, %v3237, 0.0
        %v3293 = vadd.f32 %v3291, %v3292
        %v3294 = vsel %vm3246, %v3238, 0.0
        %v3295 = vadd.f32 %v3293, %v3294
        %v3296 = vsel %vm3246, %v3239, 0.0
        %v3297 = vadd.f32 %v3295, %v3296
        %v3298 = vsel %vm3246, %v3240, 0.0
        %v3299 = vadd.f32 %v3297, %v3298
        %v3300 = vsel %vm3246, %v3241, 0.0
        %v3301 = vadd.f32 %v3299, %v3300
        %v3302 = vsel %vm3246, %v3242, 0.0
        %v3303 = vadd.f32 %v3301, %v3302
        %v3304 = vsel %vm3246, %v3243, 0.0
        %v3305 = vadd.f32 %v3303, %v3304
        %v3306 = vsel %vm3246, %v3244, 0.0
        %v3307 = vadd.f32 %v3305, %v3306
        %v3308 = vsel %vm3246, %v3245, 0.0
        %v3309 = vadd.f32 %v3307, %v3308
        %3310 = vadd.xlane.f32.xlu0 %v3309
        %v3311 = vpop.xlane.xlu0 %3310
        %v3312 = vrot.slane %v3311, 4
        %v3313 = vadd.f32 %v3311, %v3312
        %v3314 = vrot.slane %v3313, 2
        %v3315 = vadd.f32 %v3313, %v3314
        %v3316 = vrot.slane %v3315, 1
        %v3317 = vadd.f32 %v3315, %v3316
        %s3318 = vtos %v3317
        %v3319 = vstv %s3318
        // Predicated region
        $region41: #{hausdorff_dt_loss.1} parent=35 // pred_check
          %p3320 = pneg %p945
        $region42: #{hausdorff_dt_loss.1} parent=35 // pred_check_branch
          %3322 = sbr.rel (%p3320) target = $region44
        $region43: #{hausdorff_dt_loss.1} parent=35 // pred_region
          %vm3323 = vcmask 0
          %3324 = vst.msk [vmem:[#allocation5] sm:$0x1] %vm3323, 0.0
        $region44: #{hausdorff_dt_loss.1} parent=35 // pred_fallthru
          _
        %v3325 = vld [vmem:[#allocation5] sm:$0x1]
        %v3326 = vadd.f32 %v3325, %v3319
        %vm3327 = vcmask 0
        %3328 = vst.msk [vmem:[#allocation5] sm:$0x1] %vm3327, %v3326
        // Predicated region
        $region45: #{hausdorff_dt_loss.1} parent=35 // pred_check
          %p3329 = pneg %p161
        $region46: #{hausdorff_dt_loss.1} parent=35 // pred_check_branch
          %3331 = sbr.rel (%p3329) target = $region48
        $region47: #{hausdorff_dt_loss.1} parent=35 // pred_region
          %s3333 = ssub.s32 16, 16
          %3334 = vsyncadd [#allocation6], %s3333
          %s3335 = smul.addr %s27, 16
          %s3336 = scalar_lea.hbm %s5, %s3335
          %s3338 = sshll.u32 [#allocation5], 4
          %s3339 = int_to_ptr.vmem [resolvable:$true] %s3338
          %3341 = dma.vmem_to_hbm [thread:$0]  %s3339, 16, %s3336, [#allocation6]
        $region48: #{hausdorff_dt_loss.1} parent=35 // pred_fallthru
          _
        // Predicated region
        $region49: #{hausdorff_dt_loss.1} parent=35 // pred_check
          %p3342 = pneg %p161
        $region50: #{hausdorff_dt_loss.1} parent=35 // pred_check_branch
          %3344 = sbr.rel (%p3342) target = $region52
        $region51: #{hausdorff_dt_loss.1} parent=35 // pred_region
          %3345 = dma.done [#allocation6], 16
        $region52: #{hausdorff_dt_loss.1} parent=35 // pred_fallthru
          _
      $region36: #{hausdorff_dt_loss.1} parent=5 // pred_fallthru
        _
      %p3346 = scmp.le.s32.totalorder 2, %s18
      // Predicated region
      $region53: #{hausdorff_dt_loss.1} parent=5 // pred_check
        %p3347 = pneg %p3346
      $region54: #{hausdorff_dt_loss.1} parent=5 // pred_check_branch
        %3349 = sbr.rel (%p3347) target = $region56
      $region55: #{hausdorff_dt_loss.1} parent=5 // pred_region
        %s3350 = ssub.s32 %s18, 2
      $region56: #{hausdorff_dt_loss.1} parent=5 // pred_fallthru
        _
    $region6: #{hausdorff_dt_loss.1} parent=1 // loop_footer
      %s22 = sadd.s32 1, %s18
    $region7: #{hausdorff_dt_loss.1} parent=1 // loop_footer_branch
      %17 = sbr.rel target = $region3
    $region8: #{hausdorff_dt_loss.1} parent=1 // loop_exit
      _
    %3351 = vsyncpa [#allocation6], 1
    %s3352 = scalar_lea.sflag [#allocation6], 1
    %3353 = vsyncpa %s3352, 1

</llo_original>
